<compile_context>
chip_gen: v6e
topology: v6e:2x2x1
jax: 0.10.0
libtpu: 0.0.40
codegen_flags: <defaults>
</compile_context>

<pallas_src>
import functools

import numpy as np
import jax
import jax.numpy as jnp
from jax import lax
from jax.experimental import pallas as pl
from jax.experimental.pallas import tpu as pltpu


def _round_up(v, m):
    return (v + m - 1) // m * m


def _bilinear_matrix(n_in, n_out):
    """(n_out, n_in) 1-D interpolation matrix, bilinear, align_corners=True."""
    A = np.zeros((n_out, n_in), np.float64)
    if n_in == 1:
        A[:, 0] = 1.0
        return A.astype(np.float32)
    src = np.arange(n_out) * (n_in - 1) / (n_out - 1)
    i0 = np.minimum(np.floor(src).astype(np.int64), n_in - 1)
    i1 = np.minimum(i0 + 1, n_in - 1)
    w1 = src - i0
    A[np.arange(n_out), i0] += 1.0 - w1
    A[np.arange(n_out), i1] += w1
    return A.astype(np.float32)


def _deep_up_kernel(x_ref, a_ref, w1_ref, b1_ref, w2_ref, b2_ref,
                    w3_ref, b3_ref, ws_ref, bs_ref, mask_ref,
                    o_ref, bufx_ref, bufy_ref, *, tap_starts, base, n):
    f32 = jnp.float32

    # ---- bilinear 2x upsample + zero-pad embedding: one MXU matmul ----
    # bufx[c, p] is the upsampled image in padded-flat layout; pad rows/cols
    # are zero because the corresponding columns of `a` are zero.
    bufx_ref[...] = jnp.dot(x_ref[0], a_ref[...], preferred_element_type=f32)

    # Zero only the small top/bottom pad-row strips of the intermediate
    # buffer (its interior is fully overwritten below; pad columns inside the
    # interior are handled by `mask`).
    co_p = bufy_ref.shape[0]
    r_pad = bufy_ref.shape[1]
    bufy_ref[:, 0:base] = jnp.zeros((co_p, base), f32)
    bufy_ref[:, base + n:r_pad] = jnp.zeros((co_p, r_pad - base - n), f32)

    mask = mask_ref[...]                               # (1, n): 0 at pad columns

    def im2col(buf_ref):
        # One (9*C, n) patch slab: 9 shifted windows of the padded-flat
        # buffer concatenated along the channel (sublane) axis.
        return jnp.concatenate([buf_ref[:, s:s + n] for s in tap_starts], axis=0)

    # ---- conv1 (3x3, pad 1) + BN1 + ReLU ----
    y = jnp.dot(w1_ref[...], im2col(bufx_ref), preferred_element_type=f32)
    y = jnp.maximum(y + b1_ref[...], 0.0) * mask
    bufy_ref[:, base:base + n] = y

    # ---- conv2 (3x3, pad 1) + BN2 + ReLU ----
    y = jnp.dot(w2_ref[...], im2col(bufy_ref), preferred_element_type=f32)
    y = jnp.maximum(y + b2_ref[...], 0.0) * mask
    bufy_ref[:, base:base + n] = y

    # ---- conv3 (3x3, pad 1) + BN3 ----
    res = jnp.dot(w3_ref[...], im2col(bufy_ref), preferred_element_type=f32)
    res = res + b3_ref[...]

    # ---- shortcut: 1x1 conv + BNs on the upsampled input ----
    sc = jnp.dot(ws_ref[...], bufx_ref[:, base:base + n],
                 preferred_element_type=f32) + bs_ref[...]

    # ---- add + ReLU; lane-dense (C, Hup*(Wup+2)) store (NCHW after a
    #      wrapper-side reshape + pad-column slice) ----
    o_ref[0] = jnp.maximum(res + sc, 0.0)


def _fold_bn(bn, eps):
    gamma, beta, mean, var = (jnp.asarray(t, jnp.float32) for t in bn)
    scale = gamma / jnp.sqrt(var + eps)
    bias = beta - mean * scale
    return scale, bias


def _fold_conv(w_oihw, bn, ci_pad, co_pad, eps):
    """OIHW conv weight + eval-mode BN -> ((co_pad, k*k*ci_pad) W, (co_pad,1) b)."""
    scale, bias = _fold_bn(bn, eps)
    co, ci, kh, kw = w_oihw.shape
    w = jnp.transpose(w_oihw.astype(jnp.float32), (0, 2, 3, 1))   # (co, kh, kw, ci)
    w = w * scale[:, None, None, None]
    w = jnp.pad(w, ((0, co_pad - co), (0, 0), (0, 0), (0, ci_pad - ci)))
    w = w.reshape(co_pad, kh * kw * ci_pad)
    b = jnp.pad(bias, (0, co_pad - co)).reshape(co_pad, 1)
    return w, b


def deep_up_without_res_forward(x_nchw, params, eps=1e-5):
    N, Cin, H, W = x_nchw.shape
    Cout = params['w1'].shape[0]
    Hup, Wup = 2 * H, 2 * W
    W2 = Wup + 2                      # padded row width
    R = (Hup + 4) * W2                # padded-flat length (2 pad/guard rows each side)
    base = 2 * W2                     # flat offset of the first image row
    n = Hup * W2                      # number of computed output positions

    Cin_p = _round_up(Cin, 8)
    Cout_p = _round_up(Cout, 8)

    # Upsample (+ pad embedding) matrix: (H*W, R).  buf = x_flat @ A gives the
    # padded-flat upsampled image directly.
    Ah = _bilinear_matrix(H, Hup)            # (Hup, H)
    Aw = _bilinear_matrix(W, Wup)            # (Wup, W)
    Kmat = np.kron(Ah, Aw)                   # (Hup*Wup, H*W)
    A = np.zeros((H * W, R), np.float32)
    p_idx = ((np.arange(Hup) + 2)[:, None] * W2 + np.arange(Wup)[None, :] + 1).ravel()
    A[:, p_idx] = Kmat.T
    a = jnp.asarray(A)

    # Column mask: zero at pad columns (pj == 0 or pj == W2-1) of each flat row.
    pj = np.arange(n) % W2
    mask = jnp.asarray(((pj != 0) & (pj != W2 - 1)).astype(np.float32).reshape(1, n))

    w1r, b1 = _fold_conv(params['w1'], params['bn1'], Cin_p, Cout_p, eps)
    w2r, b2 = _fold_conv(params['w2'], params['bn2'], Cout_p, Cout_p, eps)
    w3r, b3 = _fold_conv(params['w3'], params['bn3'], Cout_p, Cout_p, eps)
    wsr, bs = _fold_conv(params['ws'], params['bns'], Cin_p, Cout_p, eps)

    # NCHW input -> (N, Cin_p, H*W), channels zero-padded to a sublane multiple.
    x_flat = jnp.pad(x_nchw.astype(jnp.float32),
                     ((0, 0), (0, Cin_p - Cin), (0, 0), (0, 0))).reshape(N, Cin_p, H * W)

    tap_starts = tuple(base + (kh - 1) * W2 + (kw - 1)
                       for kh in range(3) for kw in range(3))

    kernel = functools.partial(_deep_up_kernel, tap_starts=tap_starts, base=base, n=n)

    def full(arr):
        return pl.BlockSpec(arr.shape, lambda b, _nd=arr.ndim: (0,) * _nd)

    out_flat = pl.pallas_call(
        kernel,
        out_shape=jax.ShapeDtypeStruct((N, Cout_p, n), jnp.float32),
        grid=(N,),
        in_specs=[
            pl.BlockSpec((1, Cin_p, H * W), lambda b: (b, 0, 0)),
            full(a),
            full(w1r), full(b1), full(w2r), full(b2),
            full(w3r), full(b3), full(wsr), full(bs), full(mask),
        ],
        out_specs=pl.BlockSpec((1, Cout_p, n), lambda b: (b, 0, 0)),
        scratch_shapes=[
            pltpu.VMEM((Cin_p, R), jnp.float32),    # upsampled input, padded-flat
            pltpu.VMEM((Cout_p, R), jnp.float32),   # conv1/conv2 outputs, padded-flat
        ],
        compiler_params=pltpu.CompilerParams(dimension_semantics=("parallel",)),
    )(x_flat, a, w1r, b1, w2r, b2, w3r, b3, wsr, bs, mask)

    # (N, Cout_p, Hup*(Wup+2)) -> NCHW: reshape, drop pad columns and padded channels.
    out = out_flat.reshape(N, Cout_p, Hup, W2)[:, :Cout, :, 1:Wup + 1]
    return out


# ------------------------- pure-JAX (XLA) reference -------------------------

def _upsample_bilinear_ac_ref(x):
    """2x bilinear upsample, align_corners=True, NCHW (independent impl)."""
    _, _, H, W = x.shape
    Ho, Wo = 2 * H, 2 * W

    def axis_coords(n_out, n_in):
        if n_in == 1:
            z = jnp.zeros((n_out,), jnp.float32)
            return z, z.astype(jnp.int32), z.astype(jnp.int32)
        src = jnp.arange(n_out, dtype=jnp.float32) * (n_in - 1) / (n_out - 1)
        i0 = jnp.clip(jnp.floor(src).astype(jnp.int32), 0, n_in - 1)
        i1 = jnp.minimum(i0 + 1, n_in - 1)
        return src - i0.astype(jnp.float32), i0, i1

    wy, y0, y1 = axis_coords(Ho, H)
    wx, x0, x1 = axis_coords(Wo, W)
    rows = (x[:, :, y0, :] * (1.0 - wy)[None, None, :, None]
            + x[:, :, y1, :] * wy[None, None, :, None])
    out = (rows[:, :, :, x0] * (1.0 - wx)[None, None, None, :]
           + rows[:, :, :, x1] * wx[None, None, None, :])
    return out


def reference_forward(x, p, eps=1e-5):
    def conv(v, w, stride, pad):
        return lax.conv_general_dilated(
            v, w, (stride, stride), [(pad, pad), (pad, pad)],
            dimension_numbers=('NCHW', 'OIHW', 'NCHW'))

    def bn(v, stats):
        g, b, m, var = stats
        inv = g / jnp.sqrt(var + eps)
        return v * inv[None, :, None, None] + (b - m * inv)[None, :, None, None]

    xu = _upsample_bilinear_ac_ref(x)
    y = jax.nn.relu(bn(conv(xu, p['w1'], 1, 1), p['bn1']))
    y = jax.nn.relu(bn(conv(y, p['w2'], 1, 1), p['bn2']))
    y = bn(conv(y, p['w3'], 1, 1), p['bn3'])
    s = bn(conv(xu, p['ws'], 1, 0), p['bns'])
    return jax.nn.relu(y + s)


if __name__ == "__main__":
    N, Cin, Cout, H, W = 2, 4, 8, 16, 16
    key = jax.random.PRNGKey(0)
    ks = jax.random.split(key, 9)

    def bn_params(k, c):
        k1, k2, k3, k4 = jax.random.split(k, 4)
        gamma = jax.random.uniform(k1, (c,), minval=0.5, maxval=1.5)
        beta = 0.1 * jax.random.normal(k2, (c,))
        mean = 0.1 * jax.random.normal(k3, (c,))
        var = jax.random.uniform(k4, (c,), minval=0.5, maxval=1.5)
        return (gamma, beta, mean, var)

    params = {
        'w1': 0.2 * jax.random.normal(ks[0], (Cout, Cin, 3, 3), jnp.float32),
        'w2': 0.2 * jax.random.normal(ks[1], (Cout, Cout, 3, 3), jnp.float32),
        'w3': 0.2 * jax.random.normal(ks[2], (Cout, Cout, 3, 3), jnp.float32),
        'ws': 0.2 * jax.random.normal(ks[3], (Cout, Cin, 1, 1), jnp.float32),
        'bn1': bn_params(ks[4], Cout),
        'bn2': bn_params(ks[5], Cout),
        'bn3': bn_params(ks[6], Cout),
        'bns': bn_params(ks[7], Cout),
    }

    x = jax.random.normal(ks[8], (N, Cin, H, W), jnp.float32)

    out = jax.block_until_ready(deep_up_without_res_forward(x, params))
    ref = jax.block_until_ready(reference_forward(x, params))

    assert out.shape == (N, Cout, 2 * H, 2 * W), out.shape
    np.testing.assert_allclose(np.asarray(out), np.asarray(ref), atol=2e-4, rtol=2e-4)
    print("KERNEL_OK")
</pallas_src>

<mosaic_0001>
module attributes {stable_mosaic.version = 11 : i64} {
  func.func @_deep_up_kernel(%arg0: i32, %arg1: memref<1x8x256xf32, #tpu.memory_space<vmem>>, %arg2: memref<256x1224xf32, #tpu.memory_space<vmem>>, %arg3: memref<8x72xf32, #tpu.memory_space<vmem>>, %arg4: memref<8x1xf32, #tpu.memory_space<vmem>>, %arg5: memref<8x72xf32, #tpu.memory_space<vmem>>, %arg6: memref<8x1xf32, #tpu.memory_space<vmem>>, %arg7: memref<8x72xf32, #tpu.memory_space<vmem>>, %arg8: memref<8x1xf32, #tpu.memory_space<vmem>>, %arg9: memref<8x8xf32, #tpu.memory_space<vmem>>, %arg10: memref<8x1xf32, #tpu.memory_space<vmem>>, %arg11: memref<1x1088xf32, #tpu.memory_space<vmem>>, %arg12: memref<1x8x1088xf32, #tpu.memory_space<vmem>>, %arg13: memref<8x1224xf32, #tpu.memory_space<vmem>>, %arg14: memref<8x1224xf32, #tpu.memory_space<vmem>>) attributes {dimension_semantics = [#tpu.dimension_semantics<parallel>], iteration_bounds = array<i64: 2>, scalar_prefetch = 0 : i64, scratch_operands = 2 : i64, tpu.core_type = #tpu.core_type<tc>, window_params = [{transform_indices = @transform_0, window_bounds = array<i64: 1, 8, 256>}, {pipeline_mode = #tpu.pipeline_mode<synchronous>, transform_indices = @transform_1, window_bounds = array<i64: 256, 1224>}, {pipeline_mode = #tpu.pipeline_mode<synchronous>, transform_indices = @transform_2, window_bounds = array<i64: 8, 72>}, {pipeline_mode = #tpu.pipeline_mode<synchronous>, transform_indices = @transform_3, window_bounds = array<i64: 8, 1>}, {pipeline_mode = #tpu.pipeline_mode<synchronous>, transform_indices = @transform_4, window_bounds = array<i64: 8, 72>}, {pipeline_mode = #tpu.pipeline_mode<synchronous>, transform_indices = @transform_5, window_bounds = array<i64: 8, 1>}, {pipeline_mode = #tpu.pipeline_mode<synchronous>, transform_indices = @transform_6, window_bounds = array<i64: 8, 72>}, {pipeline_mode = #tpu.pipeline_mode<synchronous>, transform_indices = @transform_7, window_bounds = array<i64: 8, 1>}, {pipeline_mode = #tpu.pipeline_mode<synchronous>, transform_indices = @transform_8, window_bounds = array<i64: 8, 8>}, {pipeline_mode = #tpu.pipeline_mode<synchronous>, transform_indices = @transform_9, window_bounds = array<i64: 8, 1>}, {pipeline_mode = #tpu.pipeline_mode<synchronous>, transform_indices = @transform_10, window_bounds = array<i64: 1, 1088>}, {transform_indices = @transform_11, window_bounds = array<i64: 1, 8, 1088>}]} {
    %c0 = arith.constant 0 : index
    %c0_0 = arith.constant 0 : index
    %c0_1 = arith.constant 0 : index
    %0 = vector.load %arg1[%c0, %c0_0, %c0_1] : memref<1x8x256xf32, #tpu.memory_space<vmem>>, vector<1x8x256xf32>
    %1 = vector.shape_cast %0 : vector<1x8x256xf32> to vector<8x256xf32>
    %c0_2 = arith.constant 0 : index
    %c0_3 = arith.constant 0 : index
    %2 = vector.load %arg2[%c0_2, %c0_3] : memref<256x1224xf32, #tpu.memory_space<vmem>>, vector<256x1224xf32>
    %cst = arith.constant dense<0.000000e+00> : vector<8x1224xf32>
    %3 = tpu.matmul %1, %2, %cst {dimension_numbers = #tpu.dot_dimension_numbers<[1], [0], [0], [1], [0, 0, 1, 1], [], []>} : vector<8x256xf32>, vector<256x1224xf32>, vector<8x1224xf32> -> vector<8x1224xf32>
    %c0_4 = arith.constant 0 : index
    %c0_5 = arith.constant 0 : index
    %4 = vector.load %arg13[%c0_4, %c0_5] : memref<8x1224xf32, #tpu.memory_space<vmem>>, vector<8x1224xf32>
    tpu.vector_store %arg13[%c0_4, %c0_5], %3 {strides = array<i32>} : memref<8x1224xf32, #tpu.memory_space<vmem>>, vector<8x1224xf32>,
    %cst_6 = arith.constant 0.000000e+00 : f32
    %5 = vector.broadcast %cst_6 : f32 to vector<8x68xf32>
    %c0_7 = arith.constant 0 : index
    %c0_8 = arith.constant 0 : index
    %6 = vector.load %arg14[%c0_7, %c0_8] : memref<8x1224xf32, #tpu.memory_space<vmem>>, vector<8x68xf32>
    tpu.vector_store %arg14[%c0_7, %c0_8], %5 {strides = array<i32>} : memref<8x1224xf32, #tpu.memory_space<vmem>>, vector<8x68xf32>,
    %cst_9 = arith.constant 0.000000e+00 : f32
    %7 = vector.broadcast %cst_9 : f32 to vector<8x68xf32>
    %c0_10 = arith.constant 0 : index
    %c1156 = arith.constant 1156 : index
    %8 = vector.load %arg14[%c0_10, %c1156] : memref<8x1224xf32, #tpu.memory_space<vmem>>, vector<8x68xf32>
    tpu.vector_store %arg14[%c0_10, %c1156], %7 {strides = array<i32>} : memref<8x1224xf32, #tpu.memory_space<vmem>>, vector<8x68xf32>,
    %c0_11 = arith.constant 0 : index
    %c0_12 = arith.constant 0 : index
    %9 = vector.load %arg11[%c0_11, %c0_12] : memref<1x1088xf32, #tpu.memory_space<vmem>>, vector<1x1088xf32>
    %c0_13 = arith.constant 0 : index
    %c0_14 = arith.constant 0 : index
    %10 = vector.load %arg3[%c0_13, %c0_14] : memref<8x72xf32, #tpu.memory_space<vmem>>, vector<8x72xf32>
    %c0_15 = arith.constant 0 : index
    %c33 = arith.constant 33 : index
    %11 = vector.load %arg13[%c0_15, %c33] : memref<8x1224xf32, #tpu.memory_space<vmem>>, vector<8x1088xf32>
    %c0_16 = arith.constant 0 : index
    %c34 = arith.constant 34 : index
    %12 = vector.load %arg13[%c0_16, %c34] : memref<8x1224xf32, #tpu.memory_space<vmem>>, vector<8x1088xf32>
    %c0_17 = arith.constant 0 : index
    %c35 = arith.constant 35 : index
    %13 = vector.load %arg13[%c0_17, %c35] : memref<8x1224xf32, #tpu.memory_space<vmem>>, vector<8x1088xf32>
    %c0_18 = arith.constant 0 : index
    %c67 = arith.constant 67 : index
    %14 = vector.load %arg13[%c0_18, %c67] : memref<8x1224xf32, #tpu.memory_space<vmem>>, vector<8x1088xf32>
    %c0_19 = arith.constant 0 : index
    %c68 = arith.constant 68 : index
    %15 = vector.load %arg13[%c0_19, %c68] : memref<8x1224xf32, #tpu.memory_space<vmem>>, vector<8x1088xf32>
    %c0_20 = arith.constant 0 : index
    %c69 = arith.constant 69 : index
    %16 = vector.load %arg13[%c0_20, %c69] : memref<8x1224xf32, #tpu.memory_space<vmem>>, vector<8x1088xf32>
    %c0_21 = arith.constant 0 : index
    %c101 = arith.constant 101 : index
    %17 = vector.load %arg13[%c0_21, %c101] : memref<8x1224xf32, #tpu.memory_space<vmem>>, vector<8x1088xf32>
    %c0_22 = arith.constant 0 : index
    %c102 = arith.constant 102 : index
    %18 = vector.load %arg13[%c0_22, %c102] : memref<8x1224xf32, #tpu.memory_space<vmem>>, vector<8x1088xf32>
    %c0_23 = arith.constant 0 : index
    %c103 = arith.constant 103 : index
    %19 = vector.load %arg13[%c0_23, %c103] : memref<8x1224xf32, #tpu.memory_space<vmem>>, vector<8x1088xf32>
    %20 = tpu.concatenate %11, %12, %13, %14, %15, %16, %17, %18, %19 in 0 : vector<8x1088xf32>, vector<8x1088xf32>, vector<8x1088xf32>, vector<8x1088xf32>, vector<8x1088xf32>, vector<8x1088xf32>, vector<8x1088xf32>, vector<8x1088xf32>, vector<8x1088xf32> -> vector<72x1088xf32>
    %cst_24 = arith.constant dense<0.000000e+00> : vector<8x1088xf32>
    %21 = tpu.matmul %10, %20, %cst_24 {dimension_numbers = #tpu.dot_dimension_numbers<[1], [0], [0], [1], [0, 0, 1, 1], [], []>} : vector<8x72xf32>, vector<72x1088xf32>, vector<8x1088xf32> -> vector<8x1088xf32>
    %c0_25 = arith.constant 0 : index
    %c0_26 = arith.constant 0 : index
    %22 = vector.load %arg4[%c0_25, %c0_26] : memref<8x1xf32, #tpu.memory_space<vmem>>, vector<8x1xf32>
    %23 = vector.broadcast %22 : vector<8x1xf32> to vector<8x1088xf32>
    %24 = arith.addf %21, %23 : vector<8x1088xf32>
    %cst_27 = arith.constant 0.000000e+00 : f32
    %25 = vector.broadcast %cst_27 : f32 to vector<8x1088xf32>
    %26 = arith.maximumf %24, %25 : vector<8x1088xf32>
    %27 = vector.broadcast %9 : vector<1x1088xf32> to vector<8x1088xf32>
    %28 = arith.mulf %26, %27 : vector<8x1088xf32>
    %c0_28 = arith.constant 0 : index
    %c68_29 = arith.constant 68 : index
    %29 = vector.load %arg14[%c0_28, %c68_29] : memref<8x1224xf32, #tpu.memory_space<vmem>>, vector<8x1088xf32>
    tpu.vector_store %arg14[%c0_28, %c68_29], %28 {strides = array<i32>} : memref<8x1224xf32, #tpu.memory_space<vmem>>, vector<8x1088xf32>,
    %c0_30 = arith.constant 0 : index
    %c0_31 = arith.constant 0 : index
    %30 = vector.load %arg5[%c0_30, %c0_31] : memref<8x72xf32, #tpu.memory_space<vmem>>, vector<8x72xf32>
    %c0_32 = arith.constant 0 : index
    %c33_33 = arith.constant 33 : index
    %31 = vector.load %arg14[%c0_32, %c33_33] : memref<8x1224xf32, #tpu.memory_space<vmem>>, vector<8x1088xf32>
    %c0_34 = arith.constant 0 : index
    %c34_35 = arith.constant 34 : index
    %32 = vector.load %arg14[%c0_34, %c34_35] : memref<8x1224xf32, #tpu.memory_space<vmem>>, vector<8x1088xf32>
    %c0_36 = arith.constant 0 : index
    %c35_37 = arith.constant 35 : index
    %33 = vector.load %arg14[%c0_36, %c35_37] : memref<8x1224xf32, #tpu.memory_space<vmem>>, vector<8x1088xf32>
    %c0_38 = arith.constant 0 : index
    %c67_39 = arith.constant 67 : index
    %34 = vector.load %arg14[%c0_38, %c67_39] : memref<8x1224xf32, #tpu.memory_space<vmem>>, vector<8x1088xf32>
    %c0_40 = arith.constant 0 : index
    %c68_41 = arith.constant 68 : index
    %35 = vector.load %arg14[%c0_40, %c68_41] : memref<8x1224xf32, #tpu.memory_space<vmem>>, vector<8x1088xf32>
    %c0_42 = arith.constant 0 : index
    %c69_43 = arith.constant 69 : index
    %36 = vector.load %arg14[%c0_42, %c69_43] : memref<8x1224xf32, #tpu.memory_space<vmem>>, vector<8x1088xf32>
    %c0_44 = arith.constant 0 : index
    %c101_45 = arith.constant 101 : index
    %37 = vector.load %arg14[%c0_44, %c101_45] : memref<8x1224xf32, #tpu.memory_space<vmem>>, vector<8x1088xf32>
    %c0_46 = arith.constant 0 : index
    %c102_47 = arith.constant 102 : index
    %38 = vector.load %arg14[%c0_46, %c102_47] : memref<8x1224xf32, #tpu.memory_space<vmem>>, vector<8x1088xf32>
    %c0_48 = arith.constant 0 : index
    %c103_49 = arith.constant 103 : index
    %39 = vector.load %arg14[%c0_48, %c103_49] : memref<8x1224xf32, #tpu.memory_space<vmem>>, vector<8x1088xf32>
    %40 = tpu.concatenate %31, %32, %33, %34, %35, %36, %37, %38, %39 in 0 : vector<8x1088xf32>, vector<8x1088xf32>, vector<8x1088xf32>, vector<8x1088xf32>, vector<8x1088xf32>, vector<8x1088xf32>, vector<8x1088xf32>, vector<8x1088xf32>, vector<8x1088xf32> -> vector<72x1088xf32>
    %cst_50 = arith.constant dense<0.000000e+00> : vector<8x1088xf32>
    %41 = tpu.matmul %30, %40, %cst_50 {dimension_numbers = #tpu.dot_dimension_numbers<[1], [0], [0], [1], [0, 0, 1, 1], [], []>} : vector<8x72xf32>, vector<72x1088xf32>, vector<8x1088xf32> -> vector<8x1088xf32>
    %c0_51 = arith.constant 0 : index
    %c0_52 = arith.constant 0 : index
    %42 = vector.load %arg6[%c0_51, %c0_52] : memref<8x1xf32, #tpu.memory_space<vmem>>, vector<8x1xf32>
    %43 = vector.broadcast %42 : vector<8x1xf32> to vector<8x1088xf32>
    %44 = arith.addf %41, %43 : vector<8x1088xf32>
    %cst_53 = arith.constant 0.000000e+00 : f32
    %45 = vector.broadcast %cst_53 : f32 to vector<8x1088xf32>
    %46 = arith.maximumf %44, %45 : vector<8x1088xf32>
    %47 = vector.broadcast %9 : vector<1x1088xf32> to vector<8x1088xf32>
    %48 = arith.mulf %46, %47 : vector<8x1088xf32>
    %c0_54 = arith.constant 0 : index
    %c68_55 = arith.constant 68 : index
    %49 = vector.load %arg14[%c0_54, %c68_55] : memref<8x1224xf32, #tpu.memory_space<vmem>>, vector<8x1088xf32>
    tpu.vector_store %arg14[%c0_54, %c68_55], %48 {strides = array<i32>} : memref<8x1224xf32, #tpu.memory_space<vmem>>, vector<8x1088xf32>,
    %c0_56 = arith.constant 0 : index
    %c0_57 = arith.constant 0 : index
    %50 = vector.load %arg7[%c0_56, %c0_57] : memref<8x72xf32, #tpu.memory_space<vmem>>, vector<8x72xf32>
    %c0_58 = arith.constant 0 : index
    %c33_59 = arith.constant 33 : index
    %51 = vector.load %arg14[%c0_58, %c33_59] : memref<8x1224xf32, #tpu.memory_space<vmem>>, vector<8x1088xf32>
    %c0_60 = arith.constant 0 : index
    %c34_61 = arith.constant 34 : index
    %52 = vector.load %arg14[%c0_60, %c34_61] : memref<8x1224xf32, #tpu.memory_space<vmem>>, vector<8x1088xf32>
    %c0_62 = arith.constant 0 : index
    %c35_63 = arith.constant 35 : index
    %53 = vector.load %arg14[%c0_62, %c35_63] : memref<8x1224xf32, #tpu.memory_space<vmem>>, vector<8x1088xf32>
    %c0_64 = arith.constant 0 : index
    %c67_65 = arith.constant 67 : index
    %54 = vector.load %arg14[%c0_64, %c67_65] : memref<8x1224xf32, #tpu.memory_space<vmem>>, vector<8x1088xf32>
    %c0_66 = arith.constant 0 : index
    %c68_67 = arith.constant 68 : index
    %55 = vector.load %arg14[%c0_66, %c68_67] : memref<8x1224xf32, #tpu.memory_space<vmem>>, vector<8x1088xf32>
    %c0_68 = arith.constant 0 : index
    %c69_69 = arith.constant 69 : index
    %56 = vector.load %arg14[%c0_68, %c69_69] : memref<8x1224xf32, #tpu.memory_space<vmem>>, vector<8x1088xf32>
    %c0_70 = arith.constant 0 : index
    %c101_71 = arith.constant 101 : index
    %57 = vector.load %arg14[%c0_70, %c101_71] : memref<8x1224xf32, #tpu.memory_space<vmem>>, vector<8x1088xf32>
    %c0_72 = arith.constant 0 : index
    %c102_73 = arith.constant 102 : index
    %58 = vector.load %arg14[%c0_72, %c102_73] : memref<8x1224xf32, #tpu.memory_space<vmem>>, vector<8x1088xf32>
    %c0_74 = arith.constant 0 : index
    %c103_75 = arith.constant 103 : index
    %59 = vector.load %arg14[%c0_74, %c103_75] : memref<8x1224xf32, #tpu.memory_space<vmem>>, vector<8x1088xf32>
    %60 = tpu.concatenate %51, %52, %53, %54, %55, %56, %57, %58, %59 in 0 : vector<8x1088xf32>, vector<8x1088xf32>, vector<8x1088xf32>, vector<8x1088xf32>, vector<8x1088xf32>, vector<8x1088xf32>, vector<8x1088xf32>, vector<8x1088xf32>, vector<8x1088xf32> -> vector<72x1088xf32>
    %cst_76 = arith.constant dense<0.000000e+00> : vector<8x1088xf32>
    %61 = tpu.matmul %50, %60, %cst_76 {dimension_numbers = #tpu.dot_dimension_numbers<[1], [0], [0], [1], [0, 0, 1, 1], [], []>} : vector<8x72xf32>, vector<72x1088xf32>, vector<8x1088xf32> -> vector<8x1088xf32>
    %c0_77 = arith.constant 0 : index
    %c0_78 = arith.constant 0 : index
    %62 = vector.load %arg8[%c0_77, %c0_78] : memref<8x1xf32, #tpu.memory_space<vmem>>, vector<8x1xf32>
    %63 = vector.broadcast %62 : vector<8x1xf32> to vector<8x1088xf32>
    %64 = arith.addf %61, %63 : vector<8x1088xf32>
    %c0_79 = arith.constant 0 : index
    %c0_80 = arith.constant 0 : index
    %65 = vector.load %arg9[%c0_79, %c0_80] : memref<8x8xf32, #tpu.memory_space<vmem>>, vector<8x8xf32>
    %c0_81 = arith.constant 0 : index
    %c68_82 = arith.constant 68 : index
    %66 = vector.load %arg13[%c0_81, %c68_82] : memref<8x1224xf32, #tpu.memory_space<vmem>>, vector<8x1088xf32>
    %cst_83 = arith.constant dense<0.000000e+00> : vector<8x1088xf32>
    %67 = tpu.matmul %65, %66, %cst_83 {dimension_numbers = #tpu.dot_dimension_numbers<[1], [0], [0], [1], [0, 0, 1, 1], [], []>} : vector<8x8xf32>, vector<8x1088xf32>, vector<8x1088xf32> -> vector<8x1088xf32>
    %c0_84 = arith.constant 0 : index
    %c0_85 = arith.constant 0 : index
    %68 = vector.load %arg10[%c0_84, %c0_85] : memref<8x1xf32, #tpu.memory_space<vmem>>, vector<8x1xf32>
    %69 = vector.broadcast %68 : vector<8x1xf32> to vector<8x1088xf32>
    %70 = arith.addf %67, %69 : vector<8x1088xf32>
    %71 = arith.addf %64, %70 : vector<8x1088xf32>
    %cst_86 = arith.constant 0.000000e+00 : f32
    %72 = vector.broadcast %cst_86 : f32 to vector<8x1088xf32>
    %73 = arith.maximumf %71, %72 : vector<8x1088xf32>
    %c0_87 = arith.constant 0 : index
    %c0_88 = arith.constant 0 : index
    %c0_89 = arith.constant 0 : index
    %74 = vector.load %arg12[%c0_87, %c0_88, %c0_89] : memref<1x8x1088xf32, #tpu.memory_space<vmem>>, vector<1x8x1088xf32>
    %75 = vector.shape_cast %74 : vector<1x8x1088xf32> to vector<8x1088xf32>
    %76 = vector.shape_cast %73 : vector<8x1088xf32> to vector<1x8x1088xf32>
    tpu.vector_store %arg12[%c0_87, %c0_88, %c0_89], %76 {strides = array<i32>} : memref<1x8x1088xf32, #tpu.memory_space<vmem>>, vector<1x8x1088xf32>,
    return
  }
  func.func @transform_0(%arg0: i32) -> (i32, i32, i32) {
    %c0_i32 = arith.constant 0 : i32
    %c0_i32_0 = arith.constant 0 : i32
    %c0_i32_1 = arith.constant 0 : i32
    return %arg0, %c0_i32, %c0_i32_0 : i32, i32, i32
  }
  func.func @transform_1(%arg0: i32) -> (i32, i32) {
    %c0_i32 = arith.constant 0 : i32
    %c0_i32_0 = arith.constant 0 : i32
    %c0_i32_1 = arith.constant 0 : i32
    return %c0_i32, %c0_i32_0 : i32, i32
  }
  func.func @transform_2(%arg0: i32) -> (i32, i32) {
    %c0_i32 = arith.constant 0 : i32
    %c0_i32_0 = arith.constant 0 : i32
    %c0_i32_1 = arith.constant 0 : i32
    return %c0_i32, %c0_i32_0 : i32, i32
  }
  func.func @transform_3(%arg0: i32) -> (i32, i32) {
    %c0_i32 = arith.constant 0 : i32
    %c0_i32_0 = arith.constant 0 : i32
    %c0_i32_1 = arith.constant 0 : i32
    return %c0_i32, %c0_i32_0 : i32, i32
  }
  func.func @transform_4(%arg0: i32) -> (i32, i32) {
    %c0_i32 = arith.constant 0 : i32
    %c0_i32_0 = arith.constant 0 : i32
    %c0_i32_1 = arith.constant 0 : i32
    return %c0_i32, %c0_i32_0 : i32, i32
  }
  func.func @transform_5(%arg0: i32) -> (i32, i32) {
    %c0_i32 = arith.constant 0 : i32
    %c0_i32_0 = arith.constant 0 : i32
    %c0_i32_1 = arith.constant 0 : i32
    return %c0_i32, %c0_i32_0 : i32, i32
  }
  func.func @transform_6(%arg0: i32) -> (i32, i32) {
    %c0_i32 = arith.constant 0 : i32
    %c0_i32_0 = arith.constant 0 : i32
    %c0_i32_1 = arith.constant 0 : i32
    return %c0_i32, %c0_i32_0 : i32, i32
  }
  func.func @transform_7(%arg0: i32) -> (i32, i32) {
    %c0_i32 = arith.constant 0 : i32
    %c0_i32_0 = arith.constant 0 : i32
    %c0_i32_1 = arith.constant 0 : i32
    return %c0_i32, %c0_i32_0 : i32, i32
  }
  func.func @transform_8(%arg0: i32) -> (i32, i32) {
    %c0_i32 = arith.constant 0 : i32
    %c0_i32_0 = arith.constant 0 : i32
    %c0_i32_1 = arith.constant 0 : i32
    return %c0_i32, %c0_i32_0 : i32, i32
  }
  func.func @transform_9(%arg0: i32) -> (i32, i32) {
    %c0_i32 = arith.constant 0 : i32
    %c0_i32_0 = arith.constant 0 : i32
    %c0_i32_1 = arith.constant 0 : i32
    return %c0_i32, %c0_i32_0 : i32, i32
  }
  func.func @transform_10(%arg0: i32) -> (i32, i32) {
    %c0_i32 = arith.constant 0 : i32
    %c0_i32_0 = arith.constant 0 : i32
    %c0_i32_1 = arith.constant 0 : i32
    return %c0_i32, %c0_i32_0 : i32, i32
  }
  func.func @transform_11(%arg0: i32) -> (i32, i32, i32) {
    %c0_i32 = arith.constant 0 : i32
    %c0_i32_0 = arith.constant 0 : i32
    %c0_i32_1 = arith.constant 0 : i32
    return %arg0, %c0_i32, %c0_i32_0 : i32, i32, i32
  }
}

</mosaic_0001>

<llo_original>
// kernel: tpu_custom_call.1
$region0: #{tpu_custom_call.1}
  #allocation0 [shape = 'u32[]', space=smem, size = 0x4, offset = 0x4, fixed_abs, tag = 'smem constant byte address 0x4 - core index']
  #allocation1 [shape = 'u32[144,128]{1,0:T(1,128)}', space=vmem, size = 0x12000, scoped, tag = 'internal scratch']
  #allocation2 [shape = 'f32[8,1224]{1,0:T(8,128)}', space=vmem, size = 0xa000, scoped, tag = 'scratch operand']
  #allocation3 [shape = 'f32[8,1224]{1,0:T(8,128)}', space=vmem, size = 0xa000, scoped, tag = 'scratch operand']
  %s0 = inlined_call_operand.vmem [shape: f32[2,8,256], index: 0, kind: input, shape index: {}]
  %s1 = inlined_call_operand.vmem [shape: f32[256,1224], index: 1, kind: input, shape index: {}]
  %s2 = inlined_call_operand.vmem [shape: f32[8,72], index: 2, kind: input, shape index: {}]
  %s3 = inlined_call_operand.vmem [shape: f32[8,1], index: 3, kind: input, shape index: {}]
  %s4 = inlined_call_operand.vmem [shape: f32[8,72], index: 4, kind: input, shape index: {}]
  %s5 = inlined_call_operand.vmem [shape: f32[8,1], index: 5, kind: input, shape index: {}]
  %s6 = inlined_call_operand.vmem [shape: f32[8,72], index: 6, kind: input, shape index: {}]
  %s7 = inlined_call_operand.vmem [shape: f32[8,1], index: 7, kind: input, shape index: {}]
  %s8 = inlined_call_operand.vmem [shape: f32[8,8], index: 8, kind: input, shape index: {}]
  %s9 = inlined_call_operand.vmem [shape: f32[8,1], index: 9, kind: input, shape index: {}]
  %s10 = inlined_call_operand.vmem [shape: f32[1,1088], index: 10, kind: input, shape index: {}]
  %s11 = inlined_call_operand.hbm [shape: f32[2,8,1088], index: 11, kind: output, shape index: {}]
  %s12 = sld [smem:[#allocation0]]
  $region77: #{tpu_custom_call.1} parent=0
    _
  %s14 = ssub.s32 1, %s12
  %s15 = scalar_select 0, %s14, %s12
  $region1: #{tpu_custom_call.1} parent=0
    #allocation4 [shape = 'u8[73728]{0}', space=vmem, size = 0x12000, scoped, tag = 'output window, operand 0']
    #allocation5 [shape = 's32[2]{0}', space=sflag, size = 0x8, scoped, tag = 'scoped memory for tpu_custom_call.1']
    %16 = vsyncpa [#allocation5], 0
    %s17 = scalar_lea.sflag [#allocation5], 1
    %18 = vsyncpa %s17, 0
    loop: start=0, step=1, limit=4
    $region2: #{tpu_custom_call.1} parent=1 // loop_pre_header
      _
    $region3: #{tpu_custom_call.1} parent=1 // loop_header
      %s20 = sphi 0, %s24
      %p21 = scmp.ge.s32.totalorder %s20, 4
      %s30 = sphi 0, %s32
      %s33 = sphi 0, %s30
      %s34 = sphi 0, %s33
      %s50 = sphi 0, %s34
      %s54 = sphi 0, %s54
      %s56 = sphi 0, %s54
      %s57 = sphi 0, %s56
      %s71 = sphi 0, %s57
      %s75 = sphi 0, %s75
      %s77 = sphi 0, %s75
      %s78 = sphi 0, %s77
      %s92 = sphi 0, %s78
      %s96 = sphi 0, %s96
      %s98 = sphi 0, %s96
      %s99 = sphi 0, %s98
      %s113 = sphi 0, %s99
      %s117 = sphi 0, %s117
      %s119 = sphi 0, %s117
      %s120 = sphi 0, %s119
      %s134 = sphi 0, %s120
      %s138 = sphi 0, %s138
      %s140 = sphi 0, %s138
      %s141 = sphi 0, %s140
      %s155 = sphi 0, %s141
      %s159 = sphi 0, %s159
      %s161 = sphi 0, %s159
      %s162 = sphi 0, %s161
      %s176 = sphi 0, %s162
      %s180 = sphi 0, %s180
      %s182 = sphi 0, %s180
      %s183 = sphi 0, %s182
      %s197 = sphi 0, %s183
      %s201 = sphi 0, %s201
      %s203 = sphi 0, %s201
      %s204 = sphi 0, %s203
      %s218 = sphi 0, %s204
      %s222 = sphi 0, %s222
      %s224 = sphi 0, %s222
      %s225 = sphi 0, %s224
      %s239 = sphi 0, %s225
      %s243 = sphi 0, %s243
      %s245 = sphi 0, %s243
      %s246 = sphi 0, %s245
      %s260 = sphi 0, %s246
      %s266 = sphi 0, %s268
      %s269 = sphi 0, %s266
      %s270 = sphi 0, %s269
      %s286 = sphi 0, %s270
    $region4: #{tpu_custom_call.1} parent=1 // loop_header_branch
      %23 = sbr.rel (%p21) target = $region8
    $region5: #{tpu_custom_call.1} parent=1 // loop_body
      %s25 = ssub.s32 %s20, 1
      %s26 = ssub.s32 %s20, 2
      %s27 = sadd.s32 %s20, 1
      %s28 = ssub.s32 %s20, %s27
      %p29 = scmp.eq.s32.totalorder %s28, 0
      %s31 = sadd.s32 %s30, 1
      %s32 = scalar_select %p29, %s30, %s31
      %p35 = pneg %p29
      %p36 = scmp.eq.s32.totalorder %s20, 1
      %p37 = por %p35, %p36
      %p38 = scmp.ne.s32.totalorder %s30, %s33
      %p39 = scmp.eq.s32.totalorder %s20, 0
      %p40 = por %p38, %p39
      %p41 = scmp.ne.s32.totalorder %s30, %s33
      %p42 = scmp.eq.s32.totalorder %s25, 1
      %p43 = por %p41, %p42
      %p44 = scmp.ne.s32.totalorder %s33, %s34
      %p45 = scmp.eq.s32.totalorder %s25, 0
      %p46 = por %p44, %p45
      %p47 = scmp.ne.s32.totalorder %s33, %s34
      %p48 = scmp.eq.s32.totalorder %s26, 1
      %p49 = por %p47, %p48
      %p51 = scmp.ne.s32.totalorder %s34, %s50
      %p52 = scmp.eq.s32.totalorder %s26, 0
      %p53 = por %p51, %p52
      %s55 = sadd.s32 %s54, 1
      %p58 = scmp.eq.s32.totalorder %s20, 1
      %p59 = scmp.ne.s32.totalorder %s54, %s56
      %p60 = scmp.eq.s32.totalorder %s20, 0
      %p61 = por %p59, %p60
      %p62 = scmp.ne.s32.totalorder %s54, %s56
      %p63 = scmp.eq.s32.totalorder %s25, 1
      %p64 = por %p62, %p63
      %p65 = scmp.ne.s32.totalorder %s56, %s57
      %p66 = scmp.eq.s32.totalorder %s25, 0
      %p67 = por %p65, %p66
      %p68 = scmp.ne.s32.totalorder %s56, %s57
      %p69 = scmp.eq.s32.totalorder %s26, 1
      %p70 = por %p68, %p69
      %p72 = scmp.ne.s32.totalorder %s57, %s71
      %p73 = scmp.eq.s32.totalorder %s26, 0
      %p74 = por %p72, %p73
      %s76 = sadd.s32 %s75, 1
      %p79 = scmp.eq.s32.totalorder %s20, 1
      %p80 = scmp.ne.s32.totalorder %s75, %s77
      %p81 = scmp.eq.s32.totalorder %s20, 0
      %p82 = por %p80, %p81
      %p83 = scmp.ne.s32.totalorder %s75, %s77
      %p84 = scmp.eq.s32.totalorder %s25, 1
      %p85 = por %p83, %p84
      %p86 = scmp.ne.s32.totalorder %s77, %s78
      %p87 = scmp.eq.s32.totalorder %s25, 0
      %p88 = por %p86, %p87
      %p89 = scmp.ne.s32.totalorder %s77, %s78
      %p90 = scmp.eq.s32.totalorder %s26, 1
      %p91 = por %p89, %p90
      %p93 = scmp.ne.s32.totalorder %s78, %s92
      %p94 = scmp.eq.s32.totalorder %s26, 0
      %p95 = por %p93, %p94
      %s97 = sadd.s32 %s96, 1
      %p100 = scmp.eq.s32.totalorder %s20, 1
      %p101 = scmp.ne.s32.totalorder %s96, %s98
      %p102 = scmp.eq.s32.totalorder %s20, 0
      %p103 = por %p101, %p102
      %p104 = scmp.ne.s32.totalorder %s96, %s98
      %p105 = scmp.eq.s32.totalorder %s25, 1
      %p106 = por %p104, %p105
      %p107 = scmp.ne.s32.totalorder %s98, %s99
      %p108 = scmp.eq.s32.totalorder %s25, 0
      %p109 = por %p107, %p108
      %p110 = scmp.ne.s32.totalorder %s98, %s99
      %p111 = scmp.eq.s32.totalorder %s26, 1
      %p112 = por %p110, %p111
      %p114 = scmp.ne.s32.totalorder %s99, %s113
      %p115 = scmp.eq.s32.totalorder %s26, 0
      %p116 = por %p114, %p115
      %s118 = sadd.s32 %s117, 1
      %p121 = scmp.eq.s32.totalorder %s20, 1
      %p122 = scmp.ne.s32.totalorder %s117, %s119
      %p123 = scmp.eq.s32.totalorder %s20, 0
      %p124 = por %p122, %p123
      %p125 = scmp.ne.s32.totalorder %s117, %s119
      %p126 = scmp.eq.s32.totalorder %s25, 1
      %p127 = por %p125, %p126
      %p128 = scmp.ne.s32.totalorder %s119, %s120
      %p129 = scmp.eq.s32.totalorder %s25, 0
      %p130 = por %p128, %p129
      %p131 = scmp.ne.s32.totalorder %s119, %s120
      %p132 = scmp.eq.s32.totalorder %s26, 1
      %p133 = por %p131, %p132
      %p135 = scmp.ne.s32.totalorder %s120, %s134
      %p136 = scmp.eq.s32.totalorder %s26, 0
      %p137 = por %p135, %p136
      %s139 = sadd.s32 %s138, 1
      %p142 = scmp.eq.s32.totalorder %s20, 1
      %p143 = scmp.ne.s32.totalorder %s138, %s140
      %p144 = scmp.eq.s32.totalorder %s20, 0
      %p145 = por %p143, %p144
      %p146 = scmp.ne.s32.totalorder %s138, %s140
      %p147 = scmp.eq.s32.totalorder %s25, 1
      %p148 = por %p146, %p147
      %p149 = scmp.ne.s32.totalorder %s140, %s141
      %p150 = scmp.eq.s32.totalorder %s25, 0
      %p151 = por %p149, %p150
      %p152 = scmp.ne.s32.totalorder %s140, %s141
      %p153 = scmp.eq.s32.totalorder %s26, 1
      %p154 = por %p152, %p153
      %p156 = scmp.ne.s32.totalorder %s141, %s155
      %p157 = scmp.eq.s32.totalorder %s26, 0
      %p158 = por %p156, %p157
      %s160 = sadd.s32 %s159, 1
      %p163 = scmp.eq.s32.totalorder %s20, 1
      %p164 = scmp.ne.s32.totalorder %s159, %s161
      %p165 = scmp.eq.s32.totalorder %s20, 0
      %p166 = por %p164, %p165
      %p167 = scmp.ne.s32.totalorder %s159, %s161
      %p168 = scmp.eq.s32.totalorder %s25, 1
      %p169 = por %p167, %p168
      %p170 = scmp.ne.s32.totalorder %s161, %s162
      %p171 = scmp.eq.s32.totalorder %s25, 0
      %p172 = por %p170, %p171
      %p173 = scmp.ne.s32.totalorder %s161, %s162
      %p174 = scmp.eq.s32.totalorder %s26, 1
      %p175 = por %p173, %p174
      %p177 = scmp.ne.s32.totalorder %s162, %s176
      %p178 = scmp.eq.s32.totalorder %s26, 0
      %p179 = por %p177, %p178
      %s181 = sadd.s32 %s180, 1
      %p184 = scmp.eq.s32.totalorder %s20, 1
      %p185 = scmp.ne.s32.totalorder %s180, %s182
      %p186 = scmp.eq.s32.totalorder %s20, 0
      %p187 = por %p185, %p186
      %p188 = scmp.ne.s32.totalorder %s180, %s182
      %p189 = scmp.eq.s32.totalorder %s25, 1
      %p190 = por %p188, %p189
      %p191 = scmp.ne.s32.totalorder %s182, %s183
      %p192 = scmp.eq.s32.totalorder %s25, 0
      %p193 = por %p191, %p192
      %p194 = scmp.ne.s32.totalorder %s182, %s183
      %p195 = scmp.eq.s32.totalorder %s26, 1
      %p196 = por %p194, %p195
      %p198 = scmp.ne.s32.totalorder %s183, %s197
      %p199 = scmp.eq.s32.totalorder %s26, 0
      %p200 = por %p198, %p199
      %s202 = sadd.s32 %s201, 1
      %p205 = scmp.eq.s32.totalorder %s20, 1
      %p206 = scmp.ne.s32.totalorder %s201, %s203
      %p207 = scmp.eq.s32.totalorder %s20, 0
      %p208 = por %p206, %p207
      %p209 = scmp.ne.s32.totalorder %s201, %s203
      %p210 = scmp.eq.s32.totalorder %s25, 1
      %p211 = por %p209, %p210
      %p212 = scmp.ne.s32.totalorder %s203, %s204
      %p213 = scmp.eq.s32.totalorder %s25, 0
      %p214 = por %p212, %p213
      %p215 = scmp.ne.s32.totalorder %s203, %s204
      %p216 = scmp.eq.s32.totalorder %s26, 1
      %p217 = por %p215, %p216
      %p219 = scmp.ne.s32.totalorder %s204, %s218
      %p220 = scmp.eq.s32.totalorder %s26, 0
      %p221 = por %p219, %p220
      %s223 = sadd.s32 %s222, 1
      %p226 = scmp.eq.s32.totalorder %s20, 1
      %p227 = scmp.ne.s32.totalorder %s222, %s224
      %p228 = scmp.eq.s32.totalorder %s20, 0
      %p229 = por %p227, %p228
      %p230 = scmp.ne.s32.totalorder %s222, %s224
      %p231 = scmp.eq.s32.totalorder %s25, 1
      %p232 = por %p230, %p231
      %p233 = scmp.ne.s32.totalorder %s224, %s225
      %p234 = scmp.eq.s32.totalorder %s25, 0
      %p235 = por %p233, %p234
      %p236 = scmp.ne.s32.totalorder %s224, %s225
      %p237 = scmp.eq.s32.totalorder %s26, 1
      %p238 = por %p236, %p237
      %p240 = scmp.ne.s32.totalorder %s225, %s239
      %p241 = scmp.eq.s32.totalorder %s26, 0
      %p242 = por %p240, %p241
      %s244 = sadd.s32 %s243, 1
      %p247 = scmp.eq.s32.totalorder %s20, 1
      %p248 = scmp.ne.s32.totalorder %s243, %s245
      %p249 = scmp.eq.s32.totalorder %s20, 0
      %p250 = por %p248, %p249
      %p251 = scmp.ne.s32.totalorder %s243, %s245
      %p252 = scmp.eq.s32.totalorder %s25, 1
      %p253 = por %p251, %p252
      %p254 = scmp.ne.s32.totalorder %s245, %s246
      %p255 = scmp.eq.s32.totalorder %s25, 0
      %p256 = por %p254, %p255
      %p257 = scmp.ne.s32.totalorder %s245, %s246
      %p258 = scmp.eq.s32.totalorder %s26, 1
      %p259 = por %p257, %p258
      %p261 = scmp.ne.s32.totalorder %s246, %s260
      %p262 = scmp.eq.s32.totalorder %s26, 0
      %p263 = por %p261, %p262
      %s264 = ssub.s32 %s20, %s27
      %p265 = scmp.eq.s32.totalorder %s264, 0
      %s267 = sadd.s32 %s266, 1
      %s268 = scalar_select %p265, %s266, %s267
      %p271 = pneg %p265
      %p272 = scmp.eq.s32.totalorder %s20, 1
      %p273 = por %p271, %p272
      %p274 = scmp.ne.s32.totalorder %s266, %s269
      %p275 = scmp.eq.s32.totalorder %s20, 0
      %p276 = por %p274, %p275
      %p277 = scmp.ne.s32.totalorder %s266, %s269
      %p278 = scmp.eq.s32.totalorder %s25, 1
      %p279 = por %p277, %p278
      %p280 = scmp.ne.s32.totalorder %s269, %s270
      %p281 = scmp.eq.s32.totalorder %s25, 0
      %p282 = por %p280, %p281
      %p283 = scmp.ne.s32.totalorder %s269, %s270
      %p284 = scmp.eq.s32.totalorder %s26, 1
      %p285 = por %p283, %p284
      %p287 = scmp.ne.s32.totalorder %s270, %s286
      %p288 = scmp.eq.s32.totalorder %s26, 0
      %p289 = por %p287, %p288
      %p290 = scmp.le.s32.totalorder 1, %s20
      %p291 = scmp.lt.s32.totalorder %s20, 3
      %p292 = pnand %p290, %p291
      %p293 = pneg %p292
      // Predicated region
      $region9: #{tpu_custom_call.1} parent=5 // pred_check
        _
      $region10: #{tpu_custom_call.1} parent=5 // pred_check_branch
        %295 = sbr.rel (%p292) target = $region12
      $region11: #{tpu_custom_call.1} parent=5 // pred_region
        %s296 = ssub.s32 %s20, 1
        // Predicated region
        $region13: #{tpu_custom_call.1} parent=11 // pred_check
          %p297 = pneg %p67
        $region14: #{tpu_custom_call.1} parent=11 // pred_check_branch
          %299 = sbr.rel (%p297) target = $region16
        $region15: #{tpu_custom_call.1} parent=11 // pred_region
          _
        $region16: #{tpu_custom_call.1} parent=11 // pred_fallthru
          _
        // Predicated region
        $region17: #{tpu_custom_call.1} parent=11 // pred_check
          %p300 = pneg %p88
        $region18: #{tpu_custom_call.1} parent=11 // pred_check_branch
          %302 = sbr.rel (%p300) target = $region20
        $region19: #{tpu_custom_call.1} parent=11 // pred_region
          _
        $region20: #{tpu_custom_call.1} parent=11 // pred_fallthru
          _
        // Predicated region
        $region21: #{tpu_custom_call.1} parent=11 // pred_check
          %p303 = pneg %p109
        $region22: #{tpu_custom_call.1} parent=11 // pred_check_branch
          %305 = sbr.rel (%p303) target = $region24
        $region23: #{tpu_custom_call.1} parent=11 // pred_region
          _
        $region24: #{tpu_custom_call.1} parent=11 // pred_fallthru
          _
        // Predicated region
        $region25: #{tpu_custom_call.1} parent=11 // pred_check
          %p306 = pneg %p130
        $region26: #{tpu_custom_call.1} parent=11 // pred_check_branch
          %308 = sbr.rel (%p306) target = $region28
        $region27: #{tpu_custom_call.1} parent=11 // pred_region
          _
        $region28: #{tpu_custom_call.1} parent=11 // pred_fallthru
          _
        // Predicated region
        $region29: #{tpu_custom_call.1} parent=11 // pred_check
          %p309 = pneg %p151
        $region30: #{tpu_custom_call.1} parent=11 // pred_check_branch
          %311 = sbr.rel (%p309) target = $region32
        $region31: #{tpu_custom_call.1} parent=11 // pred_region
          _
        $region32: #{tpu_custom_call.1} parent=11 // pred_fallthru
          _
        // Predicated region
        $region33: #{tpu_custom_call.1} parent=11 // pred_check
          %p312 = pneg %p172
        $region34: #{tpu_custom_call.1} parent=11 // pred_check_branch
          %314 = sbr.rel (%p312) target = $region36
        $region35: #{tpu_custom_call.1} parent=11 // pred_region
          _
        $region36: #{tpu_custom_call.1} parent=11 // pred_fallthru
          _
        // Predicated region
        $region37: #{tpu_custom_call.1} parent=11 // pred_check
          %p315 = pneg %p193
        $region38: #{tpu_custom_call.1} parent=11 // pred_check_branch
          %317 = sbr.rel (%p315) target = $region40
        $region39: #{tpu_custom_call.1} parent=11 // pred_region
          _
        $region40: #{tpu_custom_call.1} parent=11 // pred_fallthru
          _
        // Predicated region
        $region41: #{tpu_custom_call.1} parent=11 // pred_check
          %p318 = pneg %p214
        $region42: #{tpu_custom_call.1} parent=11 // pred_check_branch
          %320 = sbr.rel (%p318) target = $region44
        $region43: #{tpu_custom_call.1} parent=11 // pred_region
          _
        $region44: #{tpu_custom_call.1} parent=11 // pred_fallthru
          _
        // Predicated region
        $region45: #{tpu_custom_call.1} parent=11 // pred_check
          %p321 = pneg %p235
        $region46: #{tpu_custom_call.1} parent=11 // pred_check_branch
          %323 = sbr.rel (%p321) target = $region48
        $region47: #{tpu_custom_call.1} parent=11 // pred_region
          _
        $region48: #{tpu_custom_call.1} parent=11 // pred_fallthru
          _
        // Predicated region
        $region49: #{tpu_custom_call.1} parent=11 // pred_check
          %p324 = pneg %p256
        $region50: #{tpu_custom_call.1} parent=11 // pred_check_branch
          %326 = sbr.rel (%p324) target = $region52
        $region51: #{tpu_custom_call.1} parent=11 // pred_region
          _
        $region52: #{tpu_custom_call.1} parent=11 // pred_fallthru
          _
      $region12: #{tpu_custom_call.1} parent=5 // pred_fallthru
        _
      %p327 = scmp.lt.s32.totalorder %s20, 2
      // Predicated region
      $region53: #{tpu_custom_call.1} parent=5 // pred_check
        %p328 = pneg %p327
      $region54: #{tpu_custom_call.1} parent=5 // pred_check_branch
        %330 = sbr.rel (%p328) target = $region56
      $region55: #{tpu_custom_call.1} parent=5 // pred_region
        // Predicated region
        $region57: #{tpu_custom_call.1} parent=55 // pred_check
          %p331 = pneg %p40
        $region58: #{tpu_custom_call.1} parent=55 // pred_check_branch
          %333 = sbr.rel (%p331) target = $region60
        $region59: #{tpu_custom_call.1} parent=55 // pred_region
          %p334 = scmp.lt.s32.totalorder %s20, 1
          %s335 = scalar_select %p334, %s20, 1
          %s336 = smul.addr %s335, 2
          %s337 = smul.addr %s336, 8
          %s338 = scalar_lea.vmem %s0, %s337
        $region60: #{tpu_custom_call.1} parent=55 // pred_fallthru
          _
      $region56: #{tpu_custom_call.1} parent=5 // pred_fallthru
        _
      %p339 = scmp.le.s32.totalorder 1, %s20
      %p340 = scmp.lt.s32.totalorder %s20, 3
      %p341 = pnand %p339, %p340
      %p342 = pneg %p341
      // Predicated region
      $region61: #{tpu_custom_call.1} parent=5 // pred_check
        _
      $region62: #{tpu_custom_call.1} parent=5 // pred_check_branch
        %344 = sbr.rel (%p341) target = $region64
      $region63: #{tpu_custom_call.1} parent=5 // pred_region
        %s345 = ssub.s32 %s20, 1
        %p346 = scmp.lt.s32.totalorder %s25, 1
        %s347 = scalar_select %p346, %s25, 1
        %s348 = smul.addr %s347, 2
        %s349 = smul.addr %s348, 8
        %s350 = scalar_lea.vmem %s0, %s349
        %p351 = pneg %p46
        %p352 = pneg %p43
        %p353 = pneg %p67
        %p354 = pneg %p64
        %p355 = pneg %p88
        %p356 = pneg %p85
        %p357 = pneg %p109
        %p358 = pneg %p106
        %p359 = pneg %p130
        %p360 = pneg %p127
        %p361 = pneg %p151
        %p362 = pneg %p148
        %p363 = pneg %p172
        %p364 = pneg %p169
        %p365 = pneg %p193
        %p366 = pneg %p190
        %p367 = pneg %p214
        %p368 = pneg %p211
        %p369 = pneg %p235
        %p370 = pneg %p232
        %p371 = pneg %p256
        %p372 = pneg %p253
        %p373 = pneg %p282
        %p374 = pneg %p279
        %s375 = sand.u32 %s269, 1
        %s376 = scalar_lea.sflag [#allocation5], %s375
        %s377 = sand.u32 %s269, 1
        %s378 = smul.addr %s377, 72
        %s379 = scalar_lea.vmem [#allocation4], %s378
        %p380 = scmp.lt.s32.totalorder %s25, 1
        %s381 = scalar_select %p380, %s25, 1
        %s382 = smul.addr %s381, 2
        %s383 = smul.addr %s382, 8
        %s384 = scalar_lea.vmem %s0, %s383
        %v385 = vld [vmem:[%s384] sm:$0xff]
        %v386 = vld [vmem:[%s384 + $0x8] sm:$0xff]
        %v387 = vld [vmem:[%s1] sm:$0xff]
        %v388 = vld [vmem:[%s1 + $0x8] sm:$0xff]
        %v389 = vld [vmem:[%s1 + $0x10] sm:$0xff]
        %v390 = vld [vmem:[%s1 + $0x18] sm:$0xff]
        %v391 = vld [vmem:[%s1 + $0x20] sm:$0xff]
        %v392 = vld [vmem:[%s1 + $0x28] sm:$0xff]
        %v393 = vld [vmem:[%s1 + $0x30] sm:$0xff]
        %v394 = vld [vmem:[%s1 + $0x38] sm:$0xff]
        %v395 = vld [vmem:[%s1 + $0x40] sm:$0xff]
        %v396 = vld [vmem:[%s1 + $0x48] sm:$0xff]
        %v397 = vld [vmem:[%s1 + $0x50] sm:$0xff]
        %v398 = vld [vmem:[%s1 + $0x58] sm:$0xff]
        %v399 = vld [vmem:[%s1 + $0x60] sm:$0xff]
        %v400 = vld [vmem:[%s1 + $0x68] sm:$0xff]
        %v401 = vld [vmem:[%s1 + $0x70] sm:$0xff]
        %v402 = vld [vmem:[%s1 + $0x78] sm:$0xff]
        %v403 = vld [vmem:[%s1 + $0x80] sm:$0xff]
        %v404 = vld [vmem:[%s1 + $0x88] sm:$0xff]
        %v405 = vld [vmem:[%s1 + $0x90] sm:$0xff]
        %v406 = vld [vmem:[%s1 + $0x98] sm:$0xff]
        %v407 = vld [vmem:[%s1 + $0xa0] sm:$0xff]
        %v408 = vld [vmem:[%s1 + $0xa8] sm:$0xff]
        %v409 = vld [vmem:[%s1 + $0xb0] sm:$0xff]
        %v410 = vld [vmem:[%s1 + $0xb8] sm:$0xff]
        %v411 = vld [vmem:[%s1 + $0xc0] sm:$0xff]
        %v412 = vld [vmem:[%s1 + $0xc8] sm:$0xff]
        %v413 = vld [vmem:[%s1 + $0xd0] sm:$0xff]
        %v414 = vld [vmem:[%s1 + $0xd8] sm:$0xff]
        %v415 = vld [vmem:[%s1 + $0xe0] sm:$0xff]
        %v416 = vld [vmem:[%s1 + $0xe8] sm:$0xff]
        %v417 = vld [vmem:[%s1 + $0xf0] sm:$0xff]
        %v418 = vld [vmem:[%s1 + $0xf8] sm:$0xff]
        %v419 = vld [vmem:[%s1 + $0x100] sm:$0xff]
        %v420 = vld [vmem:[%s1 + $0x108] sm:$0xff]
        %v421 = vld [vmem:[%s1 + $0x110] sm:$0xff]
        %v422 = vld [vmem:[%s1 + $0x118] sm:$0xff]
        %v423 = vld [vmem:[%s1 + $0x120] sm:$0xff]
        %v424 = vld [vmem:[%s1 + $0x128] sm:$0xff]
        %v425 = vld [vmem:[%s1 + $0x130] sm:$0xff]
        %v426 = vld [vmem:[%s1 + $0x138] sm:$0xff]
        %v427 = vld [vmem:[%s1 + $0x140] sm:$0xff]
        %v428 = vld [vmem:[%s1 + $0x148] sm:$0xff]
        %v429 = vld [vmem:[%s1 + $0x150] sm:$0xff]
        %v430 = vld [vmem:[%s1 + $0x158] sm:$0xff]
        %v431 = vld [vmem:[%s1 + $0x160] sm:$0xff]
        %v432 = vld [vmem:[%s1 + $0x168] sm:$0xff]
        %v433 = vld [vmem:[%s1 + $0x170] sm:$0xff]
        %v434 = vld [vmem:[%s1 + $0x178] sm:$0xff]
        %v435 = vld [vmem:[%s1 + $0x180] sm:$0xff]
        %v436 = vld [vmem:[%s1 + $0x188] sm:$0xff]
        %v437 = vld [vmem:[%s1 + $0x190] sm:$0xff]
        %v438 = vld [vmem:[%s1 + $0x198] sm:$0xff]
        %v439 = vld [vmem:[%s1 + $0x1a0] sm:$0xff]
        %v440 = vld [vmem:[%s1 + $0x1a8] sm:$0xff]
        %v441 = vld [vmem:[%s1 + $0x1b0] sm:$0xff]
        %v442 = vld [vmem:[%s1 + $0x1b8] sm:$0xff]
        %v443 = vld [vmem:[%s1 + $0x1c0] sm:$0xff]
        %v444 = vld [vmem:[%s1 + $0x1c8] sm:$0xff]
        %v445 = vld [vmem:[%s1 + $0x1d0] sm:$0xff]
        %v446 = vld [vmem:[%s1 + $0x1d8] sm:$0xff]
        %v447 = vld [vmem:[%s1 + $0x1e0] sm:$0xff]
        %v448 = vld [vmem:[%s1 + $0x1e8] sm:$0xff]
        %v449 = vld [vmem:[%s1 + $0x1f0] sm:$0xff]
        %v450 = vld [vmem:[%s1 + $0x1f8] sm:$0xff]
        %v451 = vld [vmem:[%s1 + $0x200] sm:$0xff]
        %v452 = vld [vmem:[%s1 + $0x208] sm:$0xff]
        %v453 = vld [vmem:[%s1 + $0x210] sm:$0xff]
        %v454 = vld [vmem:[%s1 + $0x218] sm:$0xff]
        %v455 = vld [vmem:[%s1 + $0x220] sm:$0xff]
        %v456 = vld [vmem:[%s1 + $0x228] sm:$0xff]
        %v457 = vld [vmem:[%s1 + $0x230] sm:$0xff]
        %v458 = vld [vmem:[%s1 + $0x238] sm:$0xff]
        %v459 = vld [vmem:[%s1 + $0x240] sm:$0xff]
        %v460 = vld [vmem:[%s1 + $0x248] sm:$0xff]
        %v461 = vld [vmem:[%s1 + $0x250] sm:$0xff]
        %v462 = vld [vmem:[%s1 + $0x258] sm:$0xff]
        %v463 = vld [vmem:[%s1 + $0x260] sm:$0xff]
        %v464 = vld [vmem:[%s1 + $0x268] sm:$0xff]
        %v465 = vld [vmem:[%s1 + $0x270] sm:$0xff]
        %v466 = vld [vmem:[%s1 + $0x278] sm:$0xff]
        %v467 = vld [vmem:[%s1 + $0x280] sm:$0xff]
        %v468 = vld [vmem:[%s1 + $0x288] sm:$0xff]
        %v469 = vld [vmem:[%s1 + $0x290] sm:$0xff]
        %v470 = vld [vmem:[%s1 + $0x298] sm:$0xff]
        %v471 = vld [vmem:[%s1 + $0x2a0] sm:$0xff]
        %v472 = vld [vmem:[%s1 + $0x2a8] sm:$0xff]
        %v473 = vld [vmem:[%s1 + $0x2b0] sm:$0xff]
        %v474 = vld [vmem:[%s1 + $0x2b8] sm:$0xff]
        %v475 = vld [vmem:[%s1 + $0x2c0] sm:$0xff]
        %v476 = vld [vmem:[%s1 + $0x2c8] sm:$0xff]
        %v477 = vld [vmem:[%s1 + $0x2d0] sm:$0xff]
        %v478 = vld [vmem:[%s1 + $0x2d8] sm:$0xff]
        %v479 = vld [vmem:[%s1 + $0x2e0] sm:$0xff]
        %v480 = vld [vmem:[%s1 + $0x2e8] sm:$0xff]
        %v481 = vld [vmem:[%s1 + $0x2f0] sm:$0xff]
        %v482 = vld [vmem:[%s1 + $0x2f8] sm:$0xff]
        %v483 = vld [vmem:[%s1 + $0x300] sm:$0xff]
        %v484 = vld [vmem:[%s1 + $0x308] sm:$0xff]
        %v485 = vld [vmem:[%s1 + $0x310] sm:$0xff]
        %v486 = vld [vmem:[%s1 + $0x318] sm:$0xff]
        %v487 = vld [vmem:[%s1 + $0x320] sm:$0xff]
        %v488 = vld [vmem:[%s1 + $0x328] sm:$0xff]
        %v489 = vld [vmem:[%s1 + $0x330] sm:$0xff]
        %v490 = vld [vmem:[%s1 + $0x338] sm:$0xff]
        %v491 = vld [vmem:[%s1 + $0x340] sm:$0xff]
        %v492 = vld [vmem:[%s1 + $0x348] sm:$0xff]
        %v493 = vld [vmem:[%s1 + $0x350] sm:$0xff]
        %v494 = vld [vmem:[%s1 + $0x358] sm:$0xff]
        %v495 = vld [vmem:[%s1 + $0x360] sm:$0xff]
        %v496 = vld [vmem:[%s1 + $0x368] sm:$0xff]
        %v497 = vld [vmem:[%s1 + $0x370] sm:$0xff]
        %v498 = vld [vmem:[%s1 + $0x378] sm:$0xff]
        %v499 = vld [vmem:[%s1 + $0x380] sm:$0xff]
        %v500 = vld [vmem:[%s1 + $0x388] sm:$0xff]
        %v501 = vld [vmem:[%s1 + $0x390] sm:$0xff]
        %v502 = vld [vmem:[%s1 + $0x398] sm:$0xff]
        %v503 = vld [vmem:[%s1 + $0x3a0] sm:$0xff]
        %v504 = vld [vmem:[%s1 + $0x3a8] sm:$0xff]
        %v505 = vld [vmem:[%s1 + $0x3b0] sm:$0xff]
        %v506 = vld [vmem:[%s1 + $0x3b8] sm:$0xff]
        %v507 = vld [vmem:[%s1 + $0x3c0] sm:$0xff]
        %v508 = vld [vmem:[%s1 + $0x3c8] sm:$0xff]
        %v509 = vld [vmem:[%s1 + $0x3d0] sm:$0xff]
        %v510 = vld [vmem:[%s1 + $0x3d8] sm:$0xff]
        %v511 = vld [vmem:[%s1 + $0x3e0] sm:$0xff]
        %v512 = vld [vmem:[%s1 + $0x3e8] sm:$0xff]
        %v513 = vld [vmem:[%s1 + $0x3f0] sm:$0xff]
        %v514 = vld [vmem:[%s1 + $0x3f8] sm:$0xff]
        %v515 = vld [vmem:[%s1 + $0x400] sm:$0xff]
        %v516 = vld [vmem:[%s1 + $0x408] sm:$0xff]
        %v517 = vld [vmem:[%s1 + $0x410] sm:$0xff]
        %v518 = vld [vmem:[%s1 + $0x418] sm:$0xff]
        %v519 = vld [vmem:[%s1 + $0x420] sm:$0xff]
        %v520 = vld [vmem:[%s1 + $0x428] sm:$0xff]
        %v521 = vld [vmem:[%s1 + $0x430] sm:$0xff]
        %v522 = vld [vmem:[%s1 + $0x438] sm:$0xff]
        %v523 = vld [vmem:[%s1 + $0x440] sm:$0xff]
        %v524 = vld [vmem:[%s1 + $0x448] sm:$0xff]
        %v525 = vld [vmem:[%s1 + $0x450] sm:$0xff]
        %v526 = vld [vmem:[%s1 + $0x458] sm:$0xff]
        %v527 = vld [vmem:[%s1 + $0x460] sm:$0xff]
        %v528 = vld [vmem:[%s1 + $0x468] sm:$0xff]
        %v529 = vld [vmem:[%s1 + $0x470] sm:$0xff]
        %v530 = vld [vmem:[%s1 + $0x478] sm:$0xff]
        %v531 = vld [vmem:[%s1 + $0x480] sm:$0xff]
        %v532 = vld [vmem:[%s1 + $0x488] sm:$0xff]
        %v533 = vld [vmem:[%s1 + $0x490] sm:$0xff]
        %v534 = vld [vmem:[%s1 + $0x498] sm:$0xff]
        %v535 = vld [vmem:[%s1 + $0x4a0] sm:$0xff]
        %v536 = vld [vmem:[%s1 + $0x4a8] sm:$0xff]
        %v537 = vld [vmem:[%s1 + $0x4b0] sm:$0xff]
        %v538 = vld [vmem:[%s1 + $0x4b8] sm:$0xff]
        %v539 = vld [vmem:[%s1 + $0x4c0] sm:$0xff]
        %v540 = vld [vmem:[%s1 + $0x4c8] sm:$0xff]
        %v541 = vld [vmem:[%s1 + $0x4d0] sm:$0xff]
        %v542 = vld [vmem:[%s1 + $0x4d8] sm:$0xff]
        %v543 = vld [vmem:[%s1 + $0x4e0] sm:$0xff]
        %v544 = vld [vmem:[%s1 + $0x4e8] sm:$0xff]
        %v545 = vld [vmem:[%s1 + $0x4f0] sm:$0xff]
        %v546 = vld [vmem:[%s1 + $0x4f8] sm:$0xff]
        %v547 = vld [vmem:[%s1 + $0x500] sm:$0xff]
        %v548 = vld [vmem:[%s1 + $0x508] sm:$0xff]
        %v549 = vld [vmem:[%s1 + $0x510] sm:$0xff]
        %v550 = vld [vmem:[%s1 + $0x518] sm:$0xff]
        %v551 = vld [vmem:[%s1 + $0x520] sm:$0xff]
        %v552 = vld [vmem:[%s1 + $0x528] sm:$0xff]
        %v553 = vld [vmem:[%s1 + $0x530] sm:$0xff]
        %v554 = vld [vmem:[%s1 + $0x538] sm:$0xff]
        %v555 = vld [vmem:[%s1 + $0x540] sm:$0xff]
        %v556 = vld [vmem:[%s1 + $0x548] sm:$0xff]
        %v557 = vld [vmem:[%s1 + $0x550] sm:$0xff]
        %v558 = vld [vmem:[%s1 + $0x558] sm:$0xff]
        %v559 = vld [vmem:[%s1 + $0x560] sm:$0xff]
        %v560 = vld [vmem:[%s1 + $0x568] sm:$0xff]
        %v561 = vld [vmem:[%s1 + $0x570] sm:$0xff]
        %v562 = vld [vmem:[%s1 + $0x578] sm:$0xff]
        %v563 = vld [vmem:[%s1 + $0x580] sm:$0xff]
        %v564 = vld [vmem:[%s1 + $0x588] sm:$0xff]
        %v565 = vld [vmem:[%s1 + $0x590] sm:$0xff]
        %v566 = vld [vmem:[%s1 + $0x598] sm:$0xff]
        %v567 = vld [vmem:[%s1 + $0x5a0] sm:$0xff]
        %v568 = vld [vmem:[%s1 + $0x5a8] sm:$0xff]
        %v569 = vld [vmem:[%s1 + $0x5b0] sm:$0xff]
        %v570 = vld [vmem:[%s1 + $0x5b8] sm:$0xff]
        %v571 = vld [vmem:[%s1 + $0x5c0] sm:$0xff]
        %v572 = vld [vmem:[%s1 + $0x5c8] sm:$0xff]
        %v573 = vld [vmem:[%s1 + $0x5d0] sm:$0xff]
        %v574 = vld [vmem:[%s1 + $0x5d8] sm:$0xff]
        %v575 = vld [vmem:[%s1 + $0x5e0] sm:$0xff]
        %v576 = vld [vmem:[%s1 + $0x5e8] sm:$0xff]
        %v577 = vld [vmem:[%s1 + $0x5f0] sm:$0xff]
        %v578 = vld [vmem:[%s1 + $0x5f8] sm:$0xff]
        %v579 = vld [vmem:[%s1 + $0x600] sm:$0xff]
        %v580 = vld [vmem:[%s1 + $0x608] sm:$0xff]
        %v581 = vld [vmem:[%s1 + $0x610] sm:$0xff]
        %v582 = vld [vmem:[%s1 + $0x618] sm:$0xff]
        %v583 = vld [vmem:[%s1 + $0x620] sm:$0xff]
        %v584 = vld [vmem:[%s1 + $0x628] sm:$0xff]
        %v585 = vld [vmem:[%s1 + $0x630] sm:$0xff]
        %v586 = vld [vmem:[%s1 + $0x638] sm:$0xff]
        %v587 = vld [vmem:[%s1 + $0x640] sm:$0xff]
        %v588 = vld [vmem:[%s1 + $0x648] sm:$0xff]
        %v589 = vld [vmem:[%s1 + $0x650] sm:$0xff]
        %v590 = vld [vmem:[%s1 + $0x658] sm:$0xff]
        %v591 = vld [vmem:[%s1 + $0x660] sm:$0xff]
        %v592 = vld [vmem:[%s1 + $0x668] sm:$0xff]
        %v593 = vld [vmem:[%s1 + $0x670] sm:$0xff]
        %v594 = vld [vmem:[%s1 + $0x678] sm:$0xff]
        %v595 = vld [vmem:[%s1 + $0x680] sm:$0xff]
        %v596 = vld [vmem:[%s1 + $0x688] sm:$0xff]
        %v597 = vld [vmem:[%s1 + $0x690] sm:$0xff]
        %v598 = vld [vmem:[%s1 + $0x698] sm:$0xff]
        %v599 = vld [vmem:[%s1 + $0x6a0] sm:$0xff]
        %v600 = vld [vmem:[%s1 + $0x6a8] sm:$0xff]
        %v601 = vld [vmem:[%s1 + $0x6b0] sm:$0xff]
        %v602 = vld [vmem:[%s1 + $0x6b8] sm:$0xff]
        %v603 = vld [vmem:[%s1 + $0x6c0] sm:$0xff]
        %v604 = vld [vmem:[%s1 + $0x6c8] sm:$0xff]
        %v605 = vld [vmem:[%s1 + $0x6d0] sm:$0xff]
        %v606 = vld [vmem:[%s1 + $0x6d8] sm:$0xff]
        %v607 = vld [vmem:[%s1 + $0x6e0] sm:$0xff]
        %v608 = vld [vmem:[%s1 + $0x6e8] sm:$0xff]
        %v609 = vld [vmem:[%s1 + $0x6f0] sm:$0xff]
        %v610 = vld [vmem:[%s1 + $0x6f8] sm:$0xff]
        %v611 = vld [vmem:[%s1 + $0x700] sm:$0xff]
        %v612 = vld [vmem:[%s1 + $0x708] sm:$0xff]
        %v613 = vld [vmem:[%s1 + $0x710] sm:$0xff]
        %v614 = vld [vmem:[%s1 + $0x718] sm:$0xff]
        %v615 = vld [vmem:[%s1 + $0x720] sm:$0xff]
        %v616 = vld [vmem:[%s1 + $0x728] sm:$0xff]
        %v617 = vld [vmem:[%s1 + $0x730] sm:$0xff]
        %v618 = vld [vmem:[%s1 + $0x738] sm:$0xff]
        %v619 = vld [vmem:[%s1 + $0x740] sm:$0xff]
        %v620 = vld [vmem:[%s1 + $0x748] sm:$0xff]
        %v621 = vld [vmem:[%s1 + $0x750] sm:$0xff]
        %v622 = vld [vmem:[%s1 + $0x758] sm:$0xff]
        %v623 = vld [vmem:[%s1 + $0x760] sm:$0xff]
        %v624 = vld [vmem:[%s1 + $0x768] sm:$0xff]
        %v625 = vld [vmem:[%s1 + $0x770] sm:$0xff]
        %v626 = vld [vmem:[%s1 + $0x778] sm:$0xff]
        %v627 = vld [vmem:[%s1 + $0x780] sm:$0xff]
        %v628 = vld [vmem:[%s1 + $0x788] sm:$0xff]
        %v629 = vld [vmem:[%s1 + $0x790] sm:$0xff]
        %v630 = vld [vmem:[%s1 + $0x798] sm:$0xff]
        %v631 = vld [vmem:[%s1 + $0x7a0] sm:$0xff]
        %v632 = vld [vmem:[%s1 + $0x7a8] sm:$0xff]
        %v633 = vld [vmem:[%s1 + $0x7b0] sm:$0xff]
        %v634 = vld [vmem:[%s1 + $0x7b8] sm:$0xff]
        %v635 = vld [vmem:[%s1 + $0x7c0] sm:$0xff]
        %v636 = vld [vmem:[%s1 + $0x7c8] sm:$0xff]
        %v637 = vld [vmem:[%s1 + $0x7d0] sm:$0xff]
        %v638 = vld [vmem:[%s1 + $0x7d8] sm:$0xff]
        %v639 = vld [vmem:[%s1 + $0x7e0] sm:$0xff]
        %v640 = vld [vmem:[%s1 + $0x7e8] sm:$0xff]
        %v641 = vld [vmem:[%s1 + $0x7f0] sm:$0xff]
        %v642 = vld [vmem:[%s1 + $0x7f8] sm:$0xff]
        %v643 = vld [vmem:[%s1 + $0x800] sm:$0xff]
        %v644 = vld [vmem:[%s1 + $0x808] sm:$0xff]
        %v645 = vld [vmem:[%s1 + $0x810] sm:$0xff]
        %v646 = vld [vmem:[%s1 + $0x818] sm:$0xff]
        %v647 = vld [vmem:[%s1 + $0x820] sm:$0xff]
        %v648 = vld [vmem:[%s1 + $0x828] sm:$0xff]
        %v649 = vld [vmem:[%s1 + $0x830] sm:$0xff]
        %v650 = vld [vmem:[%s1 + $0x838] sm:$0xff]
        %v651 = vld [vmem:[%s1 + $0x840] sm:$0xff]
        %v652 = vld [vmem:[%s1 + $0x848] sm:$0xff]
        %v653 = vld [vmem:[%s1 + $0x850] sm:$0xff]
        %v654 = vld [vmem:[%s1 + $0x858] sm:$0xff]
        %v655 = vld [vmem:[%s1 + $0x860] sm:$0xff]
        %v656 = vld [vmem:[%s1 + $0x868] sm:$0xff]
        %v657 = vld [vmem:[%s1 + $0x870] sm:$0xff]
        %v658 = vld [vmem:[%s1 + $0x878] sm:$0xff]
        %v659 = vld [vmem:[%s1 + $0x880] sm:$0xff]
        %v660 = vld [vmem:[%s1 + $0x888] sm:$0xff]
        %v661 = vld [vmem:[%s1 + $0x890] sm:$0xff]
        %v662 = vld [vmem:[%s1 + $0x898] sm:$0xff]
        %v663 = vld [vmem:[%s1 + $0x8a0] sm:$0xff]
        %v664 = vld [vmem:[%s1 + $0x8a8] sm:$0xff]
        %v665 = vld [vmem:[%s1 + $0x8b0] sm:$0xff]
        %v666 = vld [vmem:[%s1 + $0x8b8] sm:$0xff]
        %v667 = vld [vmem:[%s1 + $0x8c0] sm:$0xff]
        %v668 = vld [vmem:[%s1 + $0x8c8] sm:$0xff]
        %v669 = vld [vmem:[%s1 + $0x8d0] sm:$0xff]
        %v670 = vld [vmem:[%s1 + $0x8d8] sm:$0xff]
        %v671 = vld [vmem:[%s1 + $0x8e0] sm:$0xff]
        %v672 = vld [vmem:[%s1 + $0x8e8] sm:$0xff]
        %v673 = vld [vmem:[%s1 + $0x8f0] sm:$0xff]
        %v674 = vld [vmem:[%s1 + $0x8f8] sm:$0xff]
        %v675 = vld [vmem:[%s1 + $0x900] sm:$0xff]
        %v676 = vld [vmem:[%s1 + $0x908] sm:$0xff]
        %v677 = vld [vmem:[%s1 + $0x910] sm:$0xff]
        %v678 = vld [vmem:[%s1 + $0x918] sm:$0xff]
        %v679 = vld [vmem:[%s1 + $0x920] sm:$0xff]
        %v680 = vld [vmem:[%s1 + $0x928] sm:$0xff]
        %v681 = vld [vmem:[%s1 + $0x930] sm:$0xff]
        %v682 = vld [vmem:[%s1 + $0x938] sm:$0xff]
        %v683 = vld [vmem:[%s1 + $0x940] sm:$0xff]
        %v684 = vld [vmem:[%s1 + $0x948] sm:$0xff]
        %v685 = vld [vmem:[%s1 + $0x950] sm:$0xff]
        %v686 = vld [vmem:[%s1 + $0x958] sm:$0xff]
        %v687 = vld [vmem:[%s1 + $0x960] sm:$0xff]
        %v688 = vld [vmem:[%s1 + $0x968] sm:$0xff]
        %v689 = vld [vmem:[%s1 + $0x970] sm:$0xff]
        %v690 = vld [vmem:[%s1 + $0x978] sm:$0xff]
        %v691 = vld [vmem:[%s1 + $0x980] sm:$0xff]
        %v692 = vld [vmem:[%s1 + $0x988] sm:$0xff]
        %v693 = vld [vmem:[%s1 + $0x990] sm:$0xff]
        %v694 = vld [vmem:[%s1 + $0x998] sm:$0xff]
        %v695 = vld [vmem:[%s1 + $0x9a0] sm:$0xff]
        %v696 = vld [vmem:[%s1 + $0x9a8] sm:$0xff]
        %v697 = vld [vmem:[%s1 + $0x9b0] sm:$0xff]
        %v698 = vld [vmem:[%s1 + $0x9b8] sm:$0xff]
        %v699 = vld [vmem:[%s1 + $0x9c0] sm:$0xff]
        %v700 = vld [vmem:[%s1 + $0x9c8] sm:$0xff]
        %v701 = vld [vmem:[%s1 + $0x9d0] sm:$0xff]
        %v702 = vld [vmem:[%s1 + $0x9d8] sm:$0xff]
        %v703 = vld [vmem:[%s1 + $0x9e0] sm:$0xff]
        %v704 = vld [vmem:[%s1 + $0x9e8] sm:$0xff]
        %v705 = vld [vmem:[%s1 + $0x9f0] sm:$0xff]
        %v706 = vld [vmem:[%s1 + $0x9f8] sm:$0xff]
        %707 = vmatprep.subr.mxu0 %v538
        %708 = vmatpush1.msra.mxu0 %v537
        %709 = vmatprep.subr.mxu0 %v528
        %710 = vmatpush1.msra.mxu0 %v527
        %711 = vmatprep.subr.mxu0 %v518
        %712 = vmatpush1.msra.mxu0 %v517
        %713 = vmatprep.subr.mxu0 %v508
        %714 = vmatpush1.msra.mxu0 %v507
        %715 = vmatprep.subr.mxu0 %v498
        %716 = vmatpush1.msra.mxu0 %v497
        %717 = vmatprep.subr.mxu0 %v488
        %718 = vmatpush1.msra.mxu0 %v487
        %719 = vmatprep.subr.mxu0 %v478
        %720 = vmatpush1.msra.mxu0 %v477
        %721 = vmatprep.subr.mxu0 %v468
        %722 = vmatpush1.msra.mxu0 %v467
        %723 = vmatprep.subr.mxu0 %v458
        %724 = vmatpush1.msra.mxu0 %v457
        %725 = vmatprep.subr.mxu0 %v448
        %726 = vmatpush1.msra.mxu0 %v447
        %727 = vmatprep.subr.mxu0 %v438
        %728 = vmatpush1.msra.mxu0 %v437
        %729 = vmatprep.subr.mxu0 %v428
        %730 = vmatpush1.msra.mxu0 %v427
        %731 = vmatprep.subr.mxu0 %v418
        %732 = vmatpush1.msra.mxu0 %v417
        %733 = vmatprep.subr.mxu0 %v408
        %734 = vmatpush1.msra.mxu0 %v407
        %735 = vmatprep.subr.mxu0 %v398
        %736 = vmatpush1.msra.mxu0 %v397
        %737 = vmatprep.subr.mxu0 %v388
        %738 = vmatpush1.msra.mxu0 %v387
        %739 = vmatprep.subr.mxu0 %v698
        %740 = vmatpush2.msra.mxu0 %v697
        %741 = vmatprep.subr.mxu0 %v688
        %742 = vmatpush2.msra.mxu0 %v687
        %743 = vmatprep.subr.mxu0 %v678
        %744 = vmatpush2.msra.mxu0 %v677
        %745 = vmatprep.subr.mxu0 %v668
        %746 = vmatpush2.msra.mxu0 %v667
        %747 = vmatprep.subr.mxu0 %v658
        %748 = vmatpush2.msra.mxu0 %v657
        %749 = vmatprep.subr.mxu0 %v648
        %750 = vmatpush2.msra.mxu0 %v647
        %751 = vmatprep.subr.mxu0 %v638
        %752 = vmatpush2.msra.mxu0 %v637
        %753 = vmatprep.subr.mxu0 %v628
        %754 = vmatpush2.msra.mxu0 %v627
        %755 = vmatprep.subr.mxu0 %v618
        %756 = vmatpush2.msra.mxu0 %v617
        %757 = vmatprep.subr.mxu0 %v608
        %758 = vmatpush2.msra.mxu0 %v607
        %759 = vmatprep.subr.mxu0 %v598
        %760 = vmatpush2.msra.mxu0 %v597
        %761 = vmatprep.subr.mxu0 %v588
        %762 = vmatpush2.msra.mxu0 %v587
        %763 = vmatprep.subr.mxu0 %v578
        %764 = vmatpush2.msra.mxu0 %v577
        %765 = vmatprep.subr.mxu0 %v568
        %766 = vmatpush2.msra.mxu0 %v567
        %767 = vmatprep.subr.mxu0 %v558
        %768 = vmatpush2.msra.mxu0 %v557
        %769 = vmatprep.subr.mxu0 %v548
        %770 = vmatpush2.msra.mxu0 %v547
        %771 = vmatprep.mubr.f32.mxu0 %v386
        %772 = vmatmul.mubr.f32.gmra.mxu0 %v385
        %v773 = vpop.f32.mrf.mxu0
        %v774 = vadd.f32 0.0, %v773
        %v775 = vpop.f32.mrf.mxu0
        %v776 = vadd.f32 0.0, %v775
        %777 = vdwg.mxu0
        %778 = vmatprep.subr.mxu0 %v540
        %779 = vmatpush1.msra.mxu0 %v539
        %780 = vmatprep.subr.mxu0 %v530
        %781 = vmatpush1.msra.mxu0 %v529
        %782 = vmatprep.subr.mxu0 %v520
        %783 = vmatpush1.msra.mxu0 %v519
        %784 = vmatprep.subr.mxu0 %v510
        %785 = vmatpush1.msra.mxu0 %v509
        %786 = vmatprep.subr.mxu0 %v500
        %787 = vmatpush1.msra.mxu0 %v499
        %788 = vmatprep.subr.mxu0 %v490
        %789 = vmatpush1.msra.mxu0 %v489
        %790 = vmatprep.subr.mxu0 %v480
        %791 = vmatpush1.msra.mxu0 %v479
        %792 = vmatprep.subr.mxu0 %v470
        %793 = vmatpush1.msra.mxu0 %v469
        %794 = vmatprep.subr.mxu0 %v460
        %795 = vmatpush1.msra.mxu0 %v459
        %796 = vmatprep.subr.mxu0 %v450
        %797 = vmatpush1.msra.mxu0 %v449
        %798 = vmatprep.subr.mxu0 %v440
        %799 = vmatpush1.msra.mxu0 %v439
        %800 = vmatprep.subr.mxu0 %v430
        %801 = vmatpush1.msra.mxu0 %v429
        %802 = vmatprep.subr.mxu0 %v420
        %803 = vmatpush1.msra.mxu0 %v419
        %804 = vmatprep.subr.mxu0 %v410
        %805 = vmatpush1.msra.mxu0 %v409
        %806 = vmatprep.subr.mxu0 %v400
        %807 = vmatpush1.msra.mxu0 %v399
        %808 = vmatprep.subr.mxu0 %v390
        %809 = vmatpush1.msra.mxu0 %v389
        %810 = vmatprep.subr.mxu0 %v700
        %811 = vmatpush2.msra.mxu0 %v699
        %812 = vmatprep.subr.mxu0 %v690
        %813 = vmatpush2.msra.mxu0 %v689
        %814 = vmatprep.subr.mxu0 %v680
        %815 = vmatpush2.msra.mxu0 %v679
        %816 = vmatprep.subr.mxu0 %v670
        %817 = vmatpush2.msra.mxu0 %v669
        %818 = vmatprep.subr.mxu0 %v660
        %819 = vmatpush2.msra.mxu0 %v659
        %820 = vmatprep.subr.mxu0 %v650
        %821 = vmatpush2.msra.mxu0 %v649
        %822 = vmatprep.subr.mxu0 %v640
        %823 = vmatpush2.msra.mxu0 %v639
        %824 = vmatprep.subr.mxu0 %v630
        %825 = vmatpush2.msra.mxu0 %v629
        %826 = vmatprep.subr.mxu0 %v620
        %827 = vmatpush2.msra.mxu0 %v619
        %828 = vmatprep.subr.mxu0 %v610
        %829 = vmatpush2.msra.mxu0 %v609
        %830 = vmatprep.subr.mxu0 %v600
        %831 = vmatpush2.msra.mxu0 %v599
        %832 = vmatprep.subr.mxu0 %v590
        %833 = vmatpush2.msra.mxu0 %v589
        %834 = vmatprep.subr.mxu0 %v580
        %835 = vmatpush2.msra.mxu0 %v579
        %836 = vmatprep.subr.mxu0 %v570
        %837 = vmatpush2.msra.mxu0 %v569
        %838 = vmatprep.subr.mxu0 %v560
        %839 = vmatpush2.msra.mxu0 %v559
        %840 = vmatprep.subr.mxu0 %v550
        %841 = vmatpush2.msra.mxu0 %v549
        %842 = vmatprep.mubr.f32.mxu0 %v386
        %843 = vmatmul.mubr.f32.gmra.mxu0 %v385
        %v844 = vpop.f32.mrf.mxu0
        %v845 = vadd.f32 0.0, %v844
        %v846 = vpop.f32.mrf.mxu0
        %v847 = vadd.f32 0.0, %v846
        %848 = vdwg.mxu0
        %849 = vmatprep.subr.mxu0 %v542
        %850 = vmatpush1.msra.mxu0 %v541
        %851 = vmatprep.subr.mxu0 %v532
        %852 = vmatpush1.msra.mxu0 %v531
        %853 = vmatprep.subr.mxu0 %v522
        %854 = vmatpush1.msra.mxu0 %v521
        %855 = vmatprep.subr.mxu0 %v512
        %856 = vmatpush1.msra.mxu0 %v511
        %857 = vmatprep.subr.mxu0 %v502
        %858 = vmatpush1.msra.mxu0 %v501
        %859 = vmatprep.subr.mxu0 %v492
        %860 = vmatpush1.msra.mxu0 %v491
        %861 = vmatprep.subr.mxu0 %v482
        %862 = vmatpush1.msra.mxu0 %v481
        %863 = vmatprep.subr.mxu0 %v472
        %864 = vmatpush1.msra.mxu0 %v471
        %865 = vmatprep.subr.mxu0 %v462
        %866 = vmatpush1.msra.mxu0 %v461
        %867 = vmatprep.subr.mxu0 %v452
        %868 = vmatpush1.msra.mxu0 %v451
        %869 = vmatprep.subr.mxu0 %v442
        %870 = vmatpush1.msra.mxu0 %v441
        %871 = vmatprep.subr.mxu0 %v432
        %872 = vmatpush1.msra.mxu0 %v431
        %873 = vmatprep.subr.mxu0 %v422
        %874 = vmatpush1.msra.mxu0 %v421
        %875 = vmatprep.subr.mxu0 %v412
        %876 = vmatpush1.msra.mxu0 %v411
        %877 = vmatprep.subr.mxu0 %v402
        %878 = vmatpush1.msra.mxu0 %v401
        %879 = vmatprep.subr.mxu0 %v392
        %880 = vmatpush1.msra.mxu0 %v391
        %881 = vmatprep.subr.mxu0 %v702
        %882 = vmatpush2.msra.mxu0 %v701
        %883 = vmatprep.subr.mxu0 %v692
        %884 = vmatpush2.msra.mxu0 %v691
        %885 = vmatprep.subr.mxu0 %v682
        %886 = vmatpush2.msra.mxu0 %v681
        %887 = vmatprep.subr.mxu0 %v672
        %888 = vmatpush2.msra.mxu0 %v671
        %889 = vmatprep.subr.mxu0 %v662
        %890 = vmatpush2.msra.mxu0 %v661
        %891 = vmatprep.subr.mxu0 %v652
        %892 = vmatpush2.msra.mxu0 %v651
        %893 = vmatprep.subr.mxu0 %v642
        %894 = vmatpush2.msra.mxu0 %v641
        %895 = vmatprep.subr.mxu0 %v632
        %896 = vmatpush2.msra.mxu0 %v631
        %897 = vmatprep.subr.mxu0 %v622
        %898 = vmatpush2.msra.mxu0 %v621
        %899 = vmatprep.subr.mxu0 %v612
        %900 = vmatpush2.msra.mxu0 %v611
        %901 = vmatprep.subr.mxu0 %v602
        %902 = vmatpush2.msra.mxu0 %v601
        %903 = vmatprep.subr.mxu0 %v592
        %904 = vmatpush2.msra.mxu0 %v591
        %905 = vmatprep.subr.mxu0 %v582
        %906 = vmatpush2.msra.mxu0 %v581
        %907 = vmatprep.subr.mxu0 %v572
        %908 = vmatpush2.msra.mxu0 %v571
        %909 = vmatprep.subr.mxu0 %v562
        %910 = vmatpush2.msra.mxu0 %v561
        %911 = vmatprep.subr.mxu0 %v552
        %912 = vmatpush2.msra.mxu0 %v551
        %913 = vmatprep.mubr.f32.mxu0 %v386
        %914 = vmatmul.mubr.f32.gmra.mxu0 %v385
        %v915 = vpop.f32.mrf.mxu0
        %v916 = vadd.f32 0.0, %v915
        %v917 = vpop.f32.mrf.mxu0
        %v918 = vadd.f32 0.0, %v917
        %919 = vdwg.mxu0
        %920 = vmatprep.subr.mxu0 %v544
        %921 = vmatpush1.msra.mxu0 %v543
        %922 = vmatprep.subr.mxu0 %v534
        %923 = vmatpush1.msra.mxu0 %v533
        %924 = vmatprep.subr.mxu0 %v524
        %925 = vmatpush1.msra.mxu0 %v523
        %926 = vmatprep.subr.mxu0 %v514
        %927 = vmatpush1.msra.mxu0 %v513
        %928 = vmatprep.subr.mxu0 %v504
        %929 = vmatpush1.msra.mxu0 %v503
        %930 = vmatprep.subr.mxu0 %v494
        %931 = vmatpush1.msra.mxu0 %v493
        %932 = vmatprep.subr.mxu0 %v484
        %933 = vmatpush1.msra.mxu0 %v483
        %934 = vmatprep.subr.mxu0 %v474
        %935 = vmatpush1.msra.mxu0 %v473
        %936 = vmatprep.subr.mxu0 %v464
        %937 = vmatpush1.msra.mxu0 %v463
        %938 = vmatprep.subr.mxu0 %v454
        %939 = vmatpush1.msra.mxu0 %v453
        %940 = vmatprep.subr.mxu0 %v444
        %941 = vmatpush1.msra.mxu0 %v443
        %942 = vmatprep.subr.mxu0 %v434
        %943 = vmatpush1.msra.mxu0 %v433
        %944 = vmatprep.subr.mxu0 %v424
        %945 = vmatpush1.msra.mxu0 %v423
        %946 = vmatprep.subr.mxu0 %v414
        %947 = vmatpush1.msra.mxu0 %v413
        %948 = vmatprep.subr.mxu0 %v404
        %949 = vmatpush1.msra.mxu0 %v403
        %950 = vmatprep.subr.mxu0 %v394
        %951 = vmatpush1.msra.mxu0 %v393
        %952 = vmatprep.subr.mxu0 %v704
        %953 = vmatpush2.msra.mxu0 %v703
        %954 = vmatprep.subr.mxu0 %v694
        %955 = vmatpush2.msra.mxu0 %v693
        %956 = vmatprep.subr.mxu0 %v684
        %957 = vmatpush2.msra.mxu0 %v683
        %958 = vmatprep.subr.mxu0 %v674
        %959 = vmatpush2.msra.mxu0 %v673
        %960 = vmatprep.subr.mxu0 %v664
        %961 = vmatpush2.msra.mxu0 %v663
        %962 = vmatprep.subr.mxu0 %v654
        %963 = vmatpush2.msra.mxu0 %v653
        %964 = vmatprep.subr.mxu0 %v644
        %965 = vmatpush2.msra.mxu0 %v643
        %966 = vmatprep.subr.mxu0 %v634
        %967 = vmatpush2.msra.mxu0 %v633
        %968 = vmatprep.subr.mxu0 %v624
        %969 = vmatpush2.msra.mxu0 %v623
        %970 = vmatprep.subr.mxu0 %v614
        %971 = vmatpush2.msra.mxu0 %v613
        %972 = vmatprep.subr.mxu0 %v604
        %973 = vmatpush2.msra.mxu0 %v603
        %974 = vmatprep.subr.mxu0 %v594
        %975 = vmatpush2.msra.mxu0 %v593
        %976 = vmatprep.subr.mxu0 %v584
        %977 = vmatpush2.msra.mxu0 %v583
        %978 = vmatprep.subr.mxu0 %v574
        %979 = vmatpush2.msra.mxu0 %v573
        %980 = vmatprep.subr.mxu0 %v564
        %981 = vmatpush2.msra.mxu0 %v563
        %982 = vmatprep.subr.mxu0 %v554
        %983 = vmatpush2.msra.mxu0 %v553
        %984 = vmatprep.mubr.f32.mxu0 %v386
        %985 = vmatmul.mubr.f32.gmra.mxu0 %v385
        %v986 = vpop.f32.mrf.mxu0
        %v987 = vadd.f32 0.0, %v986
        %v988 = vpop.f32.mrf.mxu0
        %v989 = vadd.f32 0.0, %v988
        %990 = vdwg.mxu0
        %991 = vmatprep.subr.mxu0 %v546
        %992 = vmatpush1.msra.mxu0 %v545
        %993 = vmatprep.subr.mxu0 %v536
        %994 = vmatpush1.msra.mxu0 %v535
        %995 = vmatprep.subr.mxu0 %v526
        %996 = vmatpush1.msra.mxu0 %v525
        %997 = vmatprep.subr.mxu0 %v516
        %998 = vmatpush1.msra.mxu0 %v515
        %999 = vmatprep.subr.mxu0 %v506
        %1000 = vmatpush1.msra.mxu0 %v505
        %1001 = vmatprep.subr.mxu0 %v496
        %1002 = vmatpush1.msra.mxu0 %v495
        %1003 = vmatprep.subr.mxu0 %v486
        %1004 = vmatpush1.msra.mxu0 %v485
        %1005 = vmatprep.subr.mxu0 %v476
        %1006 = vmatpush1.msra.mxu0 %v475
        %1007 = vmatprep.subr.mxu0 %v466
        %1008 = vmatpush1.msra.mxu0 %v465
        %1009 = vmatprep.subr.mxu0 %v456
        %1010 = vmatpush1.msra.mxu0 %v455
        %1011 = vmatprep.subr.mxu0 %v446
        %1012 = vmatpush1.msra.mxu0 %v445
        %1013 = vmatprep.subr.mxu0 %v436
        %1014 = vmatpush1.msra.mxu0 %v435
        %1015 = vmatprep.subr.mxu0 %v426
        %1016 = vmatpush1.msra.mxu0 %v425
        %1017 = vmatprep.subr.mxu0 %v416
        %1018 = vmatpush1.msra.mxu0 %v415
        %1019 = vmatprep.subr.mxu0 %v406
        %1020 = vmatpush1.msra.mxu0 %v405
        %1021 = vmatprep.subr.mxu0 %v396
        %1022 = vmatpush1.msra.mxu0 %v395
        %1023 = vmatprep.subr.mxu0 %v706
        %1024 = vmatpush2.msra.mxu0 %v705
        %1025 = vmatprep.subr.mxu0 %v696
        %1026 = vmatpush2.msra.mxu0 %v695
        %1027 = vmatprep.subr.mxu0 %v686
        %1028 = vmatpush2.msra.mxu0 %v685
        %1029 = vmatprep.subr.mxu0 %v676
        %1030 = vmatpush2.msra.mxu0 %v675
        %1031 = vmatprep.subr.mxu0 %v666
        %1032 = vmatpush2.msra.mxu0 %v665
        %1033 = vmatprep.subr.mxu0 %v656
        %1034 = vmatpush2.msra.mxu0 %v655
        %1035 = vmatprep.subr.mxu0 %v646
        %1036 = vmatpush2.msra.mxu0 %v645
        %1037 = vmatprep.subr.mxu0 %v636
        %1038 = vmatpush2.msra.mxu0 %v635
        %1039 = vmatprep.subr.mxu0 %v626
        %1040 = vmatpush2.msra.mxu0 %v625
        %1041 = vmatprep.subr.mxu0 %v616
        %1042 = vmatpush2.msra.mxu0 %v615
        %1043 = vmatprep.subr.mxu0 %v606
        %1044 = vmatpush2.msra.mxu0 %v605
        %1045 = vmatprep.subr.mxu0 %v596
        %1046 = vmatpush2.msra.mxu0 %v595
        %1047 = vmatprep.subr.mxu0 %v586
        %1048 = vmatpush2.msra.mxu0 %v585
        %1049 = vmatprep.subr.mxu0 %v576
        %1050 = vmatpush2.msra.mxu0 %v575
        %1051 = vmatprep.subr.mxu0 %v566
        %1052 = vmatpush2.msra.mxu0 %v565
        %1053 = vmatprep.subr.mxu0 %v556
        %1054 = vmatpush2.msra.mxu0 %v555
        %1055 = vmatprep.mubr.f32.mxu0 %v386
        %1056 = vmatmul.mubr.f32.gmra.mxu0 %v385
        %v1057 = vpop.f32.mrf.mxu0
        %v1058 = vadd.f32 0.0, %v1057
        %v1059 = vpop.f32.mrf.mxu0
        %v1060 = vadd.f32 0.0, %v1059
        %1061 = vdwg.mxu0
        %1062 = vst [vmem:[#allocation2] sm:$0xff] %v774
        %1063 = vst [vmem:[#allocation2 + $0x8] sm:$0xff] %v776
        %1064 = vst [vmem:[#allocation2 + $0x10] sm:$0xff] %v845
        %1065 = vst [vmem:[#allocation2 + $0x18] sm:$0xff] %v847
        %1066 = vst [vmem:[#allocation2 + $0x20] sm:$0xff] %v916
        %1067 = vst [vmem:[#allocation2 + $0x28] sm:$0xff] %v918
        %1068 = vst [vmem:[#allocation2 + $0x30] sm:$0xff] %v987
        %1069 = vst [vmem:[#allocation2 + $0x38] sm:$0xff] %v989
        %1070 = vst [vmem:[#allocation2 + $0x40] sm:$0xff] %v1058
        %vm1071 = vcmask 588800
        %1072 = vst.msk [vmem:[#allocation2 + $0x48] sm:$0xff] %vm1071, %v1060
        %vm1073 = vcmask 556032
        %1074 = vst.msk [vmem:[#allocation3] sm:$0xff] %vm1073, 0.0
        %vm1075 = vcmask 588832
        %1076 = vst.msk [vmem:[#allocation3 + $0x48] sm:$0xff] %vm1075, 0.0
        %v1077 = vld [vmem:[%s10] sm:$0xff]
        %v1078 = vld [vmem:[%s10 + $0x8] sm:$0x1]
        %v1079 = vld [vmem:[%s2] sm:$0xff]
        %v1080 = vld [vmem:[#allocation2] sm:$0xff]
        %v1081 = vld [vmem:[#allocation2 + $0x8] sm:$0xff]
        %v1082 = vld [vmem:[#allocation2 + $0x10] sm:$0xff]
        %v1083 = vld [vmem:[#allocation2 + $0x18] sm:$0xff]
        %v1084 = vld [vmem:[#allocation2 + $0x20] sm:$0xff]
        %v1085 = vld [vmem:[#allocation2 + $0x28] sm:$0xff]
        %v1086 = vld [vmem:[#allocation2 + $0x30] sm:$0xff]
        %v1087 = vld [vmem:[#allocation2 + $0x38] sm:$0xff]
        %v1088 = vld [vmem:[#allocation2 + $0x40] sm:$0xff]
        %v1089 = vld [vmem:[#allocation2 + $0x48] sm:$0xff]
        %1099 = vrot.lane.b32.xlu0 %v1080, 127
        %v1100 = vpop.permute.xlu0 %1099
        %1101 = vrot.lane.b32.xlu0 %v1081, 127
        %v1102 = vpop.permute.xlu0 %1101
        %1103 = vrot.lane.b32.xlu0 %v1082, 127
        %v1104 = vpop.permute.xlu0 %1103
        %1105 = vrot.lane.b32.xlu0 %v1083, 127
        %v1106 = vpop.permute.xlu0 %1105
        %1107 = vrot.lane.b32.xlu0 %v1084, 127
        %v1108 = vpop.permute.xlu0 %1107
        %1109 = vrot.lane.b32.xlu0 %v1085, 127
        %v1110 = vpop.permute.xlu0 %1109
        %1111 = vrot.lane.b32.xlu0 %v1086, 127
        %v1112 = vpop.permute.xlu0 %1111
        %1113 = vrot.lane.b32.xlu0 %v1087, 127
        %v1114 = vpop.permute.xlu0 %1113
        %1115 = vrot.lane.b32.xlu0 %v1088, 127
        %v1116 = vpop.permute.xlu0 %1115
        %vm1117 = vcmask 1039360
        %v1118 = vsel %vm1117, %v1100, %v1102
        %v1119 = vsel %vm1117, %v1102, %v1104
        %v1120 = vsel %vm1117, %v1104, %v1106
        %v1121 = vsel %vm1117, %v1106, %v1108
        %v1122 = vsel %vm1117, %v1108, %v1110
        %v1123 = vsel %vm1117, %v1110, %v1112
        %v1124 = vsel %vm1117, %v1112, %v1114
        %v1125 = vsel %vm1117, %v1114, %v1116
        %1126 = vrot.lane.b32.xlu0 %v1080, 126
        %v1127 = vpop.permute.xlu0 %1126
        %1128 = vrot.lane.b32.xlu0 %v1081, 126
        %v1129 = vpop.permute.xlu0 %1128
        %1130 = vrot.lane.b32.xlu0 %v1082, 126
        %v1131 = vpop.permute.xlu0 %1130
        %1132 = vrot.lane.b32.xlu0 %v1083, 126
        %v1133 = vpop.permute.xlu0 %1132
        %1134 = vrot.lane.b32.xlu0 %v1084, 126
        %v1135 = vpop.permute.xlu0 %1134
        %1136 = vrot.lane.b32.xlu0 %v1085, 126
        %v1137 = vpop.permute.xlu0 %1136
        %1138 = vrot.lane.b32.xlu0 %v1086, 126
        %v1139 = vpop.permute.xlu0 %1138
        %1140 = vrot.lane.b32.xlu0 %v1087, 126
        %v1141 = vpop.permute.xlu0 %1140
        %1142 = vrot.lane.b32.xlu0 %v1088, 126
        %v1143 = vpop.permute.xlu0 %1142
        %vm1144 = vcmask 1031168
        %v1145 = vsel %vm1144, %v1127, %v1129
        %v1146 = vsel %vm1144, %v1129, %v1131
        %v1147 = vsel %vm1144, %v1131, %v1133
        %v1148 = vsel %vm1144, %v1133, %v1135
        %v1149 = vsel %vm1144, %v1135, %v1137
        %v1150 = vsel %vm1144, %v1137, %v1139
        %v1151 = vsel %vm1144, %v1139, %v1141
        %v1152 = vsel %vm1144, %v1141, %v1143
        %1154 = vrot.lane.b32.xlu0 %v1080, 94
        %v1155 = vpop.permute.xlu0 %1154
        %1156 = vrot.lane.b32.xlu0 %v1081, 94
        %v1157 = vpop.permute.xlu0 %1156
        %1158 = vrot.lane.b32.xlu0 %v1082, 94
        %v1159 = vpop.permute.xlu0 %1158
        %1160 = vrot.lane.b32.xlu0 %v1083, 94
        %v1161 = vpop.permute.xlu0 %1160
        %1162 = vrot.lane.b32.xlu0 %v1084, 94
        %v1163 = vpop.permute.xlu0 %1162
        %1164 = vrot.lane.b32.xlu0 %v1085, 94
        %v1165 = vpop.permute.xlu0 %1164
        %1166 = vrot.lane.b32.xlu0 %v1086, 94
        %v1167 = vpop.permute.xlu0 %1166
        %1168 = vrot.lane.b32.xlu0 %v1087, 94
        %v1169 = vpop.permute.xlu0 %1168
        %1170 = vrot.lane.b32.xlu0 %v1088, 94
        %v1171 = vpop.permute.xlu0 %1170
        %1172 = vrot.lane.b32.xlu0 %v1089, 94
        %v1173 = vpop.permute.xlu0 %1172
        %vm1174 = vcmask 769024
        %v1175 = vsel %vm1174, %v1155, %v1157
        %v1176 = vsel %vm1174, %v1157, %v1159
        %v1177 = vsel %vm1174, %v1159, %v1161
        %v1178 = vsel %vm1174, %v1161, %v1163
        %v1179 = vsel %vm1174, %v1163, %v1165
        %v1180 = vsel %vm1174, %v1165, %v1167
        %v1181 = vsel %vm1174, %v1167, %v1169
        %v1182 = vsel %vm1174, %v1169, %v1171
        %v1183 = vsel %vm1174, %v1171, %v1173
        %1184 = vrot.lane.b32.xlu0 %v1080, 93
        %v1185 = vpop.permute.xlu0 %1184
        %1186 = vrot.lane.b32.xlu0 %v1081, 93
        %v1187 = vpop.permute.xlu0 %1186
        %1188 = vrot.lane.b32.xlu0 %v1082, 93
        %v1189 = vpop.permute.xlu0 %1188
        %1190 = vrot.lane.b32.xlu0 %v1083, 93
        %v1191 = vpop.permute.xlu0 %1190
        %1192 = vrot.lane.b32.xlu0 %v1084, 93
        %v1193 = vpop.permute.xlu0 %1192
        %1194 = vrot.lane.b32.xlu0 %v1085, 93
        %v1195 = vpop.permute.xlu0 %1194
        %1196 = vrot.lane.b32.xlu0 %v1086, 93
        %v1197 = vpop.permute.xlu0 %1196
        %1198 = vrot.lane.b32.xlu0 %v1087, 93
        %v1199 = vpop.permute.xlu0 %1198
        %1200 = vrot.lane.b32.xlu0 %v1088, 93
        %v1201 = vpop.permute.xlu0 %1200
        %1202 = vrot.lane.b32.xlu0 %v1089, 93
        %v1203 = vpop.permute.xlu0 %1202
        %vm1204 = vcmask 760832
        %v1205 = vsel %vm1204, %v1185, %v1187
        %v1206 = vsel %vm1204, %v1187, %v1189
        %v1207 = vsel %vm1204, %v1189, %v1191
        %v1208 = vsel %vm1204, %v1191, %v1193
        %v1209 = vsel %vm1204, %v1193, %v1195
        %v1210 = vsel %vm1204, %v1195, %v1197
        %v1211 = vsel %vm1204, %v1197, %v1199
        %v1212 = vsel %vm1204, %v1199, %v1201
        %v1213 = vsel %vm1204, %v1201, %v1203
        %1214 = vrot.lane.b32.xlu0 %v1080, 92
        %v1215 = vpop.permute.xlu0 %1214
        %1216 = vrot.lane.b32.xlu0 %v1081, 92
        %v1217 = vpop.permute.xlu0 %1216
        %1218 = vrot.lane.b32.xlu0 %v1082, 92
        %v1219 = vpop.permute.xlu0 %1218
        %1220 = vrot.lane.b32.xlu0 %v1083, 92
        %v1221 = vpop.permute.xlu0 %1220
        %1222 = vrot.lane.b32.xlu0 %v1084, 92
        %v1223 = vpop.permute.xlu0 %1222
        %1224 = vrot.lane.b32.xlu0 %v1085, 92
        %v1225 = vpop.permute.xlu0 %1224
        %1226 = vrot.lane.b32.xlu0 %v1086, 92
        %v1227 = vpop.permute.xlu0 %1226
        %1228 = vrot.lane.b32.xlu0 %v1087, 92
        %v1229 = vpop.permute.xlu0 %1228
        %1230 = vrot.lane.b32.xlu0 %v1088, 92
        %v1231 = vpop.permute.xlu0 %1230
        %1232 = vrot.lane.b32.xlu0 %v1089, 92
        %v1233 = vpop.permute.xlu0 %1232
        %vm1234 = vcmask 752640
        %v1235 = vsel %vm1234, %v1215, %v1217
        %v1236 = vsel %vm1234, %v1217, %v1219
        %v1237 = vsel %vm1234, %v1219, %v1221
        %v1238 = vsel %vm1234, %v1221, %v1223
        %v1239 = vsel %vm1234, %v1223, %v1225
        %v1240 = vsel %vm1234, %v1225, %v1227
        %v1241 = vsel %vm1234, %v1227, %v1229
        %v1242 = vsel %vm1234, %v1229, %v1231
        %v1243 = vsel %vm1234, %v1231, %v1233
        %1244 = vrot.lane.b32.xlu0 %v1080, 60
        %v1245 = vpop.permute.xlu0 %1244
        %1246 = vrot.lane.b32.xlu0 %v1081, 60
        %v1247 = vpop.permute.xlu0 %1246
        %1248 = vrot.lane.b32.xlu0 %v1082, 60
        %v1249 = vpop.permute.xlu0 %1248
        %1250 = vrot.lane.b32.xlu0 %v1083, 60
        %v1251 = vpop.permute.xlu0 %1250
        %1252 = vrot.lane.b32.xlu0 %v1084, 60
        %v1253 = vpop.permute.xlu0 %1252
        %1254 = vrot.lane.b32.xlu0 %v1085, 60
        %v1255 = vpop.permute.xlu0 %1254
        %1256 = vrot.lane.b32.xlu0 %v1086, 60
        %v1257 = vpop.permute.xlu0 %1256
        %1258 = vrot.lane.b32.xlu0 %v1087, 60
        %v1259 = vpop.permute.xlu0 %1258
        %1260 = vrot.lane.b32.xlu0 %v1088, 60
        %v1261 = vpop.permute.xlu0 %1260
        %1262 = vrot.lane.b32.xlu0 %v1089, 60
        %v1263 = vpop.permute.xlu0 %1262
        %vm1264 = vcmask 490496
        %v1265 = vsel %vm1264, %v1245, %v1247
        %v1266 = vsel %vm1264, %v1247, %v1249
        %v1267 = vsel %vm1264, %v1249, %v1251
        %v1268 = vsel %vm1264, %v1251, %v1253
        %v1269 = vsel %vm1264, %v1253, %v1255
        %v1270 = vsel %vm1264, %v1255, %v1257
        %v1271 = vsel %vm1264, %v1257, %v1259
        %v1272 = vsel %vm1264, %v1259, %v1261
        %v1273 = vsel %vm1264, %v1261, %v1263
        %1274 = vrot.lane.b32.xlu0 %v1080, 59
        %v1275 = vpop.permute.xlu0 %1274
        %1276 = vrot.lane.b32.xlu0 %v1081, 59
        %v1277 = vpop.permute.xlu0 %1276
        %1278 = vrot.lane.b32.xlu0 %v1082, 59
        %v1279 = vpop.permute.xlu0 %1278
        %1280 = vrot.lane.b32.xlu0 %v1083, 59
        %v1281 = vpop.permute.xlu0 %1280
        %1282 = vrot.lane.b32.xlu0 %v1084, 59
        %v1283 = vpop.permute.xlu0 %1282
        %1284 = vrot.lane.b32.xlu0 %v1085, 59
        %v1285 = vpop.permute.xlu0 %1284
        %1286 = vrot.lane.b32.xlu0 %v1086, 59
        %v1287 = vpop.permute.xlu0 %1286
        %1288 = vrot.lane.b32.xlu0 %v1087, 59
        %v1289 = vpop.permute.xlu0 %1288
        %1290 = vrot.lane.b32.xlu0 %v1088, 59
        %v1291 = vpop.permute.xlu0 %1290
        %1292 = vrot.lane.b32.xlu0 %v1089, 59
        %v1293 = vpop.permute.xlu0 %1292
        %vm1294 = vcmask 482304
        %v1295 = vsel %vm1294, %v1275, %v1277
        %v1296 = vsel %vm1294, %v1277, %v1279
        %v1297 = vsel %vm1294, %v1279, %v1281
        %v1298 = vsel %vm1294, %v1281, %v1283
        %v1299 = vsel %vm1294, %v1283, %v1285
        %v1300 = vsel %vm1294, %v1285, %v1287
        %v1301 = vsel %vm1294, %v1287, %v1289
        %v1302 = vsel %vm1294, %v1289, %v1291
        %v1303 = vsel %vm1294, %v1291, %v1293
        %1304 = vrot.lane.b32.xlu0 %v1080, 58
        %v1305 = vpop.permute.xlu0 %1304
        %1306 = vrot.lane.b32.xlu0 %v1081, 58
        %v1307 = vpop.permute.xlu0 %1306
        %1308 = vrot.lane.b32.xlu0 %v1082, 58
        %v1309 = vpop.permute.xlu0 %1308
        %1310 = vrot.lane.b32.xlu0 %v1083, 58
        %v1311 = vpop.permute.xlu0 %1310
        %1312 = vrot.lane.b32.xlu0 %v1084, 58
        %v1313 = vpop.permute.xlu0 %1312
        %1314 = vrot.lane.b32.xlu0 %v1085, 58
        %v1315 = vpop.permute.xlu0 %1314
        %1316 = vrot.lane.b32.xlu0 %v1086, 58
        %v1317 = vpop.permute.xlu0 %1316
        %1318 = vrot.lane.b32.xlu0 %v1087, 58
        %v1319 = vpop.permute.xlu0 %1318
        %1320 = vrot.lane.b32.xlu0 %v1088, 58
        %v1321 = vpop.permute.xlu0 %1320
        %1322 = vrot.lane.b32.xlu0 %v1089, 58
        %v1323 = vpop.permute.xlu0 %1322
        %vm1324 = vcmask 474112
        %v1325 = vsel %vm1324, %v1305, %v1307
        %v1326 = vsel %vm1324, %v1307, %v1309
        %v1327 = vsel %vm1324, %v1309, %v1311
        %v1328 = vsel %vm1324, %v1311, %v1313
        %v1329 = vsel %vm1324, %v1313, %v1315
        %v1330 = vsel %vm1324, %v1315, %v1317
        %v1331 = vsel %vm1324, %v1317, %v1319
        %v1332 = vsel %vm1324, %v1319, %v1321
        %v1333 = vsel %vm1324, %v1321, %v1323
        %v1334 = vld [vmem:[%s3] sm:$0xff]
        %1336 = vset.pattern.permute.xlu0 0
        %1337 = vperm.xlu0 %1336, %v1334
        %v1338 = vpop.permute.xlu0 %1337
        %1340 = vrot.lane.b32.xlu0 %v1080, 95
        %v1341 = vpop.permute.xlu0 %1340
        %1342 = vrot.lane.b32.xlu0 %v1081, 95
        %v1343 = vpop.permute.xlu0 %1342
        %1344 = vrot.lane.b32.xlu0 %v1082, 95
        %v1345 = vpop.permute.xlu0 %1344
        %1346 = vrot.lane.b32.xlu0 %v1083, 95
        %v1347 = vpop.permute.xlu0 %1346
        %1348 = vrot.lane.b32.xlu0 %v1084, 95
        %v1349 = vpop.permute.xlu0 %1348
        %1350 = vrot.lane.b32.xlu0 %v1085, 95
        %v1351 = vpop.permute.xlu0 %1350
        %1352 = vrot.lane.b32.xlu0 %v1086, 95
        %v1353 = vpop.permute.xlu0 %1352
        %1354 = vrot.lane.b32.xlu0 %v1087, 95
        %v1355 = vpop.permute.xlu0 %1354
        %1356 = vrot.lane.b32.xlu0 %v1088, 95
        %v1357 = vpop.permute.xlu0 %1356
        %1358 = vrot.lane.b32.xlu0 %v1118, 95
        %v1359 = vpop.permute.xlu0 %1358
        %1360 = vrot.lane.b32.xlu0 %v1119, 95
        %v1361 = vpop.permute.xlu0 %1360
        %1362 = vrot.lane.b32.xlu0 %v1120, 95
        %v1363 = vpop.permute.xlu0 %1362
        %1364 = vrot.lane.b32.xlu0 %v1121, 95
        %v1365 = vpop.permute.xlu0 %1364
        %1366 = vrot.lane.b32.xlu0 %v1122, 95
        %v1367 = vpop.permute.xlu0 %1366
        %1368 = vrot.lane.b32.xlu0 %v1123, 95
        %v1369 = vpop.permute.xlu0 %1368
        %1370 = vrot.lane.b32.xlu0 %v1124, 95
        %v1371 = vpop.permute.xlu0 %1370
        %1372 = vrot.lane.b32.xlu0 %v1125, 95
        %v1373 = vpop.permute.xlu0 %1372
        %1374 = vrot.lane.b32.xlu0 %v1116, 95
        %v1375 = vpop.permute.xlu0 %1374
        %1376 = vrot.lane.b32.xlu0 %v1145, 95
        %v1377 = vpop.permute.xlu0 %1376
        %1378 = vrot.lane.b32.xlu0 %v1146, 95
        %v1379 = vpop.permute.xlu0 %1378
        %1380 = vrot.lane.b32.xlu0 %v1147, 95
        %v1381 = vpop.permute.xlu0 %1380
        %1382 = vrot.lane.b32.xlu0 %v1148, 95
        %v1383 = vpop.permute.xlu0 %1382
        %1384 = vrot.lane.b32.xlu0 %v1149, 95
        %v1385 = vpop.permute.xlu0 %1384
        %1386 = vrot.lane.b32.xlu0 %v1150, 95
        %v1387 = vpop.permute.xlu0 %1386
        %1388 = vrot.lane.b32.xlu0 %v1151, 95
        %v1389 = vpop.permute.xlu0 %1388
        %1390 = vrot.lane.b32.xlu0 %v1152, 95
        %v1391 = vpop.permute.xlu0 %1390
        %1392 = vrot.lane.b32.xlu0 %v1143, 95
        %v1393 = vpop.permute.xlu0 %1392
        %1394 = vrot.lane.b32.xlu0 %v1175, 95
        %v1395 = vpop.permute.xlu0 %1394
        %1396 = vrot.lane.b32.xlu0 %v1176, 95
        %v1397 = vpop.permute.xlu0 %1396
        %1398 = vrot.lane.b32.xlu0 %v1177, 95
        %v1399 = vpop.permute.xlu0 %1398
        %1400 = vrot.lane.b32.xlu0 %v1178, 95
        %v1401 = vpop.permute.xlu0 %1400
        %1402 = vrot.lane.b32.xlu0 %v1179, 95
        %v1403 = vpop.permute.xlu0 %1402
        %1404 = vrot.lane.b32.xlu0 %v1180, 95
        %v1405 = vpop.permute.xlu0 %1404
        %1406 = vrot.lane.b32.xlu0 %v1181, 95
        %v1407 = vpop.permute.xlu0 %1406
        %1408 = vrot.lane.b32.xlu0 %v1182, 95
        %v1409 = vpop.permute.xlu0 %1408
        %1410 = vrot.lane.b32.xlu0 %v1183, 95
        %v1411 = vpop.permute.xlu0 %1410
        %1412 = vrot.lane.b32.xlu0 %v1205, 95
        %v1413 = vpop.permute.xlu0 %1412
        %1414 = vrot.lane.b32.xlu0 %v1206, 95
        %v1415 = vpop.permute.xlu0 %1414
        %1416 = vrot.lane.b32.xlu0 %v1207, 95
        %v1417 = vpop.permute.xlu0 %1416
        %1418 = vrot.lane.b32.xlu0 %v1208, 95
        %v1419 = vpop.permute.xlu0 %1418
        %1420 = vrot.lane.b32.xlu0 %v1209, 95
        %v1421 = vpop.permute.xlu0 %1420
        %1422 = vrot.lane.b32.xlu0 %v1210, 95
        %v1423 = vpop.permute.xlu0 %1422
        %1424 = vrot.lane.b32.xlu0 %v1211, 95
        %v1425 = vpop.permute.xlu0 %1424
        %1426 = vrot.lane.b32.xlu0 %v1212, 95
        %v1427 = vpop.permute.xlu0 %1426
        %1428 = vrot.lane.b32.xlu0 %v1213, 95
        %v1429 = vpop.permute.xlu0 %1428
        %1430 = vrot.lane.b32.xlu0 %v1235, 95
        %v1431 = vpop.permute.xlu0 %1430
        %1432 = vrot.lane.b32.xlu0 %v1236, 95
        %v1433 = vpop.permute.xlu0 %1432
        %1434 = vrot.lane.b32.xlu0 %v1237, 95
        %v1435 = vpop.permute.xlu0 %1434
        %1436 = vrot.lane.b32.xlu0 %v1238, 95
        %v1437 = vpop.permute.xlu0 %1436
        %1438 = vrot.lane.b32.xlu0 %v1239, 95
        %v1439 = vpop.permute.xlu0 %1438
        %1440 = vrot.lane.b32.xlu0 %v1240, 95
        %v1441 = vpop.permute.xlu0 %1440
        %1442 = vrot.lane.b32.xlu0 %v1241, 95
        %v1443 = vpop.permute.xlu0 %1442
        %1444 = vrot.lane.b32.xlu0 %v1242, 95
        %v1445 = vpop.permute.xlu0 %1444
        %1446 = vrot.lane.b32.xlu0 %v1243, 95
        %v1447 = vpop.permute.xlu0 %1446
        %1448 = vrot.lane.b32.xlu0 %v1265, 95
        %v1449 = vpop.permute.xlu0 %1448
        %1450 = vrot.lane.b32.xlu0 %v1266, 95
        %v1451 = vpop.permute.xlu0 %1450
        %1452 = vrot.lane.b32.xlu0 %v1267, 95
        %v1453 = vpop.permute.xlu0 %1452
        %1454 = vrot.lane.b32.xlu0 %v1268, 95
        %v1455 = vpop.permute.xlu0 %1454
        %1456 = vrot.lane.b32.xlu0 %v1269, 95
        %v1457 = vpop.permute.xlu0 %1456
        %1458 = vrot.lane.b32.xlu0 %v1270, 95
        %v1459 = vpop.permute.xlu0 %1458
        %1460 = vrot.lane.b32.xlu0 %v1271, 95
        %v1461 = vpop.permute.xlu0 %1460
        %1462 = vrot.lane.b32.xlu0 %v1272, 95
        %v1463 = vpop.permute.xlu0 %1462
        %1464 = vrot.lane.b32.xlu0 %v1273, 95
        %v1465 = vpop.permute.xlu0 %1464
        %1466 = vrot.lane.b32.xlu0 %v1295, 95
        %v1467 = vpop.permute.xlu0 %1466
        %1468 = vrot.lane.b32.xlu0 %v1296, 95
        %v1469 = vpop.permute.xlu0 %1468
        %1470 = vrot.lane.b32.xlu0 %v1297, 95
        %v1471 = vpop.permute.xlu0 %1470
        %1472 = vrot.lane.b32.xlu0 %v1298, 95
        %v1473 = vpop.permute.xlu0 %1472
        %1474 = vrot.lane.b32.xlu0 %v1299, 95
        %v1475 = vpop.permute.xlu0 %1474
        %1476 = vrot.lane.b32.xlu0 %v1300, 95
        %v1477 = vpop.permute.xlu0 %1476
        %1478 = vrot.lane.b32.xlu0 %v1301, 95
        %v1479 = vpop.permute.xlu0 %1478
        %1480 = vrot.lane.b32.xlu0 %v1302, 95
        %v1481 = vpop.permute.xlu0 %1480
        %1482 = vrot.lane.b32.xlu0 %v1303, 95
        %v1483 = vpop.permute.xlu0 %1482
        %1484 = vrot.lane.b32.xlu0 %v1325, 95
        %v1485 = vpop.permute.xlu0 %1484
        %1486 = vrot.lane.b32.xlu0 %v1326, 95
        %v1487 = vpop.permute.xlu0 %1486
        %1488 = vrot.lane.b32.xlu0 %v1327, 95
        %v1489 = vpop.permute.xlu0 %1488
        %1490 = vrot.lane.b32.xlu0 %v1328, 95
        %v1491 = vpop.permute.xlu0 %1490
        %1492 = vrot.lane.b32.xlu0 %v1329, 95
        %v1493 = vpop.permute.xlu0 %1492
        %1494 = vrot.lane.b32.xlu0 %v1330, 95
        %v1495 = vpop.permute.xlu0 %1494
        %1496 = vrot.lane.b32.xlu0 %v1331, 95
        %v1497 = vpop.permute.xlu0 %1496
        %1498 = vrot.lane.b32.xlu0 %v1332, 95
        %v1499 = vpop.permute.xlu0 %1498
        %1500 = vrot.lane.b32.xlu0 %v1333, 95
        %v1501 = vpop.permute.xlu0 %1500
        %vm1502 = vcmask 777216
        %v1503 = vsel %vm1502, %v1341, %v1343
        %v1504 = vsel %vm1502, %v1343, %v1345
        %v1505 = vsel %vm1502, %v1345, %v1347
        %v1506 = vsel %vm1502, %v1347, %v1349
        %v1507 = vsel %vm1502, %v1349, %v1351
        %v1508 = vsel %vm1502, %v1351, %v1353
        %v1509 = vsel %vm1502, %v1353, %v1355
        %v1510 = vsel %vm1502, %v1355, %v1357
        %v1511 = vsel %vm1502, %v1359, %v1361
        %v1512 = vsel %vm1502, %v1361, %v1363
        %v1513 = vsel %vm1502, %v1363, %v1365
        %v1514 = vsel %vm1502, %v1365, %v1367
        %v1515 = vsel %vm1502, %v1367, %v1369
        %v1516 = vsel %vm1502, %v1369, %v1371
        %v1517 = vsel %vm1502, %v1371, %v1373
        %v1518 = vsel %vm1502, %v1373, %v1375
        %v1519 = vsel %vm1502, %v1377, %v1379
        %v1520 = vsel %vm1502, %v1379, %v1381
        %v1521 = vsel %vm1502, %v1381, %v1383
        %v1522 = vsel %vm1502, %v1383, %v1385
        %v1523 = vsel %vm1502, %v1385, %v1387
        %v1524 = vsel %vm1502, %v1387, %v1389
        %v1525 = vsel %vm1502, %v1389, %v1391
        %v1526 = vsel %vm1502, %v1391, %v1393
        %v1527 = vsel %vm1502, %v1395, %v1397
        %v1528 = vsel %vm1502, %v1397, %v1399
        %v1529 = vsel %vm1502, %v1399, %v1401
        %v1530 = vsel %vm1502, %v1401, %v1403
        %v1531 = vsel %vm1502, %v1403, %v1405
        %v1532 = vsel %vm1502, %v1405, %v1407
        %v1533 = vsel %vm1502, %v1407, %v1409
        %v1534 = vsel %vm1502, %v1409, %v1411
        %v1535 = vsel %vm1502, %v1413, %v1415
        %v1536 = vsel %vm1502, %v1415, %v1417
        %v1537 = vsel %vm1502, %v1417, %v1419
        %v1538 = vsel %vm1502, %v1419, %v1421
        %v1539 = vsel %vm1502, %v1421, %v1423
        %v1540 = vsel %vm1502, %v1423, %v1425
        %v1541 = vsel %vm1502, %v1425, %v1427
        %v1542 = vsel %vm1502, %v1427, %v1429
        %v1543 = vsel %vm1502, %v1431, %v1433
        %v1544 = vsel %vm1502, %v1433, %v1435
        %v1545 = vsel %vm1502, %v1435, %v1437
        %v1546 = vsel %vm1502, %v1437, %v1439
        %v1547 = vsel %vm1502, %v1439, %v1441
        %v1548 = vsel %vm1502, %v1441, %v1443
        %v1549 = vsel %vm1502, %v1443, %v1445
        %v1550 = vsel %vm1502, %v1445, %v1447
        %v1551 = vsel %vm1502, %v1449, %v1451
        %v1552 = vsel %vm1502, %v1451, %v1453
        %v1553 = vsel %vm1502, %v1453, %v1455
        %v1554 = vsel %vm1502, %v1455, %v1457
        %v1555 = vsel %vm1502, %v1457, %v1459
        %v1556 = vsel %vm1502, %v1459, %v1461
        %v1557 = vsel %vm1502, %v1461, %v1463
        %v1558 = vsel %vm1502, %v1463, %v1465
        %v1559 = vsel %vm1502, %v1467, %v1469
        %v1560 = vsel %vm1502, %v1469, %v1471
        %v1561 = vsel %vm1502, %v1471, %v1473
        %v1562 = vsel %vm1502, %v1473, %v1475
        %v1563 = vsel %vm1502, %v1475, %v1477
        %v1564 = vsel %vm1502, %v1477, %v1479
        %v1565 = vsel %vm1502, %v1479, %v1481
        %v1566 = vsel %vm1502, %v1481, %v1483
        %v1567 = vsel %vm1502, %v1485, %v1487
        %v1568 = vsel %vm1502, %v1487, %v1489
        %v1569 = vsel %vm1502, %v1489, %v1491
        %v1570 = vsel %vm1502, %v1491, %v1493
        %v1571 = vsel %vm1502, %v1493, %v1495
        %v1572 = vsel %vm1502, %v1495, %v1497
        %v1573 = vsel %vm1502, %v1497, %v1499
        %v1574 = vsel %vm1502, %v1499, %v1501
        %v1657 = vsel %vm1071, %v1079, 0
        %1659 = vmatprep.subr.mxu0 0.0
        %1660 = vmatpush1.msra.mxu0 0.0
        %1661 = vmatprep.subr.mxu0 0.0
        %1662 = vmatpush1.msra.mxu0 0.0
        %1663 = vmatprep.subr.mxu0 0.0
        %1664 = vmatpush1.msra.mxu0 0.0
        %1665 = vmatprep.subr.mxu0 0.0
        %1666 = vmatpush1.msra.mxu0 0.0
        %1667 = vmatprep.subr.mxu0 0.0
        %1668 = vmatpush1.msra.mxu0 0.0
        %1669 = vmatprep.subr.mxu0 0.0
        %1670 = vmatpush1.msra.mxu0 0.0
        %1671 = vmatprep.subr.mxu0 0.0
        %1672 = vmatpush1.msra.mxu0 0.0
        %1673 = vmatprep.subr.mxu0 %v1568
        %1674 = vmatpush1.msra.mxu0 %v1567
        %1675 = vmatprep.subr.mxu0 %v1560
        %1676 = vmatpush1.msra.mxu0 %v1559
        %1677 = vmatprep.subr.mxu0 %v1552
        %1678 = vmatpush1.msra.mxu0 %v1551
        %1679 = vmatprep.subr.mxu0 %v1544
        %1680 = vmatpush1.msra.mxu0 %v1543
        %1681 = vmatprep.subr.mxu0 %v1536
        %1682 = vmatpush1.msra.mxu0 %v1535
        %1683 = vmatprep.subr.mxu0 %v1528
        %1684 = vmatpush1.msra.mxu0 %v1527
        %1685 = vmatprep.subr.mxu0 %v1520
        %1686 = vmatpush1.msra.mxu0 %v1519
        %1687 = vmatprep.subr.mxu0 %v1512
        %1688 = vmatpush1.msra.mxu0 %v1511
        %1689 = vmatprep.subr.mxu0 %v1504
        %1690 = vmatpush1.msra.mxu0 %v1503
        %1691 = vmatprep.subr.mxu0 0.0
        %1692 = vmatpush2.msra.mxu0 0.0
        %1693 = vmatprep.subr.mxu0 0.0
        %1694 = vmatpush2.msra.mxu0 0.0
        %1695 = vmatprep.subr.mxu0 0.0
        %1696 = vmatpush2.msra.mxu0 0.0
        %1697 = vmatprep.subr.mxu0 0.0
        %1698 = vmatpush2.msra.mxu0 0.0
        %1699 = vmatprep.subr.mxu0 0.0
        %1700 = vmatpush2.msra.mxu0 0.0
        %1701 = vmatprep.subr.mxu0 0.0
        %1702 = vmatpush2.msra.mxu0 0.0
        %1703 = vmatprep.subr.mxu0 0.0
        %1704 = vmatpush2.msra.mxu0 0.0
        %1705 = vmatprep.subr.mxu0 0.0
        %1706 = vmatpush2.msra.mxu0 0.0
        %1707 = vmatprep.subr.mxu0 0.0
        %1708 = vmatpush2.msra.mxu0 0.0
        %1709 = vmatprep.subr.mxu0 0.0
        %1710 = vmatpush2.msra.mxu0 0.0
        %1711 = vmatprep.subr.mxu0 0.0
        %1712 = vmatpush2.msra.mxu0 0.0
        %1713 = vmatprep.subr.mxu0 0.0
        %1714 = vmatpush2.msra.mxu0 0.0
        %1715 = vmatprep.subr.mxu0 0.0
        %1716 = vmatpush2.msra.mxu0 0.0
        %1717 = vmatprep.subr.mxu0 0.0
        %1718 = vmatpush2.msra.mxu0 0.0
        %1719 = vmatprep.subr.mxu0 0.0
        %1720 = vmatpush2.msra.mxu0 0.0
        %1721 = vmatprep.subr.mxu0 0.0
        %1722 = vmatpush2.msra.mxu0 0.0
        %1723 = vmatprep.mubr.f32.mxu0 0.0
        %1724 = vmatmul.mubr.f32.gmra.mxu0 %v1657
        %v1725 = vpop.f32.mrf.mxu0
        %v1726 = vadd.f32 %v1338, %v1725
        %v1727 = vpop.f32.mrf.mxu0
        %v1728 = vadd.f32 %v1338, %v1727
        %1729 = vdwg.mxu0
        %1730 = vmatprep.subr.mxu0 0.0
        %1731 = vmatpush1.msra.mxu0 0.0
        %1732 = vmatprep.subr.mxu0 0.0
        %1733 = vmatpush1.msra.mxu0 0.0
        %1734 = vmatprep.subr.mxu0 0.0
        %1735 = vmatpush1.msra.mxu0 0.0
        %1736 = vmatprep.subr.mxu0 0.0
        %1737 = vmatpush1.msra.mxu0 0.0
        %1738 = vmatprep.subr.mxu0 0.0
        %1739 = vmatpush1.msra.mxu0 0.0
        %1740 = vmatprep.subr.mxu0 0.0
        %1741 = vmatpush1.msra.mxu0 0.0
        %1742 = vmatprep.subr.mxu0 0.0
        %1743 = vmatpush1.msra.mxu0 0.0
        %1744 = vmatprep.subr.mxu0 %v1570
        %1745 = vmatpush1.msra.mxu0 %v1569
        %1746 = vmatprep.subr.mxu0 %v1562
        %1747 = vmatpush1.msra.mxu0 %v1561
        %1748 = vmatprep.subr.mxu0 %v1554
        %1749 = vmatpush1.msra.mxu0 %v1553
        %1750 = vmatprep.subr.mxu0 %v1546
        %1751 = vmatpush1.msra.mxu0 %v1545
        %1752 = vmatprep.subr.mxu0 %v1538
        %1753 = vmatpush1.msra.mxu0 %v1537
        %1754 = vmatprep.subr.mxu0 %v1530
        %1755 = vmatpush1.msra.mxu0 %v1529
        %1756 = vmatprep.subr.mxu0 %v1522
        %1757 = vmatpush1.msra.mxu0 %v1521
        %1758 = vmatprep.subr.mxu0 %v1514
        %1759 = vmatpush1.msra.mxu0 %v1513
        %1760 = vmatprep.subr.mxu0 %v1506
        %1761 = vmatpush1.msra.mxu0 %v1505
        %1762 = vmatprep.subr.mxu0 0.0
        %1763 = vmatpush2.msra.mxu0 0.0
        %1764 = vmatprep.subr.mxu0 0.0
        %1765 = vmatpush2.msra.mxu0 0.0
        %1766 = vmatprep.subr.mxu0 0.0
        %1767 = vmatpush2.msra.mxu0 0.0
        %1768 = vmatprep.subr.mxu0 0.0
        %1769 = vmatpush2.msra.mxu0 0.0
        %1770 = vmatprep.subr.mxu0 0.0
        %1771 = vmatpush2.msra.mxu0 0.0
        %1772 = vmatprep.subr.mxu0 0.0
        %1773 = vmatpush2.msra.mxu0 0.0
        %1774 = vmatprep.subr.mxu0 0.0
        %1775 = vmatpush2.msra.mxu0 0.0
        %1776 = vmatprep.subr.mxu0 0.0
        %1777 = vmatpush2.msra.mxu0 0.0
        %1778 = vmatprep.subr.mxu0 0.0
        %1779 = vmatpush2.msra.mxu0 0.0
        %1780 = vmatprep.subr.mxu0 0.0
        %1781 = vmatpush2.msra.mxu0 0.0
        %1782 = vmatprep.subr.mxu0 0.0
        %1783 = vmatpush2.msra.mxu0 0.0
        %1784 = vmatprep.subr.mxu0 0.0
        %1785 = vmatpush2.msra.mxu0 0.0
        %1786 = vmatprep.subr.mxu0 0.0
        %1787 = vmatpush2.msra.mxu0 0.0
        %1788 = vmatprep.subr.mxu0 0.0
        %1789 = vmatpush2.msra.mxu0 0.0
        %1790 = vmatprep.subr.mxu0 0.0
        %1791 = vmatpush2.msra.mxu0 0.0
        %1792 = vmatprep.subr.mxu0 0.0
        %1793 = vmatpush2.msra.mxu0 0.0
        %1794 = vmatprep.mubr.f32.mxu0 0.0
        %1795 = vmatmul.mubr.f32.gmra.mxu0 %v1657
        %v1796 = vpop.f32.mrf.mxu0
        %v1797 = vadd.f32 %v1338, %v1796
        %v1798 = vpop.f32.mrf.mxu0
        %v1799 = vadd.f32 %v1338, %v1798
        %1800 = vdwg.mxu0
        %1801 = vmatprep.subr.mxu0 0.0
        %1802 = vmatpush1.msra.mxu0 0.0
        %1803 = vmatprep.subr.mxu0 0.0
        %1804 = vmatpush1.msra.mxu0 0.0
        %1805 = vmatprep.subr.mxu0 0.0
        %1806 = vmatpush1.msra.mxu0 0.0
        %1807 = vmatprep.subr.mxu0 0.0
        %1808 = vmatpush1.msra.mxu0 0.0
        %1809 = vmatprep.subr.mxu0 0.0
        %1810 = vmatpush1.msra.mxu0 0.0
        %1811 = vmatprep.subr.mxu0 0.0
        %1812 = vmatpush1.msra.mxu0 0.0
        %1813 = vmatprep.subr.mxu0 0.0
        %1814 = vmatpush1.msra.mxu0 0.0
        %1815 = vmatprep.subr.mxu0 %v1572
        %1816 = vmatpush1.msra.mxu0 %v1571
        %1817 = vmatprep.subr.mxu0 %v1564
        %1818 = vmatpush1.msra.mxu0 %v1563
        %1819 = vmatprep.subr.mxu0 %v1556
        %1820 = vmatpush1.msra.mxu0 %v1555
        %1821 = vmatprep.subr.mxu0 %v1548
        %1822 = vmatpush1.msra.mxu0 %v1547
        %1823 = vmatprep.subr.mxu0 %v1540
        %1824 = vmatpush1.msra.mxu0 %v1539
        %1825 = vmatprep.subr.mxu0 %v1532
        %1826 = vmatpush1.msra.mxu0 %v1531
        %1827 = vmatprep.subr.mxu0 %v1524
        %1828 = vmatpush1.msra.mxu0 %v1523
        %1829 = vmatprep.subr.mxu0 %v1516
        %1830 = vmatpush1.msra.mxu0 %v1515
        %1831 = vmatprep.subr.mxu0 %v1508
        %1832 = vmatpush1.msra.mxu0 %v1507
        %1833 = vmatprep.subr.mxu0 0.0
        %1834 = vmatpush2.msra.mxu0 0.0
        %1835 = vmatprep.subr.mxu0 0.0
        %1836 = vmatpush2.msra.mxu0 0.0
        %1837 = vmatprep.subr.mxu0 0.0
        %1838 = vmatpush2.msra.mxu0 0.0
        %1839 = vmatprep.subr.mxu0 0.0
        %1840 = vmatpush2.msra.mxu0 0.0
        %1841 = vmatprep.subr.mxu0 0.0
        %1842 = vmatpush2.msra.mxu0 0.0
        %1843 = vmatprep.subr.mxu0 0.0
        %1844 = vmatpush2.msra.mxu0 0.0
        %1845 = vmatprep.subr.mxu0 0.0
        %1846 = vmatpush2.msra.mxu0 0.0
        %1847 = vmatprep.subr.mxu0 0.0
        %1848 = vmatpush2.msra.mxu0 0.0
        %1849 = vmatprep.subr.mxu0 0.0
        %1850 = vmatpush2.msra.mxu0 0.0
        %1851 = vmatprep.subr.mxu0 0.0
        %1852 = vmatpush2.msra.mxu0 0.0
        %1853 = vmatprep.subr.mxu0 0.0
        %1854 = vmatpush2.msra.mxu0 0.0
        %1855 = vmatprep.subr.mxu0 0.0
        %1856 = vmatpush2.msra.mxu0 0.0
        %1857 = vmatprep.subr.mxu0 0.0
        %1858 = vmatpush2.msra.mxu0 0.0
        %1859 = vmatprep.subr.mxu0 0.0
        %1860 = vmatpush2.msra.mxu0 0.0
        %1861 = vmatprep.subr.mxu0 0.0
        %1862 = vmatpush2.msra.mxu0 0.0
        %1863 = vmatprep.subr.mxu0 0.0
        %1864 = vmatpush2.msra.mxu0 0.0
        %1865 = vmatprep.mubr.f32.mxu0 0.0
        %1866 = vmatmul.mubr.f32.gmra.mxu0 %v1657
        %v1867 = vpop.f32.mrf.mxu0
        %v1868 = vadd.f32 %v1338, %v1867
        %v1869 = vpop.f32.mrf.mxu0
        %v1870 = vadd.f32 %v1338, %v1869
        %1871 = vdwg.mxu0
        %1872 = vmatprep.subr.mxu0 0.0
        %1873 = vmatpush1.msra.mxu0 0.0
        %1874 = vmatprep.subr.mxu0 0.0
        %1875 = vmatpush1.msra.mxu0 0.0
        %1876 = vmatprep.subr.mxu0 0.0
        %1877 = vmatpush1.msra.mxu0 0.0
        %1878 = vmatprep.subr.mxu0 0.0
        %1879 = vmatpush1.msra.mxu0 0.0
        %1880 = vmatprep.subr.mxu0 0.0
        %1881 = vmatpush1.msra.mxu0 0.0
        %1882 = vmatprep.subr.mxu0 0.0
        %1883 = vmatpush1.msra.mxu0 0.0
        %1884 = vmatprep.subr.mxu0 0.0
        %1885 = vmatpush1.msra.mxu0 0.0
        %1886 = vmatprep.subr.mxu0 %v1574
        %1887 = vmatpush1.msra.mxu0 %v1573
        %1888 = vmatprep.subr.mxu0 %v1566
        %1889 = vmatpush1.msra.mxu0 %v1565
        %1890 = vmatprep.subr.mxu0 %v1558
        %1891 = vmatpush1.msra.mxu0 %v1557
        %1892 = vmatprep.subr.mxu0 %v1550
        %1893 = vmatpush1.msra.mxu0 %v1549
        %1894 = vmatprep.subr.mxu0 %v1542
        %1895 = vmatpush1.msra.mxu0 %v1541
        %1896 = vmatprep.subr.mxu0 %v1534
        %1897 = vmatpush1.msra.mxu0 %v1533
        %1898 = vmatprep.subr.mxu0 %v1526
        %1899 = vmatpush1.msra.mxu0 %v1525
        %1900 = vmatprep.subr.mxu0 %v1518
        %1901 = vmatpush1.msra.mxu0 %v1517
        %1902 = vmatprep.subr.mxu0 %v1510
        %1903 = vmatpush1.msra.mxu0 %v1509
        %1904 = vmatprep.subr.mxu0 0.0
        %1905 = vmatpush2.msra.mxu0 0.0
        %1906 = vmatprep.subr.mxu0 0.0
        %1907 = vmatpush2.msra.mxu0 0.0
        %1908 = vmatprep.subr.mxu0 0.0
        %1909 = vmatpush2.msra.mxu0 0.0
        %1910 = vmatprep.subr.mxu0 0.0
        %1911 = vmatpush2.msra.mxu0 0.0
        %1912 = vmatprep.subr.mxu0 0.0
        %1913 = vmatpush2.msra.mxu0 0.0
        %1914 = vmatprep.subr.mxu0 0.0
        %1915 = vmatpush2.msra.mxu0 0.0
        %1916 = vmatprep.subr.mxu0 0.0
        %1917 = vmatpush2.msra.mxu0 0.0
        %1918 = vmatprep.subr.mxu0 0.0
        %1919 = vmatpush2.msra.mxu0 0.0
        %1920 = vmatprep.subr.mxu0 0.0
        %1921 = vmatpush2.msra.mxu0 0.0
        %1922 = vmatprep.subr.mxu0 0.0
        %1923 = vmatpush2.msra.mxu0 0.0
        %1924 = vmatprep.subr.mxu0 0.0
        %1925 = vmatpush2.msra.mxu0 0.0
        %1926 = vmatprep.subr.mxu0 0.0
        %1927 = vmatpush2.msra.mxu0 0.0
        %1928 = vmatprep.subr.mxu0 0.0
        %1929 = vmatpush2.msra.mxu0 0.0
        %1930 = vmatprep.subr.mxu0 0.0
        %1931 = vmatpush2.msra.mxu0 0.0
        %1932 = vmatprep.subr.mxu0 0.0
        %1933 = vmatpush2.msra.mxu0 0.0
        %1934 = vmatprep.subr.mxu0 0.0
        %1935 = vmatpush2.msra.mxu0 0.0
        %1936 = vmatprep.mubr.f32.mxu0 0.0
        %1937 = vmatmul.mubr.f32.gmra.mxu0 %v1657
        %v1938 = vpop.f32.mrf.mxu0
        %v1939 = vadd.f32 %v1338, %v1938
        %v1940 = vpop.f32.mrf.mxu0
        %v1941 = vadd.f32 %v1338, %v1940
        %1942 = vdwg.mxu0
        %1943 = vmatprep.subr.mxu0 0.0
        %1944 = vmatpush1.msra.mxu0 0.0
        %1945 = vmatprep.subr.mxu0 0.0
        %1946 = vmatpush1.msra.mxu0 0.0
        %1947 = vmatprep.subr.mxu0 0.0
        %1948 = vmatpush1.msra.mxu0 0.0
        %1949 = vmatprep.subr.mxu0 0.0
        %1950 = vmatpush1.msra.mxu0 0.0
        %1951 = vmatprep.subr.mxu0 0.0
        %1952 = vmatpush1.msra.mxu0 0.0
        %1953 = vmatprep.subr.mxu0 0.0
        %1954 = vmatpush1.msra.mxu0 0.0
        %1955 = vmatprep.subr.mxu0 0.0
        %1956 = vmatpush1.msra.mxu0 0.0
        %1957 = vmatprep.subr.mxu0 0.0
        %1958 = vmatpush1.msra.mxu0 %v1501
        %1959 = vmatprep.subr.mxu0 0.0
        %1960 = vmatpush1.msra.mxu0 %v1483
        %1961 = vmatprep.subr.mxu0 0.0
        %1962 = vmatpush1.msra.mxu0 %v1465
        %1963 = vmatprep.subr.mxu0 0.0
        %1964 = vmatpush1.msra.mxu0 %v1447
        %1965 = vmatprep.subr.mxu0 0.0
        %1966 = vmatpush1.msra.mxu0 %v1429
        %1967 = vmatprep.subr.mxu0 0.0
        %1968 = vmatpush1.msra.mxu0 %v1411
        %1969 = vmatprep.subr.mxu0 0.0
        %1970 = vmatpush1.msra.mxu0 %v1393
        %1971 = vmatprep.subr.mxu0 0.0
        %1972 = vmatpush1.msra.mxu0 %v1375
        %1973 = vmatprep.subr.mxu0 0.0
        %1974 = vmatpush1.msra.mxu0 %v1357
        %1975 = vmatprep.subr.mxu0 0.0
        %1976 = vmatpush2.msra.mxu0 0.0
        %1977 = vmatprep.subr.mxu0 0.0
        %1978 = vmatpush2.msra.mxu0 0.0
        %1979 = vmatprep.subr.mxu0 0.0
        %1980 = vmatpush2.msra.mxu0 0.0
        %1981 = vmatprep.subr.mxu0 0.0
        %1982 = vmatpush2.msra.mxu0 0.0
        %1983 = vmatprep.subr.mxu0 0.0
        %1984 = vmatpush2.msra.mxu0 0.0
        %1985 = vmatprep.subr.mxu0 0.0
        %1986 = vmatpush2.msra.mxu0 0.0
        %1987 = vmatprep.subr.mxu0 0.0
        %1988 = vmatpush2.msra.mxu0 0.0
        %1989 = vmatprep.subr.mxu0 0.0
        %1990 = vmatpush2.msra.mxu0 0.0
        %1991 = vmatprep.subr.mxu0 0.0
        %1992 = vmatpush2.msra.mxu0 0.0
        %1993 = vmatprep.subr.mxu0 0.0
        %1994 = vmatpush2.msra.mxu0 0.0
        %1995 = vmatprep.subr.mxu0 0.0
        %1996 = vmatpush2.msra.mxu0 0.0
        %1997 = vmatprep.subr.mxu0 0.0
        %1998 = vmatpush2.msra.mxu0 0.0
        %1999 = vmatprep.subr.mxu0 0.0
        %2000 = vmatpush2.msra.mxu0 0.0
        %2001 = vmatprep.subr.mxu0 0.0
        %2002 = vmatpush2.msra.mxu0 0.0
        %2003 = vmatprep.subr.mxu0 0.0
        %2004 = vmatpush2.msra.mxu0 0.0
        %2005 = vmatprep.subr.mxu0 0.0
        %2006 = vmatpush2.msra.mxu0 0.0
        %2007 = vmatprep.mubr.f32.mxu0 0.0
        %2008 = vmatmul.mubr.f32.gmra.mxu0 %v1657
        %v2009 = vpop.f32.mrf.mxu0
        %v2010 = vadd.f32 %v1338, %v2009
        %v2011 = vpop.f32.mrf.mxu0
        %2012 = vdwg.mxu0
        %v2013 = vmax.f32 %v1726, 0.0
        %v2014 = vmax.f32 %v1728, 0.0
        %v2015 = vmax.f32 %v1797, 0.0
        %v2016 = vmax.f32 %v1799, 0.0
        %v2017 = vmax.f32 %v1868, 0.0
        %v2018 = vmax.f32 %v1870, 0.0
        %v2019 = vmax.f32 %v1939, 0.0
        %v2020 = vmax.f32 %v1941, 0.0
        %v2021 = vmax.f32 %v2010, 0.0
        %v2024 = vlaneseq
        %v2025 = vshrl.u32 %v2024, 7
        %v2026 = vsub.s32 0, %v2025
        %v2027 = vrot.slane %v1077, %v2026
        %v2028 = vlaneseq
        %v2029 = vshrl.u32 %v2028, 7
        %v2030 = vsub.s32 1, %v2029
        %v2031 = vrot.slane %v1077, %v2030
        %v2032 = vlaneseq
        %v2033 = vshrl.u32 %v2032, 7
        %v2034 = vsub.s32 2, %v2033
        %v2035 = vrot.slane %v1077, %v2034
        %v2036 = vlaneseq
        %v2037 = vshrl.u32 %v2036, 7
        %v2038 = vsub.s32 3, %v2037
        %v2039 = vrot.slane %v1077, %v2038
        %v2040 = vlaneseq
        %v2041 = vshrl.u32 %v2040, 7
        %v2042 = vsub.s32 4, %v2041
        %v2043 = vrot.slane %v1077, %v2042
        %v2044 = vlaneseq
        %v2045 = vshrl.u32 %v2044, 7
        %v2046 = vsub.s32 5, %v2045
        %v2047 = vrot.slane %v1077, %v2046
        %v2048 = vlaneseq
        %v2049 = vshrl.u32 %v2048, 7
        %v2050 = vsub.s32 6, %v2049
        %v2051 = vrot.slane %v1077, %v2050
        %v2052 = vlaneseq
        %v2053 = vshrl.u32 %v2052, 7
        %v2054 = vsub.s32 7, %v2053
        %v2055 = vrot.slane %v1077, %v2054
        %v2056 = vlaneseq
        %v2057 = vshrl.u32 %v2056, 7
        %v2058 = vsub.s32 0, %v2057
        %v2059 = vrot.slane %v1078, %v2058
        %v2069 = vmul.f32 %v2013, %v2027
        %v2070 = vmul.f32 %v2014, %v2031
        %v2071 = vmul.f32 %v2015, %v2035
        %v2072 = vmul.f32 %v2016, %v2039
        %v2073 = vmul.f32 %v2017, %v2043
        %v2074 = vmul.f32 %v2018, %v2047
        %v2075 = vmul.f32 %v2019, %v2051
        %v2076 = vmul.f32 %v2020, %v2055
        %v2077 = vmul.f32 %v2021, %v2059
        %2087 = vrot.lane.b32.xlu0 %v2069, 68
        %v2088 = vpop.permute.xlu0 %2087
        %2089 = vrot.lane.b32.xlu0 %v2070, 68
        %v2090 = vpop.permute.xlu0 %2089
        %2091 = vrot.lane.b32.xlu0 %v2071, 68
        %v2092 = vpop.permute.xlu0 %2091
        %2093 = vrot.lane.b32.xlu0 %v2072, 68
        %v2094 = vpop.permute.xlu0 %2093
        %2095 = vrot.lane.b32.xlu0 %v2073, 68
        %v2096 = vpop.permute.xlu0 %2095
        %2097 = vrot.lane.b32.xlu0 %v2074, 68
        %v2098 = vpop.permute.xlu0 %2097
        %2099 = vrot.lane.b32.xlu0 %v2075, 68
        %v2100 = vpop.permute.xlu0 %2099
        %2101 = vrot.lane.b32.xlu0 %v2076, 68
        %v2102 = vpop.permute.xlu0 %2101
        %2103 = vrot.lane.b32.xlu0 %v2077, 68
        %v2104 = vpop.permute.xlu0 %2103
        %v2105 = vsel %vm1073, %v2088, %v2090
        %v2106 = vsel %vm1073, %v2090, %v2092
        %v2107 = vsel %vm1073, %v2092, %v2094
        %v2108 = vsel %vm1073, %v2094, %v2096
        %v2109 = vsel %vm1073, %v2096, %v2098
        %v2110 = vsel %vm1073, %v2098, %v2100
        %v2111 = vsel %vm1073, %v2100, %v2102
        %v2112 = vsel %vm1073, %v2102, %v2104
        %vm2123 = vcmask 1048096
        %2124 = vst.msk [vmem:[#allocation3] sm:$0xff] %vm2123, %v2088
        %2125 = vst [vmem:[#allocation3 + $0x8] sm:$0xff] %v2105
        %2126 = vst [vmem:[#allocation3 + $0x10] sm:$0xff] %v2106
        %2127 = vst [vmem:[#allocation3 + $0x18] sm:$0xff] %v2107
        %2128 = vst [vmem:[#allocation3 + $0x20] sm:$0xff] %v2108
        %2129 = vst [vmem:[#allocation3 + $0x28] sm:$0xff] %v2109
        %2130 = vst [vmem:[#allocation3 + $0x30] sm:$0xff] %v2110
        %2131 = vst [vmem:[#allocation3 + $0x38] sm:$0xff] %v2111
        %2132 = vst [vmem:[#allocation3 + $0x40] sm:$0xff] %v2112
        %vm2133 = vcmask 31744
        %2134 = vst.msk [vmem:[#allocation3 + $0x48] sm:$0xff] %vm2133, %v2104
        %v2135 = vld [vmem:[%s4] sm:$0xff]
        %v2136 = vld [vmem:[#allocation3] sm:$0xff]
        %v2137 = vld [vmem:[#allocation3 + $0x8] sm:$0xff]
        %v2138 = vld [vmem:[#allocation3 + $0x10] sm:$0xff]
        %v2139 = vld [vmem:[#allocation3 + $0x18] sm:$0xff]
        %v2140 = vld [vmem:[#allocation3 + $0x20] sm:$0xff]
        %v2141 = vld [vmem:[#allocation3 + $0x28] sm:$0xff]
        %v2142 = vld [vmem:[#allocation3 + $0x30] sm:$0xff]
        %v2143 = vld [vmem:[#allocation3 + $0x38] sm:$0xff]
        %v2144 = vld [vmem:[#allocation3 + $0x40] sm:$0xff]
        %v2145 = vld [vmem:[#allocation3 + $0x48] sm:$0xff]
        %2155 = vrot.lane.b32.xlu0 %v2136, 127
        %v2156 = vpop.permute.xlu0 %2155
        %2157 = vrot.lane.b32.xlu0 %v2137, 127
        %v2158 = vpop.permute.xlu0 %2157
        %2159 = vrot.lane.b32.xlu0 %v2138, 127
        %v2160 = vpop.permute.xlu0 %2159
        %2161 = vrot.lane.b32.xlu0 %v2139, 127
        %v2162 = vpop.permute.xlu0 %2161
        %2163 = vrot.lane.b32.xlu0 %v2140, 127
        %v2164 = vpop.permute.xlu0 %2163
        %2165 = vrot.lane.b32.xlu0 %v2141, 127
        %v2166 = vpop.permute.xlu0 %2165
        %2167 = vrot.lane.b32.xlu0 %v2142, 127
        %v2168 = vpop.permute.xlu0 %2167
        %2169 = vrot.lane.b32.xlu0 %v2143, 127
        %v2170 = vpop.permute.xlu0 %2169
        %2171 = vrot.lane.b32.xlu0 %v2144, 127
        %v2172 = vpop.permute.xlu0 %2171
        %v2173 = vsel %vm1117, %v2156, %v2158
        %v2174 = vsel %vm1117, %v2158, %v2160
        %v2175 = vsel %vm1117, %v2160, %v2162
        %v2176 = vsel %vm1117, %v2162, %v2164
        %v2177 = vsel %vm1117, %v2164, %v2166
        %v2178 = vsel %vm1117, %v2166, %v2168
        %v2179 = vsel %vm1117, %v2168, %v2170
        %v2180 = vsel %vm1117, %v2170, %v2172
        %2181 = vrot.lane.b32.xlu0 %v2136, 126
        %v2182 = vpop.permute.xlu0 %2181
        %2183 = vrot.lane.b32.xlu0 %v2137, 126
        %v2184 = vpop.permute.xlu0 %2183
        %2185 = vrot.lane.b32.xlu0 %v2138, 126
        %v2186 = vpop.permute.xlu0 %2185
        %2187 = vrot.lane.b32.xlu0 %v2139, 126
        %v2188 = vpop.permute.xlu0 %2187
        %2189 = vrot.lane.b32.xlu0 %v2140, 126
        %v2190 = vpop.permute.xlu0 %2189
        %2191 = vrot.lane.b32.xlu0 %v2141, 126
        %v2192 = vpop.permute.xlu0 %2191
        %2193 = vrot.lane.b32.xlu0 %v2142, 126
        %v2194 = vpop.permute.xlu0 %2193
        %2195 = vrot.lane.b32.xlu0 %v2143, 126
        %v2196 = vpop.permute.xlu0 %2195
        %2197 = vrot.lane.b32.xlu0 %v2144, 126
        %v2198 = vpop.permute.xlu0 %2197
        %v2199 = vsel %vm1144, %v2182, %v2184
        %v2200 = vsel %vm1144, %v2184, %v2186
        %v2201 = vsel %vm1144, %v2186, %v2188
        %v2202 = vsel %vm1144, %v2188, %v2190
        %v2203 = vsel %vm1144, %v2190, %v2192
        %v2204 = vsel %vm1144, %v2192, %v2194
        %v2205 = vsel %vm1144, %v2194, %v2196
        %v2206 = vsel %vm1144, %v2196, %v2198
        %2208 = vrot.lane.b32.xlu0 %v2136, 94
        %v2209 = vpop.permute.xlu0 %2208
        %2210 = vrot.lane.b32.xlu0 %v2137, 94
        %v2211 = vpop.permute.xlu0 %2210
        %2212 = vrot.lane.b32.xlu0 %v2138, 94
        %v2213 = vpop.permute.xlu0 %2212
        %2214 = vrot.lane.b32.xlu0 %v2139, 94
        %v2215 = vpop.permute.xlu0 %2214
        %2216 = vrot.lane.b32.xlu0 %v2140, 94
        %v2217 = vpop.permute.xlu0 %2216
        %2218 = vrot.lane.b32.xlu0 %v2141, 94
        %v2219 = vpop.permute.xlu0 %2218
        %2220 = vrot.lane.b32.xlu0 %v2142, 94
        %v2221 = vpop.permute.xlu0 %2220
        %2222 = vrot.lane.b32.xlu0 %v2143, 94
        %v2223 = vpop.permute.xlu0 %2222
        %2224 = vrot.lane.b32.xlu0 %v2144, 94
        %v2225 = vpop.permute.xlu0 %2224
        %2226 = vrot.lane.b32.xlu0 %v2145, 94
        %v2227 = vpop.permute.xlu0 %2226
        %v2228 = vsel %vm1174, %v2209, %v2211
        %v2229 = vsel %vm1174, %v2211, %v2213
        %v2230 = vsel %vm1174, %v2213, %v2215
        %v2231 = vsel %vm1174, %v2215, %v2217
        %v2232 = vsel %vm1174, %v2217, %v2219
        %v2233 = vsel %vm1174, %v2219, %v2221
        %v2234 = vsel %vm1174, %v2221, %v2223
        %v2235 = vsel %vm1174, %v2223, %v2225
        %v2236 = vsel %vm1174, %v2225, %v2227
        %2237 = vrot.lane.b32.xlu0 %v2136, 93
        %v2238 = vpop.permute.xlu0 %2237
        %2239 = vrot.lane.b32.xlu0 %v2137, 93
        %v2240 = vpop.permute.xlu0 %2239
        %2241 = vrot.lane.b32.xlu0 %v2138, 93
        %v2242 = vpop.permute.xlu0 %2241
        %2243 = vrot.lane.b32.xlu0 %v2139, 93
        %v2244 = vpop.permute.xlu0 %2243
        %2245 = vrot.lane.b32.xlu0 %v2140, 93
        %v2246 = vpop.permute.xlu0 %2245
        %2247 = vrot.lane.b32.xlu0 %v2141, 93
        %v2248 = vpop.permute.xlu0 %2247
        %2249 = vrot.lane.b32.xlu0 %v2142, 93
        %v2250 = vpop.permute.xlu0 %2249
        %2251 = vrot.lane.b32.xlu0 %v2143, 93
        %v2252 = vpop.permute.xlu0 %2251
        %2253 = vrot.lane.b32.xlu0 %v2144, 93
        %v2254 = vpop.permute.xlu0 %2253
        %2255 = vrot.lane.b32.xlu0 %v2145, 93
        %v2256 = vpop.permute.xlu0 %2255
        %v2257 = vsel %vm1204, %v2238, %v2240
        %v2258 = vsel %vm1204, %v2240, %v2242
        %v2259 = vsel %vm1204, %v2242, %v2244
        %v2260 = vsel %vm1204, %v2244, %v2246
        %v2261 = vsel %vm1204, %v2246, %v2248
        %v2262 = vsel %vm1204, %v2248, %v2250
        %v2263 = vsel %vm1204, %v2250, %v2252
        %v2264 = vsel %vm1204, %v2252, %v2254
        %v2265 = vsel %vm1204, %v2254, %v2256
        %2266 = vrot.lane.b32.xlu0 %v2136, 92
        %v2267 = vpop.permute.xlu0 %2266
        %2268 = vrot.lane.b32.xlu0 %v2137, 92
        %v2269 = vpop.permute.xlu0 %2268
        %2270 = vrot.lane.b32.xlu0 %v2138, 92
        %v2271 = vpop.permute.xlu0 %2270
        %2272 = vrot.lane.b32.xlu0 %v2139, 92
        %v2273 = vpop.permute.xlu0 %2272
        %2274 = vrot.lane.b32.xlu0 %v2140, 92
        %v2275 = vpop.permute.xlu0 %2274
        %2276 = vrot.lane.b32.xlu0 %v2141, 92
        %v2277 = vpop.permute.xlu0 %2276
        %2278 = vrot.lane.b32.xlu0 %v2142, 92
        %v2279 = vpop.permute.xlu0 %2278
        %2280 = vrot.lane.b32.xlu0 %v2143, 92
        %v2281 = vpop.permute.xlu0 %2280
        %2282 = vrot.lane.b32.xlu0 %v2144, 92
        %v2283 = vpop.permute.xlu0 %2282
        %2284 = vrot.lane.b32.xlu0 %v2145, 92
        %v2285 = vpop.permute.xlu0 %2284
        %v2286 = vsel %vm1234, %v2267, %v2269
        %v2287 = vsel %vm1234, %v2269, %v2271
        %v2288 = vsel %vm1234, %v2271, %v2273
        %v2289 = vsel %vm1234, %v2273, %v2275
        %v2290 = vsel %vm1234, %v2275, %v2277
        %v2291 = vsel %vm1234, %v2277, %v2279
        %v2292 = vsel %vm1234, %v2279, %v2281
        %v2293 = vsel %vm1234, %v2281, %v2283
        %v2294 = vsel %vm1234, %v2283, %v2285
        %2295 = vrot.lane.b32.xlu0 %v2136, 60
        %v2296 = vpop.permute.xlu0 %2295
        %2297 = vrot.lane.b32.xlu0 %v2137, 60
        %v2298 = vpop.permute.xlu0 %2297
        %2299 = vrot.lane.b32.xlu0 %v2138, 60
        %v2300 = vpop.permute.xlu0 %2299
        %2301 = vrot.lane.b32.xlu0 %v2139, 60
        %v2302 = vpop.permute.xlu0 %2301
        %2303 = vrot.lane.b32.xlu0 %v2140, 60
        %v2304 = vpop.permute.xlu0 %2303
        %2305 = vrot.lane.b32.xlu0 %v2141, 60
        %v2306 = vpop.permute.xlu0 %2305
        %2307 = vrot.lane.b32.xlu0 %v2142, 60
        %v2308 = vpop.permute.xlu0 %2307
        %2309 = vrot.lane.b32.xlu0 %v2143, 60
        %v2310 = vpop.permute.xlu0 %2309
        %2311 = vrot.lane.b32.xlu0 %v2144, 60
        %v2312 = vpop.permute.xlu0 %2311
        %2313 = vrot.lane.b32.xlu0 %v2145, 60
        %v2314 = vpop.permute.xlu0 %2313
        %v2315 = vsel %vm1264, %v2296, %v2298
        %v2316 = vsel %vm1264, %v2298, %v2300
        %v2317 = vsel %vm1264, %v2300, %v2302
        %v2318 = vsel %vm1264, %v2302, %v2304
        %v2319 = vsel %vm1264, %v2304, %v2306
        %v2320 = vsel %vm1264, %v2306, %v2308
        %v2321 = vsel %vm1264, %v2308, %v2310
        %v2322 = vsel %vm1264, %v2310, %v2312
        %v2323 = vsel %vm1264, %v2312, %v2314
        %2324 = vrot.lane.b32.xlu0 %v2136, 59
        %v2325 = vpop.permute.xlu0 %2324
        %2326 = vrot.lane.b32.xlu0 %v2137, 59
        %v2327 = vpop.permute.xlu0 %2326
        %2328 = vrot.lane.b32.xlu0 %v2138, 59
        %v2329 = vpop.permute.xlu0 %2328
        %2330 = vrot.lane.b32.xlu0 %v2139, 59
        %v2331 = vpop.permute.xlu0 %2330
        %2332 = vrot.lane.b32.xlu0 %v2140, 59
        %v2333 = vpop.permute.xlu0 %2332
        %2334 = vrot.lane.b32.xlu0 %v2141, 59
        %v2335 = vpop.permute.xlu0 %2334
        %2336 = vrot.lane.b32.xlu0 %v2142, 59
        %v2337 = vpop.permute.xlu0 %2336
        %2338 = vrot.lane.b32.xlu0 %v2143, 59
        %v2339 = vpop.permute.xlu0 %2338
        %2340 = vrot.lane.b32.xlu0 %v2144, 59
        %v2341 = vpop.permute.xlu0 %2340
        %2342 = vrot.lane.b32.xlu0 %v2145, 59
        %v2343 = vpop.permute.xlu0 %2342
        %v2344 = vsel %vm1294, %v2325, %v2327
        %v2345 = vsel %vm1294, %v2327, %v2329
        %v2346 = vsel %vm1294, %v2329, %v2331
        %v2347 = vsel %vm1294, %v2331, %v2333
        %v2348 = vsel %vm1294, %v2333, %v2335
        %v2349 = vsel %vm1294, %v2335, %v2337
        %v2350 = vsel %vm1294, %v2337, %v2339
        %v2351 = vsel %vm1294, %v2339, %v2341
        %v2352 = vsel %vm1294, %v2341, %v2343
        %2353 = vrot.lane.b32.xlu0 %v2136, 58
        %v2354 = vpop.permute.xlu0 %2353
        %2355 = vrot.lane.b32.xlu0 %v2137, 58
        %v2356 = vpop.permute.xlu0 %2355
        %2357 = vrot.lane.b32.xlu0 %v2138, 58
        %v2358 = vpop.permute.xlu0 %2357
        %2359 = vrot.lane.b32.xlu0 %v2139, 58
        %v2360 = vpop.permute.xlu0 %2359
        %2361 = vrot.lane.b32.xlu0 %v2140, 58
        %v2362 = vpop.permute.xlu0 %2361
        %2363 = vrot.lane.b32.xlu0 %v2141, 58
        %v2364 = vpop.permute.xlu0 %2363
        %2365 = vrot.lane.b32.xlu0 %v2142, 58
        %v2366 = vpop.permute.xlu0 %2365
        %2367 = vrot.lane.b32.xlu0 %v2143, 58
        %v2368 = vpop.permute.xlu0 %2367
        %2369 = vrot.lane.b32.xlu0 %v2144, 58
        %v2370 = vpop.permute.xlu0 %2369
        %2371 = vrot.lane.b32.xlu0 %v2145, 58
        %v2372 = vpop.permute.xlu0 %2371
        %v2373 = vsel %vm1324, %v2354, %v2356
        %v2374 = vsel %vm1324, %v2356, %v2358
        %v2375 = vsel %vm1324, %v2358, %v2360
        %v2376 = vsel %vm1324, %v2360, %v2362
        %v2377 = vsel %vm1324, %v2362, %v2364
        %v2378 = vsel %vm1324, %v2364, %v2366
        %v2379 = vsel %vm1324, %v2366, %v2368
        %v2380 = vsel %vm1324, %v2368, %v2370
        %v2381 = vsel %vm1324, %v2370, %v2372
        %v2382 = vld [vmem:[%s5] sm:$0xff]
        %2384 = vset.pattern.permute.xlu0 0
        %2385 = vperm.xlu0 %2384, %v2382
        %v2386 = vpop.permute.xlu0 %2385
        %2388 = vrot.lane.b32.xlu0 %v2136, 95
        %v2389 = vpop.permute.xlu0 %2388
        %2390 = vrot.lane.b32.xlu0 %v2137, 95
        %v2391 = vpop.permute.xlu0 %2390
        %2392 = vrot.lane.b32.xlu0 %v2138, 95
        %v2393 = vpop.permute.xlu0 %2392
        %2394 = vrot.lane.b32.xlu0 %v2139, 95
        %v2395 = vpop.permute.xlu0 %2394
        %2396 = vrot.lane.b32.xlu0 %v2140, 95
        %v2397 = vpop.permute.xlu0 %2396
        %2398 = vrot.lane.b32.xlu0 %v2141, 95
        %v2399 = vpop.permute.xlu0 %2398
        %2400 = vrot.lane.b32.xlu0 %v2142, 95
        %v2401 = vpop.permute.xlu0 %2400
        %2402 = vrot.lane.b32.xlu0 %v2143, 95
        %v2403 = vpop.permute.xlu0 %2402
        %2404 = vrot.lane.b32.xlu0 %v2144, 95
        %v2405 = vpop.permute.xlu0 %2404
        %2406 = vrot.lane.b32.xlu0 %v2173, 95
        %v2407 = vpop.permute.xlu0 %2406
        %2408 = vrot.lane.b32.xlu0 %v2174, 95
        %v2409 = vpop.permute.xlu0 %2408
        %2410 = vrot.lane.b32.xlu0 %v2175, 95
        %v2411 = vpop.permute.xlu0 %2410
        %2412 = vrot.lane.b32.xlu0 %v2176, 95
        %v2413 = vpop.permute.xlu0 %2412
        %2414 = vrot.lane.b32.xlu0 %v2177, 95
        %v2415 = vpop.permute.xlu0 %2414
        %2416 = vrot.lane.b32.xlu0 %v2178, 95
        %v2417 = vpop.permute.xlu0 %2416
        %2418 = vrot.lane.b32.xlu0 %v2179, 95
        %v2419 = vpop.permute.xlu0 %2418
        %2420 = vrot.lane.b32.xlu0 %v2180, 95
        %v2421 = vpop.permute.xlu0 %2420
        %2422 = vrot.lane.b32.xlu0 %v2172, 95
        %v2423 = vpop.permute.xlu0 %2422
        %2424 = vrot.lane.b32.xlu0 %v2199, 95
        %v2425 = vpop.permute.xlu0 %2424
        %2426 = vrot.lane.b32.xlu0 %v2200, 95
        %v2427 = vpop.permute.xlu0 %2426
        %2428 = vrot.lane.b32.xlu0 %v2201, 95
        %v2429 = vpop.permute.xlu0 %2428
        %2430 = vrot.lane.b32.xlu0 %v2202, 95
        %v2431 = vpop.permute.xlu0 %2430
        %2432 = vrot.lane.b32.xlu0 %v2203, 95
        %v2433 = vpop.permute.xlu0 %2432
        %2434 = vrot.lane.b32.xlu0 %v2204, 95
        %v2435 = vpop.permute.xlu0 %2434
        %2436 = vrot.lane.b32.xlu0 %v2205, 95
        %v2437 = vpop.permute.xlu0 %2436
        %2438 = vrot.lane.b32.xlu0 %v2206, 95
        %v2439 = vpop.permute.xlu0 %2438
        %2440 = vrot.lane.b32.xlu0 %v2198, 95
        %v2441 = vpop.permute.xlu0 %2440
        %2442 = vrot.lane.b32.xlu0 %v2228, 95
        %v2443 = vpop.permute.xlu0 %2442
        %2444 = vrot.lane.b32.xlu0 %v2229, 95
        %v2445 = vpop.permute.xlu0 %2444
        %2446 = vrot.lane.b32.xlu0 %v2230, 95
        %v2447 = vpop.permute.xlu0 %2446
        %2448 = vrot.lane.b32.xlu0 %v2231, 95
        %v2449 = vpop.permute.xlu0 %2448
        %2450 = vrot.lane.b32.xlu0 %v2232, 95
        %v2451 = vpop.permute.xlu0 %2450
        %2452 = vrot.lane.b32.xlu0 %v2233, 95
        %v2453 = vpop.permute.xlu0 %2452
        %2454 = vrot.lane.b32.xlu0 %v2234, 95
        %v2455 = vpop.permute.xlu0 %2454
        %2456 = vrot.lane.b32.xlu0 %v2235, 95
        %v2457 = vpop.permute.xlu0 %2456
        %2458 = vrot.lane.b32.xlu0 %v2236, 95
        %v2459 = vpop.permute.xlu0 %2458
        %2460 = vrot.lane.b32.xlu0 %v2257, 95
        %v2461 = vpop.permute.xlu0 %2460
        %2462 = vrot.lane.b32.xlu0 %v2258, 95
        %v2463 = vpop.permute.xlu0 %2462
        %2464 = vrot.lane.b32.xlu0 %v2259, 95
        %v2465 = vpop.permute.xlu0 %2464
        %2466 = vrot.lane.b32.xlu0 %v2260, 95
        %v2467 = vpop.permute.xlu0 %2466
        %2468 = vrot.lane.b32.xlu0 %v2261, 95
        %v2469 = vpop.permute.xlu0 %2468
        %2470 = vrot.lane.b32.xlu0 %v2262, 95
        %v2471 = vpop.permute.xlu0 %2470
        %2472 = vrot.lane.b32.xlu0 %v2263, 95
        %v2473 = vpop.permute.xlu0 %2472
        %2474 = vrot.lane.b32.xlu0 %v2264, 95
        %v2475 = vpop.permute.xlu0 %2474
        %2476 = vrot.lane.b32.xlu0 %v2265, 95
        %v2477 = vpop.permute.xlu0 %2476
        %2478 = vrot.lane.b32.xlu0 %v2286, 95
        %v2479 = vpop.permute.xlu0 %2478
        %2480 = vrot.lane.b32.xlu0 %v2287, 95
        %v2481 = vpop.permute.xlu0 %2480
        %2482 = vrot.lane.b32.xlu0 %v2288, 95
        %v2483 = vpop.permute.xlu0 %2482
        %2484 = vrot.lane.b32.xlu0 %v2289, 95
        %v2485 = vpop.permute.xlu0 %2484
        %2486 = vrot.lane.b32.xlu0 %v2290, 95
        %v2487 = vpop.permute.xlu0 %2486
        %2488 = vrot.lane.b32.xlu0 %v2291, 95
        %v2489 = vpop.permute.xlu0 %2488
        %2490 = vrot.lane.b32.xlu0 %v2292, 95
        %v2491 = vpop.permute.xlu0 %2490
        %2492 = vrot.lane.b32.xlu0 %v2293, 95
        %v2493 = vpop.permute.xlu0 %2492
        %2494 = vrot.lane.b32.xlu0 %v2294, 95
        %v2495 = vpop.permute.xlu0 %2494
        %2496 = vrot.lane.b32.xlu0 %v2315, 95
        %v2497 = vpop.permute.xlu0 %2496
        %2498 = vrot.lane.b32.xlu0 %v2316, 95
        %v2499 = vpop.permute.xlu0 %2498
        %2500 = vrot.lane.b32.xlu0 %v2317, 95
        %v2501 = vpop.permute.xlu0 %2500
        %2502 = vrot.lane.b32.xlu0 %v2318, 95
        %v2503 = vpop.permute.xlu0 %2502
        %2504 = vrot.lane.b32.xlu0 %v2319, 95
        %v2505 = vpop.permute.xlu0 %2504
        %2506 = vrot.lane.b32.xlu0 %v2320, 95
        %v2507 = vpop.permute.xlu0 %2506
        %2508 = vrot.lane.b32.xlu0 %v2321, 95
        %v2509 = vpop.permute.xlu0 %2508
        %2510 = vrot.lane.b32.xlu0 %v2322, 95
        %v2511 = vpop.permute.xlu0 %2510
        %2512 = vrot.lane.b32.xlu0 %v2323, 95
        %v2513 = vpop.permute.xlu0 %2512
        %2514 = vrot.lane.b32.xlu0 %v2344, 95
        %v2515 = vpop.permute.xlu0 %2514
        %2516 = vrot.lane.b32.xlu0 %v2345, 95
        %v2517 = vpop.permute.xlu0 %2516
        %2518 = vrot.lane.b32.xlu0 %v2346, 95
        %v2519 = vpop.permute.xlu0 %2518
        %2520 = vrot.lane.b32.xlu0 %v2347, 95
        %v2521 = vpop.permute.xlu0 %2520
        %2522 = vrot.lane.b32.xlu0 %v2348, 95
        %v2523 = vpop.permute.xlu0 %2522
        %2524 = vrot.lane.b32.xlu0 %v2349, 95
        %v2525 = vpop.permute.xlu0 %2524
        %2526 = vrot.lane.b32.xlu0 %v2350, 95
        %v2527 = vpop.permute.xlu0 %2526
        %2528 = vrot.lane.b32.xlu0 %v2351, 95
        %v2529 = vpop.permute.xlu0 %2528
        %2530 = vrot.lane.b32.xlu0 %v2352, 95
        %v2531 = vpop.permute.xlu0 %2530
        %2532 = vrot.lane.b32.xlu0 %v2373, 95
        %v2533 = vpop.permute.xlu0 %2532
        %2534 = vrot.lane.b32.xlu0 %v2374, 95
        %v2535 = vpop.permute.xlu0 %2534
        %2536 = vrot.lane.b32.xlu0 %v2375, 95
        %v2537 = vpop.permute.xlu0 %2536
        %2538 = vrot.lane.b32.xlu0 %v2376, 95
        %v2539 = vpop.permute.xlu0 %2538
        %2540 = vrot.lane.b32.xlu0 %v2377, 95
        %v2541 = vpop.permute.xlu0 %2540
        %2542 = vrot.lane.b32.xlu0 %v2378, 95
        %v2543 = vpop.permute.xlu0 %2542
        %2544 = vrot.lane.b32.xlu0 %v2379, 95
        %v2545 = vpop.permute.xlu0 %2544
        %2546 = vrot.lane.b32.xlu0 %v2380, 95
        %v2547 = vpop.permute.xlu0 %2546
        %2548 = vrot.lane.b32.xlu0 %v2381, 95
        %v2549 = vpop.permute.xlu0 %2548
        %v2550 = vsel %vm1502, %v2389, %v2391
        %v2551 = vsel %vm1502, %v2391, %v2393
        %v2552 = vsel %vm1502, %v2393, %v2395
        %v2553 = vsel %vm1502, %v2395, %v2397
        %v2554 = vsel %vm1502, %v2397, %v2399
        %v2555 = vsel %vm1502, %v2399, %v2401
        %v2556 = vsel %vm1502, %v2401, %v2403
        %v2557 = vsel %vm1502, %v2403, %v2405
        %v2558 = vsel %vm1502, %v2407, %v2409
        %v2559 = vsel %vm1502, %v2409, %v2411
        %v2560 = vsel %vm1502, %v2411, %v2413
        %v2561 = vsel %vm1502, %v2413, %v2415
        %v2562 = vsel %vm1502, %v2415, %v2417
        %v2563 = vsel %vm1502, %v2417, %v2419
        %v2564 = vsel %vm1502, %v2419, %v2421
        %v2565 = vsel %vm1502, %v2421, %v2423
        %v2566 = vsel %vm1502, %v2425, %v2427
        %v2567 = vsel %vm1502, %v2427, %v2429
        %v2568 = vsel %vm1502, %v2429, %v2431
        %v2569 = vsel %vm1502, %v2431, %v2433
        %v2570 = vsel %vm1502, %v2433, %v2435
        %v2571 = vsel %vm1502, %v2435, %v2437
        %v2572 = vsel %vm1502, %v2437, %v2439
        %v2573 = vsel %vm1502, %v2439, %v2441
        %v2574 = vsel %vm1502, %v2443, %v2445
        %v2575 = vsel %vm1502, %v2445, %v2447
        %v2576 = vsel %vm1502, %v2447, %v2449
        %v2577 = vsel %vm1502, %v2449, %v2451
        %v2578 = vsel %vm1502, %v2451, %v2453
        %v2579 = vsel %vm1502, %v2453, %v2455
        %v2580 = vsel %vm1502, %v2455, %v2457
        %v2581 = vsel %vm1502, %v2457, %v2459
        %v2582 = vsel %vm1502, %v2461, %v2463
        %v2583 = vsel %vm1502, %v2463, %v2465
        %v2584 = vsel %vm1502, %v2465, %v2467
        %v2585 = vsel %vm1502, %v2467, %v2469
        %v2586 = vsel %vm1502, %v2469, %v2471
        %v2587 = vsel %vm1502, %v2471, %v2473
        %v2588 = vsel %vm1502, %v2473, %v2475
        %v2589 = vsel %vm1502, %v2475, %v2477
        %v2590 = vsel %vm1502, %v2479, %v2481
        %v2591 = vsel %vm1502, %v2481, %v2483
        %v2592 = vsel %vm1502, %v2483, %v2485
        %v2593 = vsel %vm1502, %v2485, %v2487
        %v2594 = vsel %vm1502, %v2487, %v2489
        %v2595 = vsel %vm1502, %v2489, %v2491
        %v2596 = vsel %vm1502, %v2491, %v2493
        %v2597 = vsel %vm1502, %v2493, %v2495
        %v2598 = vsel %vm1502, %v2497, %v2499
        %v2599 = vsel %vm1502, %v2499, %v2501
        %v2600 = vsel %vm1502, %v2501, %v2503
        %v2601 = vsel %vm1502, %v2503, %v2505
        %v2602 = vsel %vm1502, %v2505, %v2507
        %v2603 = vsel %vm1502, %v2507, %v2509
        %v2604 = vsel %vm1502, %v2509, %v2511
        %v2605 = vsel %vm1502, %v2511, %v2513
        %v2606 = vsel %vm1502, %v2515, %v2517
        %v2607 = vsel %vm1502, %v2517, %v2519
        %v2608 = vsel %vm1502, %v2519, %v2521
        %v2609 = vsel %vm1502, %v2521, %v2523
        %v2610 = vsel %vm1502, %v2523, %v2525
        %v2611 = vsel %vm1502, %v2525, %v2527
        %v2612 = vsel %vm1502, %v2527, %v2529
        %v2613 = vsel %vm1502, %v2529, %v2531
        %v2614 = vsel %vm1502, %v2533, %v2535
        %v2615 = vsel %vm1502, %v2535, %v2537
        %v2616 = vsel %vm1502, %v2537, %v2539
        %v2617 = vsel %vm1502, %v2539, %v2541
        %v2618 = vsel %vm1502, %v2541, %v2543
        %v2619 = vsel %vm1502, %v2543, %v2545
        %v2620 = vsel %vm1502, %v2545, %v2547
        %v2621 = vsel %vm1502, %v2547, %v2549
        %v2704 = vsel %vm1071, %v2135, 0
        %2706 = vmatprep.subr.mxu0 0.0
        %2707 = vmatpush1.msra.mxu0 0.0
        %2708 = vmatprep.subr.mxu0 0.0
        %2709 = vmatpush1.msra.mxu0 0.0
        %2710 = vmatprep.subr.mxu0 0.0
        %2711 = vmatpush1.msra.mxu0 0.0
        %2712 = vmatprep.subr.mxu0 0.0
        %2713 = vmatpush1.msra.mxu0 0.0
        %2714 = vmatprep.subr.mxu0 0.0
        %2715 = vmatpush1.msra.mxu0 0.0
        %2716 = vmatprep.subr.mxu0 0.0
        %2717 = vmatpush1.msra.mxu0 0.0
        %2718 = vmatprep.subr.mxu0 0.0
        %2719 = vmatpush1.msra.mxu0 0.0
        %2720 = vmatprep.subr.mxu0 %v2615
        %2721 = vmatpush1.msra.mxu0 %v2614
        %2722 = vmatprep.subr.mxu0 %v2607
        %2723 = vmatpush1.msra.mxu0 %v2606
        %2724 = vmatprep.subr.mxu0 %v2599
        %2725 = vmatpush1.msra.mxu0 %v2598
        %2726 = vmatprep.subr.mxu0 %v2591
        %2727 = vmatpush1.msra.mxu0 %v2590
        %2728 = vmatprep.subr.mxu0 %v2583
        %2729 = vmatpush1.msra.mxu0 %v2582
        %2730 = vmatprep.subr.mxu0 %v2575
        %2731 = vmatpush1.msra.mxu0 %v2574
        %2732 = vmatprep.subr.mxu0 %v2567
        %2733 = vmatpush1.msra.mxu0 %v2566
        %2734 = vmatprep.subr.mxu0 %v2559
        %2735 = vmatpush1.msra.mxu0 %v2558
        %2736 = vmatprep.subr.mxu0 %v2551
        %2737 = vmatpush1.msra.mxu0 %v2550
        %2738 = vmatprep.subr.mxu0 0.0
        %2739 = vmatpush2.msra.mxu0 0.0
        %2740 = vmatprep.subr.mxu0 0.0
        %2741 = vmatpush2.msra.mxu0 0.0
        %2742 = vmatprep.subr.mxu0 0.0
        %2743 = vmatpush2.msra.mxu0 0.0
        %2744 = vmatprep.subr.mxu0 0.0
        %2745 = vmatpush2.msra.mxu0 0.0
        %2746 = vmatprep.subr.mxu0 0.0
        %2747 = vmatpush2.msra.mxu0 0.0
        %2748 = vmatprep.subr.mxu0 0.0
        %2749 = vmatpush2.msra.mxu0 0.0
        %2750 = vmatprep.subr.mxu0 0.0
        %2751 = vmatpush2.msra.mxu0 0.0
        %2752 = vmatprep.subr.mxu0 0.0
        %2753 = vmatpush2.msra.mxu0 0.0
        %2754 = vmatprep.subr.mxu0 0.0
        %2755 = vmatpush2.msra.mxu0 0.0
        %2756 = vmatprep.subr.mxu0 0.0
        %2757 = vmatpush2.msra.mxu0 0.0
        %2758 = vmatprep.subr.mxu0 0.0
        %2759 = vmatpush2.msra.mxu0 0.0
        %2760 = vmatprep.subr.mxu0 0.0
        %2761 = vmatpush2.msra.mxu0 0.0
        %2762 = vmatprep.subr.mxu0 0.0
        %2763 = vmatpush2.msra.mxu0 0.0
        %2764 = vmatprep.subr.mxu0 0.0
        %2765 = vmatpush2.msra.mxu0 0.0
        %2766 = vmatprep.subr.mxu0 0.0
        %2767 = vmatpush2.msra.mxu0 0.0
        %2768 = vmatprep.subr.mxu0 0.0
        %2769 = vmatpush2.msra.mxu0 0.0
        %2770 = vmatprep.mubr.f32.mxu0 0.0
        %2771 = vmatmul.mubr.f32.gmra.mxu0 %v2704
        %v2772 = vpop.f32.mrf.mxu0
        %v2773 = vadd.f32 %v2386, %v2772
        %v2774 = vpop.f32.mrf.mxu0
        %v2775 = vadd.f32 %v2386, %v2774
        %2776 = vdwg.mxu0
        %2777 = vmatprep.subr.mxu0 0.0
        %2778 = vmatpush1.msra.mxu0 0.0
        %2779 = vmatprep.subr.mxu0 0.0
        %2780 = vmatpush1.msra.mxu0 0.0
        %2781 = vmatprep.subr.mxu0 0.0
        %2782 = vmatpush1.msra.mxu0 0.0
        %2783 = vmatprep.subr.mxu0 0.0
        %2784 = vmatpush1.msra.mxu0 0.0
        %2785 = vmatprep.subr.mxu0 0.0
        %2786 = vmatpush1.msra.mxu0 0.0
        %2787 = vmatprep.subr.mxu0 0.0
        %2788 = vmatpush1.msra.mxu0 0.0
        %2789 = vmatprep.subr.mxu0 0.0
        %2790 = vmatpush1.msra.mxu0 0.0
        %2791 = vmatprep.subr.mxu0 %v2617
        %2792 = vmatpush1.msra.mxu0 %v2616
        %2793 = vmatprep.subr.mxu0 %v2609
        %2794 = vmatpush1.msra.mxu0 %v2608
        %2795 = vmatprep.subr.mxu0 %v2601
        %2796 = vmatpush1.msra.mxu0 %v2600
        %2797 = vmatprep.subr.mxu0 %v2593
        %2798 = vmatpush1.msra.mxu0 %v2592
        %2799 = vmatprep.subr.mxu0 %v2585
        %2800 = vmatpush1.msra.mxu0 %v2584
        %2801 = vmatprep.subr.mxu0 %v2577
        %2802 = vmatpush1.msra.mxu0 %v2576
        %2803 = vmatprep.subr.mxu0 %v2569
        %2804 = vmatpush1.msra.mxu0 %v2568
        %2805 = vmatprep.subr.mxu0 %v2561
        %2806 = vmatpush1.msra.mxu0 %v2560
        %2807 = vmatprep.subr.mxu0 %v2553
        %2808 = vmatpush1.msra.mxu0 %v2552
        %2809 = vmatprep.subr.mxu0 0.0
        %2810 = vmatpush2.msra.mxu0 0.0
        %2811 = vmatprep.subr.mxu0 0.0
        %2812 = vmatpush2.msra.mxu0 0.0
        %2813 = vmatprep.subr.mxu0 0.0
        %2814 = vmatpush2.msra.mxu0 0.0
        %2815 = vmatprep.subr.mxu0 0.0
        %2816 = vmatpush2.msra.mxu0 0.0
        %2817 = vmatprep.subr.mxu0 0.0
        %2818 = vmatpush2.msra.mxu0 0.0
        %2819 = vmatprep.subr.mxu0 0.0
        %2820 = vmatpush2.msra.mxu0 0.0
        %2821 = vmatprep.subr.mxu0 0.0
        %2822 = vmatpush2.msra.mxu0 0.0
        %2823 = vmatprep.subr.mxu0 0.0
        %2824 = vmatpush2.msra.mxu0 0.0
        %2825 = vmatprep.subr.mxu0 0.0
        %2826 = vmatpush2.msra.mxu0 0.0
        %2827 = vmatprep.subr.mxu0 0.0
        %2828 = vmatpush2.msra.mxu0 0.0
        %2829 = vmatprep.subr.mxu0 0.0
        %2830 = vmatpush2.msra.mxu0 0.0
        %2831 = vmatprep.subr.mxu0 0.0
        %2832 = vmatpush2.msra.mxu0 0.0
        %2833 = vmatprep.subr.mxu0 0.0
        %2834 = vmatpush2.msra.mxu0 0.0
        %2835 = vmatprep.subr.mxu0 0.0
        %2836 = vmatpush2.msra.mxu0 0.0
        %2837 = vmatprep.subr.mxu0 0.0
        %2838 = vmatpush2.msra.mxu0 0.0
        %2839 = vmatprep.subr.mxu0 0.0
        %2840 = vmatpush2.msra.mxu0 0.0
        %2841 = vmatprep.mubr.f32.mxu0 0.0
        %2842 = vmatmul.mubr.f32.gmra.mxu0 %v2704
        %v2843 = vpop.f32.mrf.mxu0
        %v2844 = vadd.f32 %v2386, %v2843
        %v2845 = vpop.f32.mrf.mxu0
        %v2846 = vadd.f32 %v2386, %v2845
        %2847 = vdwg.mxu0
        %2848 = vmatprep.subr.mxu0 0.0
        %2849 = vmatpush1.msra.mxu0 0.0
        %2850 = vmatprep.subr.mxu0 0.0
        %2851 = vmatpush1.msra.mxu0 0.0
        %2852 = vmatprep.subr.mxu0 0.0
        %2853 = vmatpush1.msra.mxu0 0.0
        %2854 = vmatprep.subr.mxu0 0.0
        %2855 = vmatpush1.msra.mxu0 0.0
        %2856 = vmatprep.subr.mxu0 0.0
        %2857 = vmatpush1.msra.mxu0 0.0
        %2858 = vmatprep.subr.mxu0 0.0
        %2859 = vmatpush1.msra.mxu0 0.0
        %2860 = vmatprep.subr.mxu0 0.0
        %2861 = vmatpush1.msra.mxu0 0.0
        %2862 = vmatprep.subr.mxu0 %v2619
        %2863 = vmatpush1.msra.mxu0 %v2618
        %2864 = vmatprep.subr.mxu0 %v2611
        %2865 = vmatpush1.msra.mxu0 %v2610
        %2866 = vmatprep.subr.mxu0 %v2603
        %2867 = vmatpush1.msra.mxu0 %v2602
        %2868 = vmatprep.subr.mxu0 %v2595
        %2869 = vmatpush1.msra.mxu0 %v2594
        %2870 = vmatprep.subr.mxu0 %v2587
        %2871 = vmatpush1.msra.mxu0 %v2586
        %2872 = vmatprep.subr.mxu0 %v2579
        %2873 = vmatpush1.msra.mxu0 %v2578
        %2874 = vmatprep.subr.mxu0 %v2571
        %2875 = vmatpush1.msra.mxu0 %v2570
        %2876 = vmatprep.subr.mxu0 %v2563
        %2877 = vmatpush1.msra.mxu0 %v2562
        %2878 = vmatprep.subr.mxu0 %v2555
        %2879 = vmatpush1.msra.mxu0 %v2554
        %2880 = vmatprep.subr.mxu0 0.0
        %2881 = vmatpush2.msra.mxu0 0.0
        %2882 = vmatprep.subr.mxu0 0.0
        %2883 = vmatpush2.msra.mxu0 0.0
        %2884 = vmatprep.subr.mxu0 0.0
        %2885 = vmatpush2.msra.mxu0 0.0
        %2886 = vmatprep.subr.mxu0 0.0
        %2887 = vmatpush2.msra.mxu0 0.0
        %2888 = vmatprep.subr.mxu0 0.0
        %2889 = vmatpush2.msra.mxu0 0.0
        %2890 = vmatprep.subr.mxu0 0.0
        %2891 = vmatpush2.msra.mxu0 0.0
        %2892 = vmatprep.subr.mxu0 0.0
        %2893 = vmatpush2.msra.mxu0 0.0
        %2894 = vmatprep.subr.mxu0 0.0
        %2895 = vmatpush2.msra.mxu0 0.0
        %2896 = vmatprep.subr.mxu0 0.0
        %2897 = vmatpush2.msra.mxu0 0.0
        %2898 = vmatprep.subr.mxu0 0.0
        %2899 = vmatpush2.msra.mxu0 0.0
        %2900 = vmatprep.subr.mxu0 0.0
        %2901 = vmatpush2.msra.mxu0 0.0
        %2902 = vmatprep.subr.mxu0 0.0
        %2903 = vmatpush2.msra.mxu0 0.0
        %2904 = vmatprep.subr.mxu0 0.0
        %2905 = vmatpush2.msra.mxu0 0.0
        %2906 = vmatprep.subr.mxu0 0.0
        %2907 = vmatpush2.msra.mxu0 0.0
        %2908 = vmatprep.subr.mxu0 0.0
        %2909 = vmatpush2.msra.mxu0 0.0
        %2910 = vmatprep.subr.mxu0 0.0
        %2911 = vmatpush2.msra.mxu0 0.0
        %2912 = vmatprep.mubr.f32.mxu0 0.0
        %2913 = vmatmul.mubr.f32.gmra.mxu0 %v2704
        %v2914 = vpop.f32.mrf.mxu0
        %v2915 = vadd.f32 %v2386, %v2914
        %v2916 = vpop.f32.mrf.mxu0
        %v2917 = vadd.f32 %v2386, %v2916
        %2918 = vdwg.mxu0
        %2919 = vmatprep.subr.mxu0 0.0
        %2920 = vmatpush1.msra.mxu0 0.0
        %2921 = vmatprep.subr.mxu0 0.0
        %2922 = vmatpush1.msra.mxu0 0.0
        %2923 = vmatprep.subr.mxu0 0.0
        %2924 = vmatpush1.msra.mxu0 0.0
        %2925 = vmatprep.subr.mxu0 0.0
        %2926 = vmatpush1.msra.mxu0 0.0
        %2927 = vmatprep.subr.mxu0 0.0
        %2928 = vmatpush1.msra.mxu0 0.0
        %2929 = vmatprep.subr.mxu0 0.0
        %2930 = vmatpush1.msra.mxu0 0.0
        %2931 = vmatprep.subr.mxu0 0.0
        %2932 = vmatpush1.msra.mxu0 0.0
        %2933 = vmatprep.subr.mxu0 %v2621
        %2934 = vmatpush1.msra.mxu0 %v2620
        %2935 = vmatprep.subr.mxu0 %v2613
        %2936 = vmatpush1.msra.mxu0 %v2612
        %2937 = vmatprep.subr.mxu0 %v2605
        %2938 = vmatpush1.msra.mxu0 %v2604
        %2939 = vmatprep.subr.mxu0 %v2597
        %2940 = vmatpush1.msra.mxu0 %v2596
        %2941 = vmatprep.subr.mxu0 %v2589
        %2942 = vmatpush1.msra.mxu0 %v2588
        %2943 = vmatprep.subr.mxu0 %v2581
        %2944 = vmatpush1.msra.mxu0 %v2580
        %2945 = vmatprep.subr.mxu0 %v2573
        %2946 = vmatpush1.msra.mxu0 %v2572
        %2947 = vmatprep.subr.mxu0 %v2565
        %2948 = vmatpush1.msra.mxu0 %v2564
        %2949 = vmatprep.subr.mxu0 %v2557
        %2950 = vmatpush1.msra.mxu0 %v2556
        %2951 = vmatprep.subr.mxu0 0.0
        %2952 = vmatpush2.msra.mxu0 0.0
        %2953 = vmatprep.subr.mxu0 0.0
        %2954 = vmatpush2.msra.mxu0 0.0
        %2955 = vmatprep.subr.mxu0 0.0
        %2956 = vmatpush2.msra.mxu0 0.0
        %2957 = vmatprep.subr.mxu0 0.0
        %2958 = vmatpush2.msra.mxu0 0.0
        %2959 = vmatprep.subr.mxu0 0.0
        %2960 = vmatpush2.msra.mxu0 0.0
        %2961 = vmatprep.subr.mxu0 0.0
        %2962 = vmatpush2.msra.mxu0 0.0
        %2963 = vmatprep.subr.mxu0 0.0
        %2964 = vmatpush2.msra.mxu0 0.0
        %2965 = vmatprep.subr.mxu0 0.0
        %2966 = vmatpush2.msra.mxu0 0.0
        %2967 = vmatprep.subr.mxu0 0.0
        %2968 = vmatpush2.msra.mxu0 0.0
        %2969 = vmatprep.subr.mxu0 0.0
        %2970 = vmatpush2.msra.mxu0 0.0
        %2971 = vmatprep.subr.mxu0 0.0
        %2972 = vmatpush2.msra.mxu0 0.0
        %2973 = vmatprep.subr.mxu0 0.0
        %2974 = vmatpush2.msra.mxu0 0.0
        %2975 = vmatprep.subr.mxu0 0.0
        %2976 = vmatpush2.msra.mxu0 0.0
        %2977 = vmatprep.subr.mxu0 0.0
        %2978 = vmatpush2.msra.mxu0 0.0
        %2979 = vmatprep.subr.mxu0 0.0
        %2980 = vmatpush2.msra.mxu0 0.0
        %2981 = vmatprep.subr.mxu0 0.0
        %2982 = vmatpush2.msra.mxu0 0.0
        %2983 = vmatprep.mubr.f32.mxu0 0.0
        %2984 = vmatmul.mubr.f32.gmra.mxu0 %v2704
        %v2985 = vpop.f32.mrf.mxu0
        %v2986 = vadd.f32 %v2386, %v2985
        %v2987 = vpop.f32.mrf.mxu0
        %v2988 = vadd.f32 %v2386, %v2987
        %2989 = vdwg.mxu0
        %2990 = vmatprep.subr.mxu0 0.0
        %2991 = vmatpush1.msra.mxu0 0.0
        %2992 = vmatprep.subr.mxu0 0.0
        %2993 = vmatpush1.msra.mxu0 0.0
        %2994 = vmatprep.subr.mxu0 0.0
        %2995 = vmatpush1.msra.mxu0 0.0
        %2996 = vmatprep.subr.mxu0 0.0
        %2997 = vmatpush1.msra.mxu0 0.0
        %2998 = vmatprep.subr.mxu0 0.0
        %2999 = vmatpush1.msra.mxu0 0.0
        %3000 = vmatprep.subr.mxu0 0.0
        %3001 = vmatpush1.msra.mxu0 0.0
        %3002 = vmatprep.subr.mxu0 0.0
        %3003 = vmatpush1.msra.mxu0 0.0
        %3004 = vmatprep.subr.mxu0 0.0
        %3005 = vmatpush1.msra.mxu0 %v2549
        %3006 = vmatprep.subr.mxu0 0.0
        %3007 = vmatpush1.msra.mxu0 %v2531
        %3008 = vmatprep.subr.mxu0 0.0
        %3009 = vmatpush1.msra.mxu0 %v2513
        %3010 = vmatprep.subr.mxu0 0.0
        %3011 = vmatpush1.msra.mxu0 %v2495
        %3012 = vmatprep.subr.mxu0 0.0
        %3013 = vmatpush1.msra.mxu0 %v2477
        %3014 = vmatprep.subr.mxu0 0.0
        %3015 = vmatpush1.msra.mxu0 %v2459
        %3016 = vmatprep.subr.mxu0 0.0
        %3017 = vmatpush1.msra.mxu0 %v2441
        %3018 = vmatprep.subr.mxu0 0.0
        %3019 = vmatpush1.msra.mxu0 %v2423
        %3020 = vmatprep.subr.mxu0 0.0
        %3021 = vmatpush1.msra.mxu0 %v2405
        %3022 = vmatprep.subr.mxu0 0.0
        %3023 = vmatpush2.msra.mxu0 0.0
        %3024 = vmatprep.subr.mxu0 0.0
        %3025 = vmatpush2.msra.mxu0 0.0
        %3026 = vmatprep.subr.mxu0 0.0
        %3027 = vmatpush2.msra.mxu0 0.0
        %3028 = vmatprep.subr.mxu0 0.0
        %3029 = vmatpush2.msra.mxu0 0.0
        %3030 = vmatprep.subr.mxu0 0.0
        %3031 = vmatpush2.msra.mxu0 0.0
        %3032 = vmatprep.subr.mxu0 0.0
        %3033 = vmatpush2.msra.mxu0 0.0
        %3034 = vmatprep.subr.mxu0 0.0
        %3035 = vmatpush2.msra.mxu0 0.0
        %3036 = vmatprep.subr.mxu0 0.0
        %3037 = vmatpush2.msra.mxu0 0.0
        %3038 = vmatprep.subr.mxu0 0.0
        %3039 = vmatpush2.msra.mxu0 0.0
        %3040 = vmatprep.subr.mxu0 0.0
        %3041 = vmatpush2.msra.mxu0 0.0
        %3042 = vmatprep.subr.mxu0 0.0
        %3043 = vmatpush2.msra.mxu0 0.0
        %3044 = vmatprep.subr.mxu0 0.0
        %3045 = vmatpush2.msra.mxu0 0.0
        %3046 = vmatprep.subr.mxu0 0.0
        %3047 = vmatpush2.msra.mxu0 0.0
        %3048 = vmatprep.subr.mxu0 0.0
        %3049 = vmatpush2.msra.mxu0 0.0
        %3050 = vmatprep.subr.mxu0 0.0
        %3051 = vmatpush2.msra.mxu0 0.0
        %3052 = vmatprep.subr.mxu0 0.0
        %3053 = vmatpush2.msra.mxu0 0.0
        %3054 = vmatprep.mubr.f32.mxu0 0.0
        %3055 = vmatmul.mubr.f32.gmra.mxu0 %v2704
        %v3056 = vpop.f32.mrf.mxu0
        %v3057 = vadd.f32 %v2386, %v3056
        %v3058 = vpop.f32.mrf.mxu0
        %3059 = vdwg.mxu0
        %v3060 = vmax.f32 %v2773, 0.0
        %v3061 = vmax.f32 %v2775, 0.0
        %v3062 = vmax.f32 %v2844, 0.0
        %v3063 = vmax.f32 %v2846, 0.0
        %v3064 = vmax.f32 %v2915, 0.0
        %v3065 = vmax.f32 %v2917, 0.0
        %v3066 = vmax.f32 %v2986, 0.0
        %v3067 = vmax.f32 %v2988, 0.0
        %v3068 = vmax.f32 %v3057, 0.0
        %v3069 = vmul.f32 %v3060, %v2027
        %v3070 = vmul.f32 %v3061, %v2031
        %v3071 = vmul.f32 %v3062, %v2035
        %v3072 = vmul.f32 %v3063, %v2039
        %v3073 = vmul.f32 %v3064, %v2043
        %v3074 = vmul.f32 %v3065, %v2047
        %v3075 = vmul.f32 %v3066, %v2051
        %v3076 = vmul.f32 %v3067, %v2055
        %v3077 = vmul.f32 %v3068, %v2059
        %3087 = vrot.lane.b32.xlu0 %v3069, 68
        %v3088 = vpop.permute.xlu0 %3087
        %3089 = vrot.lane.b32.xlu0 %v3070, 68
        %v3090 = vpop.permute.xlu0 %3089
        %3091 = vrot.lane.b32.xlu0 %v3071, 68
        %v3092 = vpop.permute.xlu0 %3091
        %3093 = vrot.lane.b32.xlu0 %v3072, 68
        %v3094 = vpop.permute.xlu0 %3093
        %3095 = vrot.lane.b32.xlu0 %v3073, 68
        %v3096 = vpop.permute.xlu0 %3095
        %3097 = vrot.lane.b32.xlu0 %v3074, 68
        %v3098 = vpop.permute.xlu0 %3097
        %3099 = vrot.lane.b32.xlu0 %v3075, 68
        %v3100 = vpop.permute.xlu0 %3099
        %3101 = vrot.lane.b32.xlu0 %v3076, 68
        %v3102 = vpop.permute.xlu0 %3101
        %3103 = vrot.lane.b32.xlu0 %v3077, 68
        %v3104 = vpop.permute.xlu0 %3103
        %v3105 = vsel %vm1073, %v3088, %v3090
        %v3106 = vsel %vm1073, %v3090, %v3092
        %v3107 = vsel %vm1073, %v3092, %v3094
        %v3108 = vsel %vm1073, %v3094, %v3096
        %v3109 = vsel %vm1073, %v3096, %v3098
        %v3110 = vsel %vm1073, %v3098, %v3100
        %v3111 = vsel %vm1073, %v3100, %v3102
        %v3112 = vsel %vm1073, %v3102, %v3104
        %3123 = vst.msk [vmem:[#allocation3] sm:$0xff] %vm2123, %v3088
        %3124 = vst [vmem:[#allocation3 + $0x8] sm:$0xff] %v3105
        %3125 = vst [vmem:[#allocation3 + $0x10] sm:$0xff] %v3106
        %3126 = vst [vmem:[#allocation3 + $0x18] sm:$0xff] %v3107
        %3127 = vst [vmem:[#allocation3 + $0x20] sm:$0xff] %v3108
        %3128 = vst [vmem:[#allocation3 + $0x28] sm:$0xff] %v3109
        %3129 = vst [vmem:[#allocation3 + $0x30] sm:$0xff] %v3110
        %3130 = vst [vmem:[#allocation3 + $0x38] sm:$0xff] %v3111
        %3131 = vst [vmem:[#allocation3 + $0x40] sm:$0xff] %v3112
        %3132 = vst.msk [vmem:[#allocation3 + $0x48] sm:$0xff] %vm2133, %v3104
        %v3133 = vld [vmem:[%s6] sm:$0xff]
        %v3134 = vld [vmem:[#allocation3] sm:$0xff]
        %v3135 = vld [vmem:[#allocation3 + $0x8] sm:$0xff]
        %v3136 = vld [vmem:[#allocation3 + $0x10] sm:$0xff]
        %v3137 = vld [vmem:[#allocation3 + $0x18] sm:$0xff]
        %v3138 = vld [vmem:[#allocation3 + $0x20] sm:$0xff]
        %v3139 = vld [vmem:[#allocation3 + $0x28] sm:$0xff]
        %v3140 = vld [vmem:[#allocation3 + $0x30] sm:$0xff]
        %v3141 = vld [vmem:[#allocation3 + $0x38] sm:$0xff]
        %v3142 = vld [vmem:[#allocation3 + $0x40] sm:$0xff]
        %v3143 = vld [vmem:[#allocation3 + $0x48] sm:$0xff]
        %3153 = vrot.lane.b32.xlu0 %v3134, 127
        %v3154 = vpop.permute.xlu0 %3153
        %3155 = vrot.lane.b32.xlu0 %v3135, 127
        %v3156 = vpop.permute.xlu0 %3155
        %3157 = vrot.lane.b32.xlu0 %v3136, 127
        %v3158 = vpop.permute.xlu0 %3157
        %3159 = vrot.lane.b32.xlu0 %v3137, 127
        %v3160 = vpop.permute.xlu0 %3159
        %3161 = vrot.lane.b32.xlu0 %v3138, 127
        %v3162 = vpop.permute.xlu0 %3161
        %3163 = vrot.lane.b32.xlu0 %v3139, 127
        %v3164 = vpop.permute.xlu0 %3163
        %3165 = vrot.lane.b32.xlu0 %v3140, 127
        %v3166 = vpop.permute.xlu0 %3165
        %3167 = vrot.lane.b32.xlu0 %v3141, 127
        %v3168 = vpop.permute.xlu0 %3167
        %3169 = vrot.lane.b32.xlu0 %v3142, 127
        %v3170 = vpop.permute.xlu0 %3169
        %v3171 = vsel %vm1117, %v3154, %v3156
        %v3172 = vsel %vm1117, %v3156, %v3158
        %v3173 = vsel %vm1117, %v3158, %v3160
        %v3174 = vsel %vm1117, %v3160, %v3162
        %v3175 = vsel %vm1117, %v3162, %v3164
        %v3176 = vsel %vm1117, %v3164, %v3166
        %v3177 = vsel %vm1117, %v3166, %v3168
        %v3178 = vsel %vm1117, %v3168, %v3170
        %3179 = vrot.lane.b32.xlu0 %v3134, 126
        %v3180 = vpop.permute.xlu0 %3179
        %3181 = vrot.lane.b32.xlu0 %v3135, 126
        %v3182 = vpop.permute.xlu0 %3181
        %3183 = vrot.lane.b32.xlu0 %v3136, 126
        %v3184 = vpop.permute.xlu0 %3183
        %3185 = vrot.lane.b32.xlu0 %v3137, 126
        %v3186 = vpop.permute.xlu0 %3185
        %3187 = vrot.lane.b32.xlu0 %v3138, 126
        %v3188 = vpop.permute.xlu0 %3187
        %3189 = vrot.lane.b32.xlu0 %v3139, 126
        %v3190 = vpop.permute.xlu0 %3189
        %3191 = vrot.lane.b32.xlu0 %v3140, 126
        %v3192 = vpop.permute.xlu0 %3191
        %3193 = vrot.lane.b32.xlu0 %v3141, 126
        %v3194 = vpop.permute.xlu0 %3193
        %3195 = vrot.lane.b32.xlu0 %v3142, 126
        %v3196 = vpop.permute.xlu0 %3195
        %v3197 = vsel %vm1144, %v3180, %v3182
        %v3198 = vsel %vm1144, %v3182, %v3184
        %v3199 = vsel %vm1144, %v3184, %v3186
        %v3200 = vsel %vm1144, %v3186, %v3188
        %v3201 = vsel %vm1144, %v3188, %v3190
        %v3202 = vsel %vm1144, %v3190, %v3192
        %v3203 = vsel %vm1144, %v3192, %v3194
        %v3204 = vsel %vm1144, %v3194, %v3196
        %3206 = vrot.lane.b32.xlu0 %v3134, 94
        %v3207 = vpop.permute.xlu0 %3206
        %3208 = vrot.lane.b32.xlu0 %v3135, 94
        %v3209 = vpop.permute.xlu0 %3208
        %3210 = vrot.lane.b32.xlu0 %v3136, 94
        %v3211 = vpop.permute.xlu0 %3210
        %3212 = vrot.lane.b32.xlu0 %v3137, 94
        %v3213 = vpop.permute.xlu0 %3212
        %3214 = vrot.lane.b32.xlu0 %v3138, 94
        %v3215 = vpop.permute.xlu0 %3214
        %3216 = vrot.lane.b32.xlu0 %v3139, 94
        %v3217 = vpop.permute.xlu0 %3216
        %3218 = vrot.lane.b32.xlu0 %v3140, 94
        %v3219 = vpop.permute.xlu0 %3218
        %3220 = vrot.lane.b32.xlu0 %v3141, 94
        %v3221 = vpop.permute.xlu0 %3220
        %3222 = vrot.lane.b32.xlu0 %v3142, 94
        %v3223 = vpop.permute.xlu0 %3222
        %3224 = vrot.lane.b32.xlu0 %v3143, 94
        %v3225 = vpop.permute.xlu0 %3224
        %v3226 = vsel %vm1174, %v3207, %v3209
        %v3227 = vsel %vm1174, %v3209, %v3211
        %v3228 = vsel %vm1174, %v3211, %v3213
        %v3229 = vsel %vm1174, %v3213, %v3215
        %v3230 = vsel %vm1174, %v3215, %v3217
        %v3231 = vsel %vm1174, %v3217, %v3219
        %v3232 = vsel %vm1174, %v3219, %v3221
        %v3233 = vsel %vm1174, %v3221, %v3223
        %v3234 = vsel %vm1174, %v3223, %v3225
        %3235 = vrot.lane.b32.xlu0 %v3134, 93
        %v3236 = vpop.permute.xlu0 %3235
        %3237 = vrot.lane.b32.xlu0 %v3135, 93
        %v3238 = vpop.permute.xlu0 %3237
        %3239 = vrot.lane.b32.xlu0 %v3136, 93
        %v3240 = vpop.permute.xlu0 %3239
        %3241 = vrot.lane.b32.xlu0 %v3137, 93
        %v3242 = vpop.permute.xlu0 %3241
        %3243 = vrot.lane.b32.xlu0 %v3138, 93
        %v3244 = vpop.permute.xlu0 %3243
        %3245 = vrot.lane.b32.xlu0 %v3139, 93
        %v3246 = vpop.permute.xlu0 %3245
        %3247 = vrot.lane.b32.xlu0 %v3140, 93
        %v3248 = vpop.permute.xlu0 %3247
        %3249 = vrot.lane.b32.xlu0 %v3141, 93
        %v3250 = vpop.permute.xlu0 %3249
        %3251 = vrot.lane.b32.xlu0 %v3142, 93
        %v3252 = vpop.permute.xlu0 %3251
        %3253 = vrot.lane.b32.xlu0 %v3143, 93
        %v3254 = vpop.permute.xlu0 %3253
        %v3255 = vsel %vm1204, %v3236, %v3238
        %v3256 = vsel %vm1204, %v3238, %v3240
        %v3257 = vsel %vm1204, %v3240, %v3242
        %v3258 = vsel %vm1204, %v3242, %v3244
        %v3259 = vsel %vm1204, %v3244, %v3246
        %v3260 = vsel %vm1204, %v3246, %v3248
        %v3261 = vsel %vm1204, %v3248, %v3250
        %v3262 = vsel %vm1204, %v3250, %v3252
        %v3263 = vsel %vm1204, %v3252, %v3254
        %3264 = vrot.lane.b32.xlu0 %v3134, 92
        %v3265 = vpop.permute.xlu0 %3264
        %3266 = vrot.lane.b32.xlu0 %v3135, 92
        %v3267 = vpop.permute.xlu0 %3266
        %3268 = vrot.lane.b32.xlu0 %v3136, 92
        %v3269 = vpop.permute.xlu0 %3268
        %3270 = vrot.lane.b32.xlu0 %v3137, 92
        %v3271 = vpop.permute.xlu0 %3270
        %3272 = vrot.lane.b32.xlu0 %v3138, 92
        %v3273 = vpop.permute.xlu0 %3272
        %3274 = vrot.lane.b32.xlu0 %v3139, 92
        %v3275 = vpop.permute.xlu0 %3274
        %3276 = vrot.lane.b32.xlu0 %v3140, 92
        %v3277 = vpop.permute.xlu0 %3276
        %3278 = vrot.lane.b32.xlu0 %v3141, 92
        %v3279 = vpop.permute.xlu0 %3278
        %3280 = vrot.lane.b32.xlu0 %v3142, 92
        %v3281 = vpop.permute.xlu0 %3280
        %3282 = vrot.lane.b32.xlu0 %v3143, 92
        %v3283 = vpop.permute.xlu0 %3282
        %v3284 = vsel %vm1234, %v3265, %v3267
        %v3285 = vsel %vm1234, %v3267, %v3269
        %v3286 = vsel %vm1234, %v3269, %v3271
        %v3287 = vsel %vm1234, %v3271, %v3273
        %v3288 = vsel %vm1234, %v3273, %v3275
        %v3289 = vsel %vm1234, %v3275, %v3277
        %v3290 = vsel %vm1234, %v3277, %v3279
        %v3291 = vsel %vm1234, %v3279, %v3281
        %v3292 = vsel %vm1234, %v3281, %v3283
        %3293 = vrot.lane.b32.xlu0 %v3134, 60
        %v3294 = vpop.permute.xlu0 %3293
        %3295 = vrot.lane.b32.xlu0 %v3135, 60
        %v3296 = vpop.permute.xlu0 %3295
        %3297 = vrot.lane.b32.xlu0 %v3136, 60
        %v3298 = vpop.permute.xlu0 %3297
        %3299 = vrot.lane.b32.xlu0 %v3137, 60
        %v3300 = vpop.permute.xlu0 %3299
        %3301 = vrot.lane.b32.xlu0 %v3138, 60
        %v3302 = vpop.permute.xlu0 %3301
        %3303 = vrot.lane.b32.xlu0 %v3139, 60
        %v3304 = vpop.permute.xlu0 %3303
        %3305 = vrot.lane.b32.xlu0 %v3140, 60
        %v3306 = vpop.permute.xlu0 %3305
        %3307 = vrot.lane.b32.xlu0 %v3141, 60
        %v3308 = vpop.permute.xlu0 %3307
        %3309 = vrot.lane.b32.xlu0 %v3142, 60
        %v3310 = vpop.permute.xlu0 %3309
        %3311 = vrot.lane.b32.xlu0 %v3143, 60
        %v3312 = vpop.permute.xlu0 %3311
        %v3313 = vsel %vm1264, %v3294, %v3296
        %v3314 = vsel %vm1264, %v3296, %v3298
        %v3315 = vsel %vm1264, %v3298, %v3300
        %v3316 = vsel %vm1264, %v3300, %v3302
        %v3317 = vsel %vm1264, %v3302, %v3304
        %v3318 = vsel %vm1264, %v3304, %v3306
        %v3319 = vsel %vm1264, %v3306, %v3308
        %v3320 = vsel %vm1264, %v3308, %v3310
        %v3321 = vsel %vm1264, %v3310, %v3312
        %3322 = vrot.lane.b32.xlu0 %v3134, 59
        %v3323 = vpop.permute.xlu0 %3322
        %3324 = vrot.lane.b32.xlu0 %v3135, 59
        %v3325 = vpop.permute.xlu0 %3324
        %3326 = vrot.lane.b32.xlu0 %v3136, 59
        %v3327 = vpop.permute.xlu0 %3326
        %3328 = vrot.lane.b32.xlu0 %v3137, 59
        %v3329 = vpop.permute.xlu0 %3328
        %3330 = vrot.lane.b32.xlu0 %v3138, 59
        %v3331 = vpop.permute.xlu0 %3330
        %3332 = vrot.lane.b32.xlu0 %v3139, 59
        %v3333 = vpop.permute.xlu0 %3332
        %3334 = vrot.lane.b32.xlu0 %v3140, 59
        %v3335 = vpop.permute.xlu0 %3334
        %3336 = vrot.lane.b32.xlu0 %v3141, 59
        %v3337 = vpop.permute.xlu0 %3336
        %3338 = vrot.lane.b32.xlu0 %v3142, 59
        %v3339 = vpop.permute.xlu0 %3338
        %3340 = vrot.lane.b32.xlu0 %v3143, 59
        %v3341 = vpop.permute.xlu0 %3340
        %v3342 = vsel %vm1294, %v3323, %v3325
        %v3343 = vsel %vm1294, %v3325, %v3327
        %v3344 = vsel %vm1294, %v3327, %v3329
        %v3345 = vsel %vm1294, %v3329, %v3331
        %v3346 = vsel %vm1294, %v3331, %v3333
        %v3347 = vsel %vm1294, %v3333, %v3335
        %v3348 = vsel %vm1294, %v3335, %v3337
        %v3349 = vsel %vm1294, %v3337, %v3339
        %v3350 = vsel %vm1294, %v3339, %v3341
        %3351 = vrot.lane.b32.xlu0 %v3134, 58
        %v3352 = vpop.permute.xlu0 %3351
        %3353 = vrot.lane.b32.xlu0 %v3135, 58
        %v3354 = vpop.permute.xlu0 %3353
        %3355 = vrot.lane.b32.xlu0 %v3136, 58
        %v3356 = vpop.permute.xlu0 %3355
        %3357 = vrot.lane.b32.xlu0 %v3137, 58
        %v3358 = vpop.permute.xlu0 %3357
        %3359 = vrot.lane.b32.xlu0 %v3138, 58
        %v3360 = vpop.permute.xlu0 %3359
        %3361 = vrot.lane.b32.xlu0 %v3139, 58
        %v3362 = vpop.permute.xlu0 %3361
        %3363 = vrot.lane.b32.xlu0 %v3140, 58
        %v3364 = vpop.permute.xlu0 %3363
        %3365 = vrot.lane.b32.xlu0 %v3141, 58
        %v3366 = vpop.permute.xlu0 %3365
        %3367 = vrot.lane.b32.xlu0 %v3142, 58
        %v3368 = vpop.permute.xlu0 %3367
        %3369 = vrot.lane.b32.xlu0 %v3143, 58
        %v3370 = vpop.permute.xlu0 %3369
        %v3371 = vsel %vm1324, %v3352, %v3354
        %v3372 = vsel %vm1324, %v3354, %v3356
        %v3373 = vsel %vm1324, %v3356, %v3358
        %v3374 = vsel %vm1324, %v3358, %v3360
        %v3375 = vsel %vm1324, %v3360, %v3362
        %v3376 = vsel %vm1324, %v3362, %v3364
        %v3377 = vsel %vm1324, %v3364, %v3366
        %v3378 = vsel %vm1324, %v3366, %v3368
        %v3379 = vsel %vm1324, %v3368, %v3370
        %v3380 = vld [vmem:[%s7] sm:$0xff]
        %3382 = vset.pattern.permute.xlu0 0
        %3383 = vperm.xlu0 %3382, %v3380
        %v3384 = vpop.permute.xlu0 %3383
        %3386 = vrot.lane.b32.xlu0 %v3134, 95
        %v3387 = vpop.permute.xlu0 %3386
        %3388 = vrot.lane.b32.xlu0 %v3135, 95
        %v3389 = vpop.permute.xlu0 %3388
        %3390 = vrot.lane.b32.xlu0 %v3136, 95
        %v3391 = vpop.permute.xlu0 %3390
        %3392 = vrot.lane.b32.xlu0 %v3137, 95
        %v3393 = vpop.permute.xlu0 %3392
        %3394 = vrot.lane.b32.xlu0 %v3138, 95
        %v3395 = vpop.permute.xlu0 %3394
        %3396 = vrot.lane.b32.xlu0 %v3139, 95
        %v3397 = vpop.permute.xlu0 %3396
        %3398 = vrot.lane.b32.xlu0 %v3140, 95
        %v3399 = vpop.permute.xlu0 %3398
        %3400 = vrot.lane.b32.xlu0 %v3141, 95
        %v3401 = vpop.permute.xlu0 %3400
        %3402 = vrot.lane.b32.xlu0 %v3142, 95
        %v3403 = vpop.permute.xlu0 %3402
        %3404 = vrot.lane.b32.xlu0 %v3171, 95
        %v3405 = vpop.permute.xlu0 %3404
        %3406 = vrot.lane.b32.xlu0 %v3172, 95
        %v3407 = vpop.permute.xlu0 %3406
        %3408 = vrot.lane.b32.xlu0 %v3173, 95
        %v3409 = vpop.permute.xlu0 %3408
        %3410 = vrot.lane.b32.xlu0 %v3174, 95
        %v3411 = vpop.permute.xlu0 %3410
        %3412 = vrot.lane.b32.xlu0 %v3175, 95
        %v3413 = vpop.permute.xlu0 %3412
        %3414 = vrot.lane.b32.xlu0 %v3176, 95
        %v3415 = vpop.permute.xlu0 %3414
        %3416 = vrot.lane.b32.xlu0 %v3177, 95
        %v3417 = vpop.permute.xlu0 %3416
        %3418 = vrot.lane.b32.xlu0 %v3178, 95
        %v3419 = vpop.permute.xlu0 %3418
        %3420 = vrot.lane.b32.xlu0 %v3170, 95
        %v3421 = vpop.permute.xlu0 %3420
        %3422 = vrot.lane.b32.xlu0 %v3197, 95
        %v3423 = vpop.permute.xlu0 %3422
        %3424 = vrot.lane.b32.xlu0 %v3198, 95
        %v3425 = vpop.permute.xlu0 %3424
        %3426 = vrot.lane.b32.xlu0 %v3199, 95
        %v3427 = vpop.permute.xlu0 %3426
        %3428 = vrot.lane.b32.xlu0 %v3200, 95
        %v3429 = vpop.permute.xlu0 %3428
        %3430 = vrot.lane.b32.xlu0 %v3201, 95
        %v3431 = vpop.permute.xlu0 %3430
        %3432 = vrot.lane.b32.xlu0 %v3202, 95
        %v3433 = vpop.permute.xlu0 %3432
        %3434 = vrot.lane.b32.xlu0 %v3203, 95
        %v3435 = vpop.permute.xlu0 %3434
        %3436 = vrot.lane.b32.xlu0 %v3204, 95
        %v3437 = vpop.permute.xlu0 %3436
        %3438 = vrot.lane.b32.xlu0 %v3196, 95
        %v3439 = vpop.permute.xlu0 %3438
        %3440 = vrot.lane.b32.xlu0 %v3226, 95
        %v3441 = vpop.permute.xlu0 %3440
        %3442 = vrot.lane.b32.xlu0 %v3227, 95
        %v3443 = vpop.permute.xlu0 %3442
        %3444 = vrot.lane.b32.xlu0 %v3228, 95
        %v3445 = vpop.permute.xlu0 %3444
        %3446 = vrot.lane.b32.xlu0 %v3229, 95
        %v3447 = vpop.permute.xlu0 %3446
        %3448 = vrot.lane.b32.xlu0 %v3230, 95
        %v3449 = vpop.permute.xlu0 %3448
        %3450 = vrot.lane.b32.xlu0 %v3231, 95
        %v3451 = vpop.permute.xlu0 %3450
        %3452 = vrot.lane.b32.xlu0 %v3232, 95
        %v3453 = vpop.permute.xlu0 %3452
        %3454 = vrot.lane.b32.xlu0 %v3233, 95
        %v3455 = vpop.permute.xlu0 %3454
        %3456 = vrot.lane.b32.xlu0 %v3234, 95
        %v3457 = vpop.permute.xlu0 %3456
        %3458 = vrot.lane.b32.xlu0 %v3255, 95
        %v3459 = vpop.permute.xlu0 %3458
        %3460 = vrot.lane.b32.xlu0 %v3256, 95
        %v3461 = vpop.permute.xlu0 %3460
        %3462 = vrot.lane.b32.xlu0 %v3257, 95
        %v3463 = vpop.permute.xlu0 %3462
        %3464 = vrot.lane.b32.xlu0 %v3258, 95
        %v3465 = vpop.permute.xlu0 %3464
        %3466 = vrot.lane.b32.xlu0 %v3259, 95
        %v3467 = vpop.permute.xlu0 %3466
        %3468 = vrot.lane.b32.xlu0 %v3260, 95
        %v3469 = vpop.permute.xlu0 %3468
        %3470 = vrot.lane.b32.xlu0 %v3261, 95
        %v3471 = vpop.permute.xlu0 %3470
        %3472 = vrot.lane.b32.xlu0 %v3262, 95
        %v3473 = vpop.permute.xlu0 %3472
        %3474 = vrot.lane.b32.xlu0 %v3263, 95
        %v3475 = vpop.permute.xlu0 %3474
        %3476 = vrot.lane.b32.xlu0 %v3284, 95
        %v3477 = vpop.permute.xlu0 %3476
        %3478 = vrot.lane.b32.xlu0 %v3285, 95
        %v3479 = vpop.permute.xlu0 %3478
        %3480 = vrot.lane.b32.xlu0 %v3286, 95
        %v3481 = vpop.permute.xlu0 %3480
        %3482 = vrot.lane.b32.xlu0 %v3287, 95
        %v3483 = vpop.permute.xlu0 %3482
        %3484 = vrot.lane.b32.xlu0 %v3288, 95
        %v3485 = vpop.permute.xlu0 %3484
        %3486 = vrot.lane.b32.xlu0 %v3289, 95
        %v3487 = vpop.permute.xlu0 %3486
        %3488 = vrot.lane.b32.xlu0 %v3290, 95
        %v3489 = vpop.permute.xlu0 %3488
        %3490 = vrot.lane.b32.xlu0 %v3291, 95
        %v3491 = vpop.permute.xlu0 %3490
        %3492 = vrot.lane.b32.xlu0 %v3292, 95
        %v3493 = vpop.permute.xlu0 %3492
        %3494 = vrot.lane.b32.xlu0 %v3313, 95
        %v3495 = vpop.permute.xlu0 %3494
        %3496 = vrot.lane.b32.xlu0 %v3314, 95
        %v3497 = vpop.permute.xlu0 %3496
        %3498 = vrot.lane.b32.xlu0 %v3315, 95
        %v3499 = vpop.permute.xlu0 %3498
        %3500 = vrot.lane.b32.xlu0 %v3316, 95
        %v3501 = vpop.permute.xlu0 %3500
        %3502 = vrot.lane.b32.xlu0 %v3317, 95
        %v3503 = vpop.permute.xlu0 %3502
        %3504 = vrot.lane.b32.xlu0 %v3318, 95
        %v3505 = vpop.permute.xlu0 %3504
        %3506 = vrot.lane.b32.xlu0 %v3319, 95
        %v3507 = vpop.permute.xlu0 %3506
        %3508 = vrot.lane.b32.xlu0 %v3320, 95
        %v3509 = vpop.permute.xlu0 %3508
        %3510 = vrot.lane.b32.xlu0 %v3321, 95
        %v3511 = vpop.permute.xlu0 %3510
        %3512 = vrot.lane.b32.xlu0 %v3342, 95
        %v3513 = vpop.permute.xlu0 %3512
        %3514 = vrot.lane.b32.xlu0 %v3343, 95
        %v3515 = vpop.permute.xlu0 %3514
        %3516 = vrot.lane.b32.xlu0 %v3344, 95
        %v3517 = vpop.permute.xlu0 %3516
        %3518 = vrot.lane.b32.xlu0 %v3345, 95
        %v3519 = vpop.permute.xlu0 %3518
        %3520 = vrot.lane.b32.xlu0 %v3346, 95
        %v3521 = vpop.permute.xlu0 %3520
        %3522 = vrot.lane.b32.xlu0 %v3347, 95
        %v3523 = vpop.permute.xlu0 %3522
        %3524 = vrot.lane.b32.xlu0 %v3348, 95
        %v3525 = vpop.permute.xlu0 %3524
        %3526 = vrot.lane.b32.xlu0 %v3349, 95
        %v3527 = vpop.permute.xlu0 %3526
        %3528 = vrot.lane.b32.xlu0 %v3350, 95
        %v3529 = vpop.permute.xlu0 %3528
        %3530 = vrot.lane.b32.xlu0 %v3371, 95
        %v3531 = vpop.permute.xlu0 %3530
        %3532 = vrot.lane.b32.xlu0 %v3372, 95
        %v3533 = vpop.permute.xlu0 %3532
        %3534 = vrot.lane.b32.xlu0 %v3373, 95
        %v3535 = vpop.permute.xlu0 %3534
        %3536 = vrot.lane.b32.xlu0 %v3374, 95
        %v3537 = vpop.permute.xlu0 %3536
        %3538 = vrot.lane.b32.xlu0 %v3375, 95
        %v3539 = vpop.permute.xlu0 %3538
        %3540 = vrot.lane.b32.xlu0 %v3376, 95
        %v3541 = vpop.permute.xlu0 %3540
        %3542 = vrot.lane.b32.xlu0 %v3377, 95
        %v3543 = vpop.permute.xlu0 %3542
        %3544 = vrot.lane.b32.xlu0 %v3378, 95
        %v3545 = vpop.permute.xlu0 %3544
        %3546 = vrot.lane.b32.xlu0 %v3379, 95
        %v3547 = vpop.permute.xlu0 %3546
        %v3548 = vsel %vm1502, %v3387, %v3389
        %v3549 = vsel %vm1502, %v3389, %v3391
        %v3550 = vsel %vm1502, %v3391, %v3393
        %v3551 = vsel %vm1502, %v3393, %v3395
        %v3552 = vsel %vm1502, %v3395, %v3397
        %v3553 = vsel %vm1502, %v3397, %v3399
        %v3554 = vsel %vm1502, %v3399, %v3401
        %v3555 = vsel %vm1502, %v3401, %v3403
        %v3556 = vsel %vm1502, %v3405, %v3407
        %v3557 = vsel %vm1502, %v3407, %v3409
        %v3558 = vsel %vm1502, %v3409, %v3411
        %v3559 = vsel %vm1502, %v3411, %v3413
        %v3560 = vsel %vm1502, %v3413, %v3415
        %v3561 = vsel %vm1502, %v3415, %v3417
        %v3562 = vsel %vm1502, %v3417, %v3419
        %v3563 = vsel %vm1502, %v3419, %v3421
        %v3564 = vsel %vm1502, %v3423, %v3425
        %v3565 = vsel %vm1502, %v3425, %v3427
        %v3566 = vsel %vm1502, %v3427, %v3429
        %v3567 = vsel %vm1502, %v3429, %v3431
        %v3568 = vsel %vm1502, %v3431, %v3433
        %v3569 = vsel %vm1502, %v3433, %v3435
        %v3570 = vsel %vm1502, %v3435, %v3437
        %v3571 = vsel %vm1502, %v3437, %v3439
        %v3572 = vsel %vm1502, %v3441, %v3443
        %v3573 = vsel %vm1502, %v3443, %v3445
        %v3574 = vsel %vm1502, %v3445, %v3447
        %v3575 = vsel %vm1502, %v3447, %v3449
        %v3576 = vsel %vm1502, %v3449, %v3451
        %v3577 = vsel %vm1502, %v3451, %v3453
        %v3578 = vsel %vm1502, %v3453, %v3455
        %v3579 = vsel %vm1502, %v3455, %v3457
        %v3580 = vsel %vm1502, %v3459, %v3461
        %v3581 = vsel %vm1502, %v3461, %v3463
        %v3582 = vsel %vm1502, %v3463, %v3465
        %v3583 = vsel %vm1502, %v3465, %v3467
        %v3584 = vsel %vm1502, %v3467, %v3469
        %v3585 = vsel %vm1502, %v3469, %v3471
        %v3586 = vsel %vm1502, %v3471, %v3473
        %v3587 = vsel %vm1502, %v3473, %v3475
        %v3588 = vsel %vm1502, %v3477, %v3479
        %v3589 = vsel %vm1502, %v3479, %v3481
        %v3590 = vsel %vm1502, %v3481, %v3483
        %v3591 = vsel %vm1502, %v3483, %v3485
        %v3592 = vsel %vm1502, %v3485, %v3487
        %v3593 = vsel %vm1502, %v3487, %v3489
        %v3594 = vsel %vm1502, %v3489, %v3491
        %v3595 = vsel %vm1502, %v3491, %v3493
        %v3596 = vsel %vm1502, %v3495, %v3497
        %v3597 = vsel %vm1502, %v3497, %v3499
        %v3598 = vsel %vm1502, %v3499, %v3501
        %v3599 = vsel %vm1502, %v3501, %v3503
        %v3600 = vsel %vm1502, %v3503, %v3505
        %v3601 = vsel %vm1502, %v3505, %v3507
        %v3602 = vsel %vm1502, %v3507, %v3509
        %v3603 = vsel %vm1502, %v3509, %v3511
        %v3604 = vsel %vm1502, %v3513, %v3515
        %v3605 = vsel %vm1502, %v3515, %v3517
        %v3606 = vsel %vm1502, %v3517, %v3519
        %v3607 = vsel %vm1502, %v3519, %v3521
        %v3608 = vsel %vm1502, %v3521, %v3523
        %v3609 = vsel %vm1502, %v3523, %v3525
        %v3610 = vsel %vm1502, %v3525, %v3527
        %v3611 = vsel %vm1502, %v3527, %v3529
        %v3612 = vsel %vm1502, %v3531, %v3533
        %v3613 = vsel %vm1502, %v3533, %v3535
        %v3614 = vsel %vm1502, %v3535, %v3537
        %v3615 = vsel %vm1502, %v3537, %v3539
        %v3616 = vsel %vm1502, %v3539, %v3541
        %v3617 = vsel %vm1502, %v3541, %v3543
        %v3618 = vsel %vm1502, %v3543, %v3545
        %v3619 = vsel %vm1502, %v3545, %v3547
        %v3702 = vsel %vm1071, %v3133, 0
        %3704 = vmatprep.subr.mxu0 0.0
        %3705 = vmatpush1.msra.mxu0 0.0
        %3706 = vmatprep.subr.mxu0 0.0
        %3707 = vmatpush1.msra.mxu0 0.0
        %3708 = vmatprep.subr.mxu0 0.0
        %3709 = vmatpush1.msra.mxu0 0.0
        %3710 = vmatprep.subr.mxu0 0.0
        %3711 = vmatpush1.msra.mxu0 0.0
        %3712 = vmatprep.subr.mxu0 0.0
        %3713 = vmatpush1.msra.mxu0 0.0
        %3714 = vmatprep.subr.mxu0 0.0
        %3715 = vmatpush1.msra.mxu0 0.0
        %3716 = vmatprep.subr.mxu0 0.0
        %3717 = vmatpush1.msra.mxu0 0.0
        %3718 = vmatprep.subr.mxu0 %v3613
        %3719 = vmatpush1.msra.mxu0 %v3612
        %3720 = vmatprep.subr.mxu0 %v3605
        %3721 = vmatpush1.msra.mxu0 %v3604
        %3722 = vmatprep.subr.mxu0 %v3597
        %3723 = vmatpush1.msra.mxu0 %v3596
        %3724 = vmatprep.subr.mxu0 %v3589
        %3725 = vmatpush1.msra.mxu0 %v3588
        %3726 = vmatprep.subr.mxu0 %v3581
        %3727 = vmatpush1.msra.mxu0 %v3580
        %3728 = vmatprep.subr.mxu0 %v3573
        %3729 = vmatpush1.msra.mxu0 %v3572
        %3730 = vmatprep.subr.mxu0 %v3565
        %3731 = vmatpush1.msra.mxu0 %v3564
        %3732 = vmatprep.subr.mxu0 %v3557
        %3733 = vmatpush1.msra.mxu0 %v3556
        %3734 = vmatprep.subr.mxu0 %v3549
        %3735 = vmatpush1.msra.mxu0 %v3548
        %3736 = vmatprep.subr.mxu0 0.0
        %3737 = vmatpush2.msra.mxu0 0.0
        %3738 = vmatprep.subr.mxu0 0.0
        %3739 = vmatpush2.msra.mxu0 0.0
        %3740 = vmatprep.subr.mxu0 0.0
        %3741 = vmatpush2.msra.mxu0 0.0
        %3742 = vmatprep.subr.mxu0 0.0
        %3743 = vmatpush2.msra.mxu0 0.0
        %3744 = vmatprep.subr.mxu0 0.0
        %3745 = vmatpush2.msra.mxu0 0.0
        %3746 = vmatprep.subr.mxu0 0.0
        %3747 = vmatpush2.msra.mxu0 0.0
        %3748 = vmatprep.subr.mxu0 0.0
        %3749 = vmatpush2.msra.mxu0 0.0
        %3750 = vmatprep.subr.mxu0 0.0
        %3751 = vmatpush2.msra.mxu0 0.0
        %3752 = vmatprep.subr.mxu0 0.0
        %3753 = vmatpush2.msra.mxu0 0.0
        %3754 = vmatprep.subr.mxu0 0.0
        %3755 = vmatpush2.msra.mxu0 0.0
        %3756 = vmatprep.subr.mxu0 0.0
        %3757 = vmatpush2.msra.mxu0 0.0
        %3758 = vmatprep.subr.mxu0 0.0
        %3759 = vmatpush2.msra.mxu0 0.0
        %3760 = vmatprep.subr.mxu0 0.0
        %3761 = vmatpush2.msra.mxu0 0.0
        %3762 = vmatprep.subr.mxu0 0.0
        %3763 = vmatpush2.msra.mxu0 0.0
        %3764 = vmatprep.subr.mxu0 0.0
        %3765 = vmatpush2.msra.mxu0 0.0
        %3766 = vmatprep.subr.mxu0 0.0
        %3767 = vmatpush2.msra.mxu0 0.0
        %3768 = vmatprep.mubr.f32.mxu0 0.0
        %3769 = vmatmul.mubr.f32.gmra.mxu0 %v3702
        %v3770 = vpop.f32.mrf.mxu0
        %v3771 = vadd.f32 %v3384, %v3770
        %v3772 = vpop.f32.mrf.mxu0
        %v3773 = vadd.f32 %v3384, %v3772
        %3774 = vdwg.mxu0
        %3775 = vmatprep.subr.mxu0 0.0
        %3776 = vmatpush1.msra.mxu0 0.0
        %3777 = vmatprep.subr.mxu0 0.0
        %3778 = vmatpush1.msra.mxu0 0.0
        %3779 = vmatprep.subr.mxu0 0.0
        %3780 = vmatpush1.msra.mxu0 0.0
        %3781 = vmatprep.subr.mxu0 0.0
        %3782 = vmatpush1.msra.mxu0 0.0
        %3783 = vmatprep.subr.mxu0 0.0
        %3784 = vmatpush1.msra.mxu0 0.0
        %3785 = vmatprep.subr.mxu0 0.0
        %3786 = vmatpush1.msra.mxu0 0.0
        %3787 = vmatprep.subr.mxu0 0.0
        %3788 = vmatpush1.msra.mxu0 0.0
        %3789 = vmatprep.subr.mxu0 %v3615
        %3790 = vmatpush1.msra.mxu0 %v3614
        %3791 = vmatprep.subr.mxu0 %v3607
        %3792 = vmatpush1.msra.mxu0 %v3606
        %3793 = vmatprep.subr.mxu0 %v3599
        %3794 = vmatpush1.msra.mxu0 %v3598
        %3795 = vmatprep.subr.mxu0 %v3591
        %3796 = vmatpush1.msra.mxu0 %v3590
        %3797 = vmatprep.subr.mxu0 %v3583
        %3798 = vmatpush1.msra.mxu0 %v3582
        %3799 = vmatprep.subr.mxu0 %v3575
        %3800 = vmatpush1.msra.mxu0 %v3574
        %3801 = vmatprep.subr.mxu0 %v3567
        %3802 = vmatpush1.msra.mxu0 %v3566
        %3803 = vmatprep.subr.mxu0 %v3559
        %3804 = vmatpush1.msra.mxu0 %v3558
        %3805 = vmatprep.subr.mxu0 %v3551
        %3806 = vmatpush1.msra.mxu0 %v3550
        %3807 = vmatprep.subr.mxu0 0.0
        %3808 = vmatpush2.msra.mxu0 0.0
        %3809 = vmatprep.subr.mxu0 0.0
        %3810 = vmatpush2.msra.mxu0 0.0
        %3811 = vmatprep.subr.mxu0 0.0
        %3812 = vmatpush2.msra.mxu0 0.0
        %3813 = vmatprep.subr.mxu0 0.0
        %3814 = vmatpush2.msra.mxu0 0.0
        %3815 = vmatprep.subr.mxu0 0.0
        %3816 = vmatpush2.msra.mxu0 0.0
        %3817 = vmatprep.subr.mxu0 0.0
        %3818 = vmatpush2.msra.mxu0 0.0
        %3819 = vmatprep.subr.mxu0 0.0
        %3820 = vmatpush2.msra.mxu0 0.0
        %3821 = vmatprep.subr.mxu0 0.0
        %3822 = vmatpush2.msra.mxu0 0.0
        %3823 = vmatprep.subr.mxu0 0.0
        %3824 = vmatpush2.msra.mxu0 0.0
        %3825 = vmatprep.subr.mxu0 0.0
        %3826 = vmatpush2.msra.mxu0 0.0
        %3827 = vmatprep.subr.mxu0 0.0
        %3828 = vmatpush2.msra.mxu0 0.0
        %3829 = vmatprep.subr.mxu0 0.0
        %3830 = vmatpush2.msra.mxu0 0.0
        %3831 = vmatprep.subr.mxu0 0.0
        %3832 = vmatpush2.msra.mxu0 0.0
        %3833 = vmatprep.subr.mxu0 0.0
        %3834 = vmatpush2.msra.mxu0 0.0
        %3835 = vmatprep.subr.mxu0 0.0
        %3836 = vmatpush2.msra.mxu0 0.0
        %3837 = vmatprep.subr.mxu0 0.0
        %3838 = vmatpush2.msra.mxu0 0.0
        %3839 = vmatprep.mubr.f32.mxu0 0.0
        %3840 = vmatmul.mubr.f32.gmra.mxu0 %v3702
        %v3841 = vpop.f32.mrf.mxu0
        %v3842 = vadd.f32 %v3384, %v3841
        %v3843 = vpop.f32.mrf.mxu0
        %v3844 = vadd.f32 %v3384, %v3843
        %3845 = vdwg.mxu0
        %3846 = vmatprep.subr.mxu0 0.0
        %3847 = vmatpush1.msra.mxu0 0.0
        %3848 = vmatprep.subr.mxu0 0.0
        %3849 = vmatpush1.msra.mxu0 0.0
        %3850 = vmatprep.subr.mxu0 0.0
        %3851 = vmatpush1.msra.mxu0 0.0
        %3852 = vmatprep.subr.mxu0 0.0
        %3853 = vmatpush1.msra.mxu0 0.0
        %3854 = vmatprep.subr.mxu0 0.0
        %3855 = vmatpush1.msra.mxu0 0.0
        %3856 = vmatprep.subr.mxu0 0.0
        %3857 = vmatpush1.msra.mxu0 0.0
        %3858 = vmatprep.subr.mxu0 0.0
        %3859 = vmatpush1.msra.mxu0 0.0
        %3860 = vmatprep.subr.mxu0 %v3617
        %3861 = vmatpush1.msra.mxu0 %v3616
        %3862 = vmatprep.subr.mxu0 %v3609
        %3863 = vmatpush1.msra.mxu0 %v3608
        %3864 = vmatprep.subr.mxu0 %v3601
        %3865 = vmatpush1.msra.mxu0 %v3600
        %3866 = vmatprep.subr.mxu0 %v3593
        %3867 = vmatpush1.msra.mxu0 %v3592
        %3868 = vmatprep.subr.mxu0 %v3585
        %3869 = vmatpush1.msra.mxu0 %v3584
        %3870 = vmatprep.subr.mxu0 %v3577
        %3871 = vmatpush1.msra.mxu0 %v3576
        %3872 = vmatprep.subr.mxu0 %v3569
        %3873 = vmatpush1.msra.mxu0 %v3568
        %3874 = vmatprep.subr.mxu0 %v3561
        %3875 = vmatpush1.msra.mxu0 %v3560
        %3876 = vmatprep.subr.mxu0 %v3553
        %3877 = vmatpush1.msra.mxu0 %v3552
        %3878 = vmatprep.subr.mxu0 0.0
        %3879 = vmatpush2.msra.mxu0 0.0
        %3880 = vmatprep.subr.mxu0 0.0
        %3881 = vmatpush2.msra.mxu0 0.0
        %3882 = vmatprep.subr.mxu0 0.0
        %3883 = vmatpush2.msra.mxu0 0.0
        %3884 = vmatprep.subr.mxu0 0.0
        %3885 = vmatpush2.msra.mxu0 0.0
        %3886 = vmatprep.subr.mxu0 0.0
        %3887 = vmatpush2.msra.mxu0 0.0
        %3888 = vmatprep.subr.mxu0 0.0
        %3889 = vmatpush2.msra.mxu0 0.0
        %3890 = vmatprep.subr.mxu0 0.0
        %3891 = vmatpush2.msra.mxu0 0.0
        %3892 = vmatprep.subr.mxu0 0.0
        %3893 = vmatpush2.msra.mxu0 0.0
        %3894 = vmatprep.subr.mxu0 0.0
        %3895 = vmatpush2.msra.mxu0 0.0
        %3896 = vmatprep.subr.mxu0 0.0
        %3897 = vmatpush2.msra.mxu0 0.0
        %3898 = vmatprep.subr.mxu0 0.0
        %3899 = vmatpush2.msra.mxu0 0.0
        %3900 = vmatprep.subr.mxu0 0.0
        %3901 = vmatpush2.msra.mxu0 0.0
        %3902 = vmatprep.subr.mxu0 0.0
        %3903 = vmatpush2.msra.mxu0 0.0
        %3904 = vmatprep.subr.mxu0 0.0
        %3905 = vmatpush2.msra.mxu0 0.0
        %3906 = vmatprep.subr.mxu0 0.0
        %3907 = vmatpush2.msra.mxu0 0.0
        %3908 = vmatprep.subr.mxu0 0.0
        %3909 = vmatpush2.msra.mxu0 0.0
        %3910 = vmatprep.mubr.f32.mxu0 0.0
        %3911 = vmatmul.mubr.f32.gmra.mxu0 %v3702
        %v3912 = vpop.f32.mrf.mxu0
        %v3913 = vadd.f32 %v3384, %v3912
        %v3914 = vpop.f32.mrf.mxu0
        %v3915 = vadd.f32 %v3384, %v3914
        %3916 = vdwg.mxu0
        %3917 = vmatprep.subr.mxu0 0.0
        %3918 = vmatpush1.msra.mxu0 0.0
        %3919 = vmatprep.subr.mxu0 0.0
        %3920 = vmatpush1.msra.mxu0 0.0
        %3921 = vmatprep.subr.mxu0 0.0
        %3922 = vmatpush1.msra.mxu0 0.0
        %3923 = vmatprep.subr.mxu0 0.0
        %3924 = vmatpush1.msra.mxu0 0.0
        %3925 = vmatprep.subr.mxu0 0.0
        %3926 = vmatpush1.msra.mxu0 0.0
        %3927 = vmatprep.subr.mxu0 0.0
        %3928 = vmatpush1.msra.mxu0 0.0
        %3929 = vmatprep.subr.mxu0 0.0
        %3930 = vmatpush1.msra.mxu0 0.0
        %3931 = vmatprep.subr.mxu0 %v3619
        %3932 = vmatpush1.msra.mxu0 %v3618
        %3933 = vmatprep.subr.mxu0 %v3611
        %3934 = vmatpush1.msra.mxu0 %v3610
        %3935 = vmatprep.subr.mxu0 %v3603
        %3936 = vmatpush1.msra.mxu0 %v3602
        %3937 = vmatprep.subr.mxu0 %v3595
        %3938 = vmatpush1.msra.mxu0 %v3594
        %3939 = vmatprep.subr.mxu0 %v3587
        %3940 = vmatpush1.msra.mxu0 %v3586
        %3941 = vmatprep.subr.mxu0 %v3579
        %3942 = vmatpush1.msra.mxu0 %v3578
        %3943 = vmatprep.subr.mxu0 %v3571
        %3944 = vmatpush1.msra.mxu0 %v3570
        %3945 = vmatprep.subr.mxu0 %v3563
        %3946 = vmatpush1.msra.mxu0 %v3562
        %3947 = vmatprep.subr.mxu0 %v3555
        %3948 = vmatpush1.msra.mxu0 %v3554
        %3949 = vmatprep.subr.mxu0 0.0
        %3950 = vmatpush2.msra.mxu0 0.0
        %3951 = vmatprep.subr.mxu0 0.0
        %3952 = vmatpush2.msra.mxu0 0.0
        %3953 = vmatprep.subr.mxu0 0.0
        %3954 = vmatpush2.msra.mxu0 0.0
        %3955 = vmatprep.subr.mxu0 0.0
        %3956 = vmatpush2.msra.mxu0 0.0
        %3957 = vmatprep.subr.mxu0 0.0
        %3958 = vmatpush2.msra.mxu0 0.0
        %3959 = vmatprep.subr.mxu0 0.0
        %3960 = vmatpush2.msra.mxu0 0.0
        %3961 = vmatprep.subr.mxu0 0.0
        %3962 = vmatpush2.msra.mxu0 0.0
        %3963 = vmatprep.subr.mxu0 0.0
        %3964 = vmatpush2.msra.mxu0 0.0
        %3965 = vmatprep.subr.mxu0 0.0
        %3966 = vmatpush2.msra.mxu0 0.0
        %3967 = vmatprep.subr.mxu0 0.0
        %3968 = vmatpush2.msra.mxu0 0.0
        %3969 = vmatprep.subr.mxu0 0.0
        %3970 = vmatpush2.msra.mxu0 0.0
        %3971 = vmatprep.subr.mxu0 0.0
        %3972 = vmatpush2.msra.mxu0 0.0
        %3973 = vmatprep.subr.mxu0 0.0
        %3974 = vmatpush2.msra.mxu0 0.0
        %3975 = vmatprep.subr.mxu0 0.0
        %3976 = vmatpush2.msra.mxu0 0.0
        %3977 = vmatprep.subr.mxu0 0.0
        %3978 = vmatpush2.msra.mxu0 0.0
        %3979 = vmatprep.subr.mxu0 0.0
        %3980 = vmatpush2.msra.mxu0 0.0
        %3981 = vmatprep.mubr.f32.mxu0 0.0
        %3982 = vmatmul.mubr.f32.gmra.mxu0 %v3702
        %v3983 = vpop.f32.mrf.mxu0
        %v3984 = vadd.f32 %v3384, %v3983
        %v3985 = vpop.f32.mrf.mxu0
        %v3986 = vadd.f32 %v3384, %v3985
        %3987 = vdwg.mxu0
        %3988 = vmatprep.subr.mxu0 0.0
        %3989 = vmatpush1.msra.mxu0 0.0
        %3990 = vmatprep.subr.mxu0 0.0
        %3991 = vmatpush1.msra.mxu0 0.0
        %3992 = vmatprep.subr.mxu0 0.0
        %3993 = vmatpush1.msra.mxu0 0.0
        %3994 = vmatprep.subr.mxu0 0.0
        %3995 = vmatpush1.msra.mxu0 0.0
        %3996 = vmatprep.subr.mxu0 0.0
        %3997 = vmatpush1.msra.mxu0 0.0
        %3998 = vmatprep.subr.mxu0 0.0
        %3999 = vmatpush1.msra.mxu0 0.0
        %4000 = vmatprep.subr.mxu0 0.0
        %4001 = vmatpush1.msra.mxu0 0.0
        %4002 = vmatprep.subr.mxu0 0.0
        %4003 = vmatpush1.msra.mxu0 %v3547
        %4004 = vmatprep.subr.mxu0 0.0
        %4005 = vmatpush1.msra.mxu0 %v3529
        %4006 = vmatprep.subr.mxu0 0.0
        %4007 = vmatpush1.msra.mxu0 %v3511
        %4008 = vmatprep.subr.mxu0 0.0
        %4009 = vmatpush1.msra.mxu0 %v3493
        %4010 = vmatprep.subr.mxu0 0.0
        %4011 = vmatpush1.msra.mxu0 %v3475
        %4012 = vmatprep.subr.mxu0 0.0
        %4013 = vmatpush1.msra.mxu0 %v3457
        %4014 = vmatprep.subr.mxu0 0.0
        %4015 = vmatpush1.msra.mxu0 %v3439
        %4016 = vmatprep.subr.mxu0 0.0
        %4017 = vmatpush1.msra.mxu0 %v3421
        %4018 = vmatprep.subr.mxu0 0.0
        %4019 = vmatpush1.msra.mxu0 %v3403
        %4020 = vmatprep.subr.mxu0 0.0
        %4021 = vmatpush2.msra.mxu0 0.0
        %4022 = vmatprep.subr.mxu0 0.0
        %4023 = vmatpush2.msra.mxu0 0.0
        %4024 = vmatprep.subr.mxu0 0.0
        %4025 = vmatpush2.msra.mxu0 0.0
        %4026 = vmatprep.subr.mxu0 0.0
        %4027 = vmatpush2.msra.mxu0 0.0
        %4028 = vmatprep.subr.mxu0 0.0
        %4029 = vmatpush2.msra.mxu0 0.0
        %4030 = vmatprep.subr.mxu0 0.0
        %4031 = vmatpush2.msra.mxu0 0.0
        %4032 = vmatprep.subr.mxu0 0.0
        %4033 = vmatpush2.msra.mxu0 0.0
        %4034 = vmatprep.subr.mxu0 0.0
        %4035 = vmatpush2.msra.mxu0 0.0
        %4036 = vmatprep.subr.mxu0 0.0
        %4037 = vmatpush2.msra.mxu0 0.0
        %4038 = vmatprep.subr.mxu0 0.0
        %4039 = vmatpush2.msra.mxu0 0.0
        %4040 = vmatprep.subr.mxu0 0.0
        %4041 = vmatpush2.msra.mxu0 0.0
        %4042 = vmatprep.subr.mxu0 0.0
        %4043 = vmatpush2.msra.mxu0 0.0
        %4044 = vmatprep.subr.mxu0 0.0
        %4045 = vmatpush2.msra.mxu0 0.0
        %4046 = vmatprep.subr.mxu0 0.0
        %4047 = vmatpush2.msra.mxu0 0.0
        %4048 = vmatprep.subr.mxu0 0.0
        %4049 = vmatpush2.msra.mxu0 0.0
        %4050 = vmatprep.subr.mxu0 0.0
        %4051 = vmatpush2.msra.mxu0 0.0
        %4052 = vmatprep.mubr.f32.mxu0 0.0
        %4053 = vmatmul.mubr.f32.gmra.mxu0 %v3702
        %v4054 = vpop.f32.mrf.mxu0
        %v4055 = vadd.f32 %v3384, %v4054
        %v4056 = vpop.f32.mrf.mxu0
        %4057 = vdwg.mxu0
        %v4058 = vld [vmem:[%s8] sm:$0xff]
        %v4059 = vld [vmem:[#allocation2] sm:$0xff]
        %v4060 = vld [vmem:[#allocation2 + $0x8] sm:$0xff]
        %v4061 = vld [vmem:[#allocation2 + $0x10] sm:$0xff]
        %v4062 = vld [vmem:[#allocation2 + $0x18] sm:$0xff]
        %v4063 = vld [vmem:[#allocation2 + $0x20] sm:$0xff]
        %v4064 = vld [vmem:[#allocation2 + $0x28] sm:$0xff]
        %v4065 = vld [vmem:[#allocation2 + $0x30] sm:$0xff]
        %v4066 = vld [vmem:[#allocation2 + $0x38] sm:$0xff]
        %v4067 = vld [vmem:[#allocation2 + $0x40] sm:$0xff]
        %v4068 = vld [vmem:[#allocation2 + $0x48] sm:$0xff]
        %v4069 = vld [vmem:[%s9] sm:$0xff]
        %4071 = vset.pattern.permute.xlu0 0
        %4072 = vperm.xlu0 %4071, %v4069
        %v4073 = vpop.permute.xlu0 %4072
        %4085 = vrot.lane.b32.xlu0 %v4059, 60
        %v4086 = vpop.permute.xlu0 %4085
        %4087 = vrot.lane.b32.xlu0 %v4060, 60
        %v4088 = vpop.permute.xlu0 %4087
        %4089 = vrot.lane.b32.xlu0 %v4061, 60
        %v4090 = vpop.permute.xlu0 %4089
        %4091 = vrot.lane.b32.xlu0 %v4062, 60
        %v4092 = vpop.permute.xlu0 %4091
        %4093 = vrot.lane.b32.xlu0 %v4063, 60
        %v4094 = vpop.permute.xlu0 %4093
        %4095 = vrot.lane.b32.xlu0 %v4064, 60
        %v4096 = vpop.permute.xlu0 %4095
        %4097 = vrot.lane.b32.xlu0 %v4065, 60
        %v4098 = vpop.permute.xlu0 %4097
        %4099 = vrot.lane.b32.xlu0 %v4066, 60
        %v4100 = vpop.permute.xlu0 %4099
        %4101 = vrot.lane.b32.xlu0 %v4067, 60
        %v4102 = vpop.permute.xlu0 %4101
        %4103 = vrot.lane.b32.xlu0 %v4068, 60
        %v4104 = vpop.permute.xlu0 %4103
        %v4105 = vsel %vm1264, %v4086, %v4088
        %v4106 = vsel %vm1264, %v4088, %v4090
        %v4107 = vsel %vm1264, %v4090, %v4092
        %v4108 = vsel %vm1264, %v4092, %v4094
        %v4109 = vsel %vm1264, %v4094, %v4096
        %v4110 = vsel %vm1264, %v4096, %v4098
        %v4111 = vsel %vm1264, %v4098, %v4100
        %v4112 = vsel %vm1264, %v4100, %v4102
        %v4113 = vsel %vm1264, %v4102, %v4104
        %vm4123 = vcmask 64512
        %v4125 = vsel %vm4123, %v4058, 0
        %4127 = vmatprep.subr.mxu0 0.0
        %4128 = vmatpush1.msra.mxu0 0.0
        %4129 = vmatprep.subr.mxu0 0.0
        %4130 = vmatpush1.msra.mxu0 0.0
        %4131 = vmatprep.subr.mxu0 0.0
        %4132 = vmatpush1.msra.mxu0 0.0
        %4133 = vmatprep.subr.mxu0 0.0
        %4134 = vmatpush1.msra.mxu0 0.0
        %4135 = vmatprep.subr.mxu0 0.0
        %4136 = vmatpush1.msra.mxu0 0.0
        %4137 = vmatprep.subr.mxu0 0.0
        %4138 = vmatpush1.msra.mxu0 0.0
        %4139 = vmatprep.subr.mxu0 0.0
        %4140 = vmatpush1.msra.mxu0 0.0
        %4141 = vmatprep.subr.mxu0 0.0
        %4142 = vmatpush1.msra.mxu0 0.0
        %4143 = vmatprep.subr.mxu0 0.0
        %4144 = vmatpush1.msra.mxu0 0.0
        %4145 = vmatprep.subr.mxu0 0.0
        %4146 = vmatpush1.msra.mxu0 0.0
        %4147 = vmatprep.subr.mxu0 0.0
        %4148 = vmatpush1.msra.mxu0 0.0
        %4149 = vmatprep.subr.mxu0 0.0
        %4150 = vmatpush1.msra.mxu0 0.0
        %4151 = vmatprep.subr.mxu0 0.0
        %4152 = vmatpush1.msra.mxu0 0.0
        %4153 = vmatprep.subr.mxu0 0.0
        %4154 = vmatpush1.msra.mxu0 0.0
        %4155 = vmatprep.subr.mxu0 0.0
        %4156 = vmatpush1.msra.mxu0 0.0
        %4157 = vmatprep.subr.mxu0 %v4106
        %4158 = vmatpush1.msra.mxu0 %v4105
        %4159 = vmatprep.subr.mxu0 0.0
        %4160 = vmatpush2.msra.mxu0 0.0
        %4161 = vmatprep.subr.mxu0 0.0
        %4162 = vmatpush2.msra.mxu0 0.0
        %4163 = vmatprep.subr.mxu0 0.0
        %4164 = vmatpush2.msra.mxu0 0.0
        %4165 = vmatprep.subr.mxu0 0.0
        %4166 = vmatpush2.msra.mxu0 0.0
        %4167 = vmatprep.subr.mxu0 0.0
        %4168 = vmatpush2.msra.mxu0 0.0
        %4169 = vmatprep.subr.mxu0 0.0
        %4170 = vmatpush2.msra.mxu0 0.0
        %4171 = vmatprep.subr.mxu0 0.0
        %4172 = vmatpush2.msra.mxu0 0.0
        %4173 = vmatprep.subr.mxu0 0.0
        %4174 = vmatpush2.msra.mxu0 0.0
        %4175 = vmatprep.subr.mxu0 0.0
        %4176 = vmatpush2.msra.mxu0 0.0
        %4177 = vmatprep.subr.mxu0 0.0
        %4178 = vmatpush2.msra.mxu0 0.0
        %4179 = vmatprep.subr.mxu0 0.0
        %4180 = vmatpush2.msra.mxu0 0.0
        %4181 = vmatprep.subr.mxu0 0.0
        %4182 = vmatpush2.msra.mxu0 0.0
        %4183 = vmatprep.subr.mxu0 0.0
        %4184 = vmatpush2.msra.mxu0 0.0
        %4185 = vmatprep.subr.mxu0 0.0
        %4186 = vmatpush2.msra.mxu0 0.0
        %4187 = vmatprep.subr.mxu0 0.0
        %4188 = vmatpush2.msra.mxu0 0.0
        %4189 = vmatprep.subr.mxu0 0.0
        %4190 = vmatpush2.msra.mxu0 0.0
        %4191 = vmatprep.mubr.f32.mxu0 0.0
        %4192 = vmatmul.mubr.f32.gmra.mxu0 %v4125
        %v4193 = vpop.f32.mrf.mxu0
        %v4194 = vadd.f32 %v4073, %v4193
        %v4195 = vpop.f32.mrf.mxu0
        %v4196 = vadd.f32 %v4073, %v4195
        %4197 = vdwg.mxu0
        %4198 = vmatprep.subr.mxu0 0.0
        %4199 = vmatpush1.msra.mxu0 0.0
        %4200 = vmatprep.subr.mxu0 0.0
        %4201 = vmatpush1.msra.mxu0 0.0
        %4202 = vmatprep.subr.mxu0 0.0
        %4203 = vmatpush1.msra.mxu0 0.0
        %4204 = vmatprep.subr.mxu0 0.0
        %4205 = vmatpush1.msra.mxu0 0.0
        %4206 = vmatprep.subr.mxu0 0.0
        %4207 = vmatpush1.msra.mxu0 0.0
        %4208 = vmatprep.subr.mxu0 0.0
        %4209 = vmatpush1.msra.mxu0 0.0
        %4210 = vmatprep.subr.mxu0 0.0
        %4211 = vmatpush1.msra.mxu0 0.0
        %4212 = vmatprep.subr.mxu0 0.0
        %4213 = vmatpush1.msra.mxu0 0.0
        %4214 = vmatprep.subr.mxu0 0.0
        %4215 = vmatpush1.msra.mxu0 0.0
        %4216 = vmatprep.subr.mxu0 0.0
        %4217 = vmatpush1.msra.mxu0 0.0
        %4218 = vmatprep.subr.mxu0 0.0
        %4219 = vmatpush1.msra.mxu0 0.0
        %4220 = vmatprep.subr.mxu0 0.0
        %4221 = vmatpush1.msra.mxu0 0.0
        %4222 = vmatprep.subr.mxu0 0.0
        %4223 = vmatpush1.msra.mxu0 0.0
        %4224 = vmatprep.subr.mxu0 0.0
        %4225 = vmatpush1.msra.mxu0 0.0
        %4226 = vmatprep.subr.mxu0 0.0
        %4227 = vmatpush1.msra.mxu0 0.0
        %4228 = vmatprep.subr.mxu0 %v4108
        %4229 = vmatpush1.msra.mxu0 %v4107
        %4230 = vmatprep.subr.mxu0 0.0
        %4231 = vmatpush2.msra.mxu0 0.0
        %4232 = vmatprep.subr.mxu0 0.0
        %4233 = vmatpush2.msra.mxu0 0.0
        %4234 = vmatprep.subr.mxu0 0.0
        %4235 = vmatpush2.msra.mxu0 0.0
        %4236 = vmatprep.subr.mxu0 0.0
        %4237 = vmatpush2.msra.mxu0 0.0
        %4238 = vmatprep.subr.mxu0 0.0
        %4239 = vmatpush2.msra.mxu0 0.0
        %4240 = vmatprep.subr.mxu0 0.0
        %4241 = vmatpush2.msra.mxu0 0.0
        %4242 = vmatprep.subr.mxu0 0.0
        %4243 = vmatpush2.msra.mxu0 0.0
        %4244 = vmatprep.subr.mxu0 0.0
        %4245 = vmatpush2.msra.mxu0 0.0
        %4246 = vmatprep.subr.mxu0 0.0
        %4247 = vmatpush2.msra.mxu0 0.0
        %4248 = vmatprep.subr.mxu0 0.0
        %4249 = vmatpush2.msra.mxu0 0.0
        %4250 = vmatprep.subr.mxu0 0.0
        %4251 = vmatpush2.msra.mxu0 0.0
        %4252 = vmatprep.subr.mxu0 0.0
        %4253 = vmatpush2.msra.mxu0 0.0
        %4254 = vmatprep.subr.mxu0 0.0
        %4255 = vmatpush2.msra.mxu0 0.0
        %4256 = vmatprep.subr.mxu0 0.0
        %4257 = vmatpush2.msra.mxu0 0.0
        %4258 = vmatprep.subr.mxu0 0.0
        %4259 = vmatpush2.msra.mxu0 0.0
        %4260 = vmatprep.subr.mxu0 0.0
        %4261 = vmatpush2.msra.mxu0 0.0
        %4262 = vmatprep.mubr.f32.mxu0 0.0
        %4263 = vmatmul.mubr.f32.gmra.mxu0 %v4125
        %v4264 = vpop.f32.mrf.mxu0
        %v4265 = vadd.f32 %v4073, %v4264
        %v4266 = vpop.f32.mrf.mxu0
        %v4267 = vadd.f32 %v4073, %v4266
        %4268 = vdwg.mxu0
        %4269 = vmatprep.subr.mxu0 0.0
        %4270 = vmatpush1.msra.mxu0 0.0
        %4271 = vmatprep.subr.mxu0 0.0
        %4272 = vmatpush1.msra.mxu0 0.0
        %4273 = vmatprep.subr.mxu0 0.0
        %4274 = vmatpush1.msra.mxu0 0.0
        %4275 = vmatprep.subr.mxu0 0.0
        %4276 = vmatpush1.msra.mxu0 0.0
        %4277 = vmatprep.subr.mxu0 0.0
        %4278 = vmatpush1.msra.mxu0 0.0
        %4279 = vmatprep.subr.mxu0 0.0
        %4280 = vmatpush1.msra.mxu0 0.0
        %4281 = vmatprep.subr.mxu0 0.0
        %4282 = vmatpush1.msra.mxu0 0.0
        %4283 = vmatprep.subr.mxu0 0.0
        %4284 = vmatpush1.msra.mxu0 0.0
        %4285 = vmatprep.subr.mxu0 0.0
        %4286 = vmatpush1.msra.mxu0 0.0
        %4287 = vmatprep.subr.mxu0 0.0
        %4288 = vmatpush1.msra.mxu0 0.0
        %4289 = vmatprep.subr.mxu0 0.0
        %4290 = vmatpush1.msra.mxu0 0.0
        %4291 = vmatprep.subr.mxu0 0.0
        %4292 = vmatpush1.msra.mxu0 0.0
        %4293 = vmatprep.subr.mxu0 0.0
        %4294 = vmatpush1.msra.mxu0 0.0
        %4295 = vmatprep.subr.mxu0 0.0
        %4296 = vmatpush1.msra.mxu0 0.0
        %4297 = vmatprep.subr.mxu0 0.0
        %4298 = vmatpush1.msra.mxu0 0.0
        %4299 = vmatprep.subr.mxu0 %v4110
        %4300 = vmatpush1.msra.mxu0 %v4109
        %4301 = vmatprep.subr.mxu0 0.0
        %4302 = vmatpush2.msra.mxu0 0.0
        %4303 = vmatprep.subr.mxu0 0.0
        %4304 = vmatpush2.msra.mxu0 0.0
        %4305 = vmatprep.subr.mxu0 0.0
        %4306 = vmatpush2.msra.mxu0 0.0
        %4307 = vmatprep.subr.mxu0 0.0
        %4308 = vmatpush2.msra.mxu0 0.0
        %4309 = vmatprep.subr.mxu0 0.0
        %4310 = vmatpush2.msra.mxu0 0.0
        %4311 = vmatprep.subr.mxu0 0.0
        %4312 = vmatpush2.msra.mxu0 0.0
        %4313 = vmatprep.subr.mxu0 0.0
        %4314 = vmatpush2.msra.mxu0 0.0
        %4315 = vmatprep.subr.mxu0 0.0
        %4316 = vmatpush2.msra.mxu0 0.0
        %4317 = vmatprep.subr.mxu0 0.0
        %4318 = vmatpush2.msra.mxu0 0.0
        %4319 = vmatprep.subr.mxu0 0.0
        %4320 = vmatpush2.msra.mxu0 0.0
        %4321 = vmatprep.subr.mxu0 0.0
        %4322 = vmatpush2.msra.mxu0 0.0
        %4323 = vmatprep.subr.mxu0 0.0
        %4324 = vmatpush2.msra.mxu0 0.0
        %4325 = vmatprep.subr.mxu0 0.0
        %4326 = vmatpush2.msra.mxu0 0.0
        %4327 = vmatprep.subr.mxu0 0.0
        %4328 = vmatpush2.msra.mxu0 0.0
        %4329 = vmatprep.subr.mxu0 0.0
        %4330 = vmatpush2.msra.mxu0 0.0
        %4331 = vmatprep.subr.mxu0 0.0
        %4332 = vmatpush2.msra.mxu0 0.0
        %4333 = vmatprep.mubr.f32.mxu0 0.0
        %4334 = vmatmul.mubr.f32.gmra.mxu0 %v4125
        %v4335 = vpop.f32.mrf.mxu0
        %v4336 = vadd.f32 %v4073, %v4335
        %v4337 = vpop.f32.mrf.mxu0
        %v4338 = vadd.f32 %v4073, %v4337
        %4339 = vdwg.mxu0
        %4340 = vmatprep.subr.mxu0 0.0
        %4341 = vmatpush1.msra.mxu0 0.0
        %4342 = vmatprep.subr.mxu0 0.0
        %4343 = vmatpush1.msra.mxu0 0.0
        %4344 = vmatprep.subr.mxu0 0.0
        %4345 = vmatpush1.msra.mxu0 0.0
        %4346 = vmatprep.subr.mxu0 0.0
        %4347 = vmatpush1.msra.mxu0 0.0
        %4348 = vmatprep.subr.mxu0 0.0
        %4349 = vmatpush1.msra.mxu0 0.0
        %4350 = vmatprep.subr.mxu0 0.0
        %4351 = vmatpush1.msra.mxu0 0.0
        %4352 = vmatprep.subr.mxu0 0.0
        %4353 = vmatpush1.msra.mxu0 0.0
        %4354 = vmatprep.subr.mxu0 0.0
        %4355 = vmatpush1.msra.mxu0 0.0
        %4356 = vmatprep.subr.mxu0 0.0
        %4357 = vmatpush1.msra.mxu0 0.0
        %4358 = vmatprep.subr.mxu0 0.0
        %4359 = vmatpush1.msra.mxu0 0.0
        %4360 = vmatprep.subr.mxu0 0.0
        %4361 = vmatpush1.msra.mxu0 0.0
        %4362 = vmatprep.subr.mxu0 0.0
        %4363 = vmatpush1.msra.mxu0 0.0
        %4364 = vmatprep.subr.mxu0 0.0
        %4365 = vmatpush1.msra.mxu0 0.0
        %4366 = vmatprep.subr.mxu0 0.0
        %4367 = vmatpush1.msra.mxu0 0.0
        %4368 = vmatprep.subr.mxu0 0.0
        %4369 = vmatpush1.msra.mxu0 0.0
        %4370 = vmatprep.subr.mxu0 %v4112
        %4371 = vmatpush1.msra.mxu0 %v4111
        %4372 = vmatprep.subr.mxu0 0.0
        %4373 = vmatpush2.msra.mxu0 0.0
        %4374 = vmatprep.subr.mxu0 0.0
        %4375 = vmatpush2.msra.mxu0 0.0
        %4376 = vmatprep.subr.mxu0 0.0
        %4377 = vmatpush2.msra.mxu0 0.0
        %4378 = vmatprep.subr.mxu0 0.0
        %4379 = vmatpush2.msra.mxu0 0.0
        %4380 = vmatprep.subr.mxu0 0.0
        %4381 = vmatpush2.msra.mxu0 0.0
        %4382 = vmatprep.subr.mxu0 0.0
        %4383 = vmatpush2.msra.mxu0 0.0
        %4384 = vmatprep.subr.mxu0 0.0
        %4385 = vmatpush2.msra.mxu0 0.0
        %4386 = vmatprep.subr.mxu0 0.0
        %4387 = vmatpush2.msra.mxu0 0.0
        %4388 = vmatprep.subr.mxu0 0.0
        %4389 = vmatpush2.msra.mxu0 0.0
        %4390 = vmatprep.subr.mxu0 0.0
        %4391 = vmatpush2.msra.mxu0 0.0
        %4392 = vmatprep.subr.mxu0 0.0
        %4393 = vmatpush2.msra.mxu0 0.0
        %4394 = vmatprep.subr.mxu0 0.0
        %4395 = vmatpush2.msra.mxu0 0.0
        %4396 = vmatprep.subr.mxu0 0.0
        %4397 = vmatpush2.msra.mxu0 0.0
        %4398 = vmatprep.subr.mxu0 0.0
        %4399 = vmatpush2.msra.mxu0 0.0
        %4400 = vmatprep.subr.mxu0 0.0
        %4401 = vmatpush2.msra.mxu0 0.0
        %4402 = vmatprep.subr.mxu0 0.0
        %4403 = vmatpush2.msra.mxu0 0.0
        %4404 = vmatprep.mubr.f32.mxu0 0.0
        %4405 = vmatmul.mubr.f32.gmra.mxu0 %v4125
        %v4406 = vpop.f32.mrf.mxu0
        %v4407 = vadd.f32 %v4073, %v4406
        %v4408 = vpop.f32.mrf.mxu0
        %v4409 = vadd.f32 %v4073, %v4408
        %4410 = vdwg.mxu0
        %4411 = vmatprep.subr.mxu0 0.0
        %4412 = vmatpush1.msra.mxu0 0.0
        %4413 = vmatprep.subr.mxu0 0.0
        %4414 = vmatpush1.msra.mxu0 0.0
        %4415 = vmatprep.subr.mxu0 0.0
        %4416 = vmatpush1.msra.mxu0 0.0
        %4417 = vmatprep.subr.mxu0 0.0
        %4418 = vmatpush1.msra.mxu0 0.0
        %4419 = vmatprep.subr.mxu0 0.0
        %4420 = vmatpush1.msra.mxu0 0.0
        %4421 = vmatprep.subr.mxu0 0.0
        %4422 = vmatpush1.msra.mxu0 0.0
        %4423 = vmatprep.subr.mxu0 0.0
        %4424 = vmatpush1.msra.mxu0 0.0
        %4425 = vmatprep.subr.mxu0 0.0
        %4426 = vmatpush1.msra.mxu0 0.0
        %4427 = vmatprep.subr.mxu0 0.0
        %4428 = vmatpush1.msra.mxu0 0.0
        %4429 = vmatprep.subr.mxu0 0.0
        %4430 = vmatpush1.msra.mxu0 0.0
        %4431 = vmatprep.subr.mxu0 0.0
        %4432 = vmatpush1.msra.mxu0 0.0
        %4433 = vmatprep.subr.mxu0 0.0
        %4434 = vmatpush1.msra.mxu0 0.0
        %4435 = vmatprep.subr.mxu0 0.0
        %4436 = vmatpush1.msra.mxu0 0.0
        %4437 = vmatprep.subr.mxu0 0.0
        %4438 = vmatpush1.msra.mxu0 0.0
        %4439 = vmatprep.subr.mxu0 0.0
        %4440 = vmatpush1.msra.mxu0 0.0
        %4441 = vmatprep.subr.mxu0 0.0
        %4442 = vmatpush1.msra.mxu0 %v4113
        %4443 = vmatprep.subr.mxu0 0.0
        %4444 = vmatpush2.msra.mxu0 0.0
        %4445 = vmatprep.subr.mxu0 0.0
        %4446 = vmatpush2.msra.mxu0 0.0
        %4447 = vmatprep.subr.mxu0 0.0
        %4448 = vmatpush2.msra.mxu0 0.0
        %4449 = vmatprep.subr.mxu0 0.0
        %4450 = vmatpush2.msra.mxu0 0.0
        %4451 = vmatprep.subr.mxu0 0.0
        %4452 = vmatpush2.msra.mxu0 0.0
        %4453 = vmatprep.subr.mxu0 0.0
        %4454 = vmatpush2.msra.mxu0 0.0
        %4455 = vmatprep.subr.mxu0 0.0
        %4456 = vmatpush2.msra.mxu0 0.0
        %4457 = vmatprep.subr.mxu0 0.0
        %4458 = vmatpush2.msra.mxu0 0.0
        %4459 = vmatprep.subr.mxu0 0.0
        %4460 = vmatpush2.msra.mxu0 0.0
        %4461 = vmatprep.subr.mxu0 0.0
        %4462 = vmatpush2.msra.mxu0 0.0
        %4463 = vmatprep.subr.mxu0 0.0
        %4464 = vmatpush2.msra.mxu0 0.0
        %4465 = vmatprep.subr.mxu0 0.0
        %4466 = vmatpush2.msra.mxu0 0.0
        %4467 = vmatprep.subr.mxu0 0.0
        %4468 = vmatpush2.msra.mxu0 0.0
        %4469 = vmatprep.subr.mxu0 0.0
        %4470 = vmatpush2.msra.mxu0 0.0
        %4471 = vmatprep.subr.mxu0 0.0
        %4472 = vmatpush2.msra.mxu0 0.0
        %4473 = vmatprep.subr.mxu0 0.0
        %4474 = vmatpush2.msra.mxu0 0.0
        %4475 = vmatprep.mubr.f32.mxu0 0.0
        %4476 = vmatmul.mubr.f32.gmra.mxu0 %v4125
        %v4477 = vpop.f32.mrf.mxu0
        %v4478 = vadd.f32 %v4073, %v4477
        %v4479 = vpop.f32.mrf.mxu0
        %4480 = vdwg.mxu0
        %v4481 = vadd.f32 %v3771, %v4194
        %v4482 = vadd.f32 %v3773, %v4196
        %v4483 = vadd.f32 %v3842, %v4265
        %v4484 = vadd.f32 %v3844, %v4267
        %v4485 = vadd.f32 %v3913, %v4336
        %v4486 = vadd.f32 %v3915, %v4338
        %v4487 = vadd.f32 %v3984, %v4407
        %v4488 = vadd.f32 %v3986, %v4409
        %v4489 = vadd.f32 %v4055, %v4478
        %v4490 = vmax.f32 %v4481, 0.0
        %v4491 = vmax.f32 %v4482, 0.0
        %v4492 = vmax.f32 %v4483, 0.0
        %v4493 = vmax.f32 %v4484, 0.0
        %v4494 = vmax.f32 %v4485, 0.0
        %v4495 = vmax.f32 %v4486, 0.0
        %v4496 = vmax.f32 %v4487, 0.0
        %v4497 = vmax.f32 %v4488, 0.0
        %v4498 = vmax.f32 %v4489, 0.0
        %4499 = vst [vmem:[%s379] sm:$0xff] %v4490
        %4500 = vst [vmem:[%s379 + $0x8] sm:$0xff] %v4491
        %4501 = vst [vmem:[%s379 + $0x10] sm:$0xff] %v4492
        %4502 = vst [vmem:[%s379 + $0x18] sm:$0xff] %v4493
        %4503 = vst [vmem:[%s379 + $0x20] sm:$0xff] %v4494
        %4504 = vst [vmem:[%s379 + $0x28] sm:$0xff] %v4495
        %4505 = vst [vmem:[%s379 + $0x30] sm:$0xff] %v4496
        %4506 = vst [vmem:[%s379 + $0x38] sm:$0xff] %v4497
        %vm4507 = vcmask 523264
        %4508 = vst.msk [vmem:[%s379 + $0x40] sm:$0xff] %vm4507, %v4498
        %s4509 = sand.u32 %s269, 1
        %s4510 = scalar_lea.sflag [#allocation5], %s4509
        %s4511 = sand.u32 %s269, 1
        %s4512 = smul.addr %s4511, 72
        %s4513 = scalar_lea.vmem [#allocation4], %s4512
        // Predicated region
        $region65: #{tpu_custom_call.1} parent=63 // pred_check
          %p4514 = pneg %p279
        $region66: #{tpu_custom_call.1} parent=63 // pred_check_branch
          %4516 = sbr.rel (%p4514) target = $region68
        $region67: #{tpu_custom_call.1} parent=63 // pred_region
          %s4518 = ssub.s32 1152, 1152
          %4519 = vsyncadd %s4510, %s4518
          %s4520 = smul.addr %s25, 9
          %s4521 = smul.addr %s4520, 128
          %s4522 = scalar_lea.hbm %s11, %s4521
          %s4524 = sshll.u32 %s4513, 4
          %s4525 = int_to_ptr.vmem [resolvable:$true] %s4524
          %4527 = dma.vmem_to_hbm [thread:$0]  %s4525, 1152, %s4522, %s4510
        $region68: #{tpu_custom_call.1} parent=63 // pred_fallthru
          _
      $region64: #{tpu_custom_call.1} parent=5 // pred_fallthru
        _
      %p4528 = scmp.le.s32.totalorder 2, %s20
      // Predicated region
      $region69: #{tpu_custom_call.1} parent=5 // pred_check
        %p4529 = pneg %p4528
      $region70: #{tpu_custom_call.1} parent=5 // pred_check_branch
        %4531 = sbr.rel (%p4529) target = $region72
      $region71: #{tpu_custom_call.1} parent=5 // pred_region
        %s4532 = ssub.s32 %s20, 2
        // Predicated region
        $region73: #{tpu_custom_call.1} parent=71 // pred_check
          %p4533 = pneg %p285
        $region74: #{tpu_custom_call.1} parent=71 // pred_check_branch
          %4535 = sbr.rel (%p4533) target = $region76
        $region75: #{tpu_custom_call.1} parent=71 // pred_region
          %s4536 = sand.u32 %s270, 1
          %s4537 = scalar_lea.sflag [#allocation5], %s4536
          %s4538 = sand.u32 %s270, 1
          %s4539 = smul.addr %s4538, 72
          %s4540 = scalar_lea.vmem [#allocation4], %s4539
          %4541 = dma.done %s4537, 1152
        $region76: #{tpu_custom_call.1} parent=71 // pred_fallthru
          _
      $region72: #{tpu_custom_call.1} parent=5 // pred_fallthru
        _
    $region6: #{tpu_custom_call.1} parent=1 // loop_footer
      %s24 = sadd.s32 1, %s20
    $region7: #{tpu_custom_call.1} parent=1 // loop_footer_branch
      %19 = sbr.rel target = $region3
    $region8: #{tpu_custom_call.1} parent=1 // loop_exit
      _
    %4542 = vsyncpa [#allocation5], 1
    %s4543 = scalar_lea.sflag [#allocation5], 1
    %4544 = vsyncpa %s4543, 1

</llo_original>
